<compile_context>
chip_gen: v7x
topology: tpu7x:2x2x1
jax: 0.10.0
libtpu: 0.0.40
codegen_flags: <defaults>
</compile_context>

<pallas_src>
import math
import numpy as np
import jax
import jax.numpy as jnp
from jax.experimental import pallas as pl
from jax.experimental.pallas import tpu as pltpu

D_MODEL = 32
NUM_HEADS = 4
D_K = D_MODEL // NUM_HEADS
D_FF = 64
MAX_SEQ_LEN = 8
THETA = 10000.0
EPS = 1e-5
VOCAB = 256
NUM_LAYERS = 2


def _tlm_kernel(ids_ref, emb_ref, wqa_ref, wka_ref, wv_ref, woh_ref,
                g1_ref, g2_ref, w1t_ref, w3t_ref, w2t_ref,
                gf_ref, lmt_ref, cos_ref, sin_ref, mask_ref, swap_ref, o_ref):
    N = ids_ref.shape[0]                 # B*L tokens
    V, D = emb_ref.shape
    H = NUM_HEADS

    # ---- embedding gather fused in-kernel: one-hot @ table (MXU), no XLA gather op ----
    ids = ids_ref[...]                                                     # (N, 1) int32
    onehot = (jax.lax.broadcasted_iota(jnp.int32, (N, V), 1) == ids).astype(jnp.float32)
    x = jnp.dot(onehot, emb_ref[...], preferred_element_type=jnp.float32)  # (N, D)

    # hoisted constants (no per-layer re-broadcast)
    cosF = cos_ref[...]                  # (H*N, d_k)
    sinF = sin_ref[...]                  # (H*N, d_k), signed: [-sin | +sin]
    mask = mask_ref[...]                 # (H*N, H*N) additive, 0 / -1e30
    swap = swap_ref[...]                 # (d_k, d_k) half-swap permutation

    def rmsnorm(v, g):
        return v * jax.lax.rsqrt(jnp.mean(v * v, axis=-1, keepdims=True) + EPS) * g

    for l in range(NUM_LAYERS):          # static unroll over layers
        # ---- attention ----
        hn = rmsnorm(x, g1_ref[l])                                          # (N, D)

        # per-head projections straight into head-flattened (H*N, d_k) layout
        # (row block h = head h); row concat offsets are multiples of 8 -> cheap.
        qa = jnp.concatenate(
            [jnp.dot(hn, wqa_ref[l, h], preferred_element_type=jnp.float32)
             for h in range(H)], axis=0)                                    # (H*N, d_k)
        ka = jnp.concatenate(
            [jnp.dot(hn, wka_ref[l, h], preferred_element_type=jnp.float32)
             for h in range(H)], axis=0)
        vf = jnp.concatenate(
            [jnp.dot(hn, wv_ref[l, h], preferred_element_type=jnp.float32)
             for h in range(H)], axis=0)

        # rotate-half companions via tiny permutation matmul (no strided lane slicing)
        qb = jnp.dot(qa, swap, preferred_element_type=jnp.float32)
        kb = jnp.dot(ka, swap, preferred_element_type=jnp.float32)

        # full-width RoPE (1/sqrt(d_k) already folded into the Q weights)
        qf = qa * cosF + qb * sinF
        kf = ka * cosF + kb * sinF

        # ONE score matmul + ONE context matmul for all heads / batches
        s = jnp.einsum('qd,kd->qk', qf, kf,
                       preferred_element_type=jnp.float32) + mask           # (H*N, H*N)
        m = jnp.max(s, axis=-1, keepdims=True)
        e = jnp.exp(s - m)
        p = e / jnp.sum(e, axis=-1, keepdims=True)
        ctx = jnp.dot(p, vf, preferred_element_type=jnp.float32)            # (H*N, d_k)

        # output projection: Wo folded per head; contiguous sublane slices, accumulate
        attn = jnp.dot(ctx[0:N], woh_ref[l, 0], preferred_element_type=jnp.float32)
        for h in range(1, H):
            attn = attn + jnp.dot(ctx[h * N:(h + 1) * N], woh_ref[l, h],
                                  preferred_element_type=jnp.float32)
        x = x + attn

        # ---- SwiGLU FFN: two separate dots (no mid-lane-tile split of a fused result) ----
        h2 = rmsnorm(x, g2_ref[l])
        a = jnp.dot(h2, w1t_ref[l], preferred_element_type=jnp.float32)     # (N, D_ff)
        b = jnp.dot(h2, w3t_ref[l], preferred_element_type=jnp.float32)
        gated = a * jax.nn.sigmoid(a) * b
        x = x + jnp.dot(gated, w2t_ref[l], preferred_element_type=jnp.float32)

    # ---- final norm + lm head (lane-dense (N, V) output, V = 2 x 128 lanes) ----
    xf = rmsnorm(x, gf_ref[...])
    o_ref[...] = jnp.dot(xf, lmt_ref[...], preferred_element_type=jnp.float32)


def transformer_lm_pallas(token_ids, params):
    emb, layers, gf, lm_w = params
    B, L = token_ids.shape
    V, D = emb.shape
    H, d_k = NUM_HEADS, D // NUM_HEADS
    N = B * L
    scale = 1.0 / math.sqrt(d_k)

    # per-head even/odd de-interleave of the output features (RoPE layout [even|odd])
    def perm_head(h):
        return np.concatenate([np.arange(h * d_k, (h + 1) * d_k, 2),
                               np.arange(h * d_k + 1, (h + 1) * d_k, 2)])

    wqa_l, wka_l, wv_l, woh_l = [], [], [], []
    g1_l, g2_l, w1t_l, w3t_l, w2t_l = [], [], [], [], []
    for (qw, kw, vw, ow, g1w, g2w, w1, w2, w3) in layers:
        wqa_l.append(jnp.stack([(qw[perm_head(h)] * scale).T for h in range(H)]))  # (H, D, d_k)
        wka_l.append(jnp.stack([kw[perm_head(h)].T for h in range(H)]))            # (H, D, d_k)
        wv_l.append(jnp.stack([vw[h * d_k:(h + 1) * d_k].T for h in range(H)]))    # (H, D, d_k)
        woh_l.append(jnp.stack([ow[:, h * d_k:(h + 1) * d_k].T for h in range(H)]))  # (H, d_k, D)
        g1_l.append(g1w.reshape(1, D))
        g2_l.append(g2w.reshape(1, D))
        w1t_l.append(w1.T)                                                          # (D, D_ff)
        w3t_l.append(w3.T)
        w2t_l.append(w2.T)                                                          # (D_ff, D)

    wqa = jnp.stack(wqa_l); wka = jnp.stack(wka_l); wv = jnp.stack(wv_l); woh = jnp.stack(woh_l)
    g1 = jnp.stack(g1_l); g2 = jnp.stack(g2_l)
    w1t = jnp.stack(w1t_l); w3t = jnp.stack(w3t_l); w2t = jnp.stack(w2t_l)

    # RoPE tables in head-flattened layout (row r = h*N + b*L + t depends only on t)
    inv_freq = 1.0 / THETA ** (np.arange(0, d_k, 2, dtype=np.float32) / d_k)
    ang = np.arange(L, dtype=np.float32)[:, None] * inv_freq[None, :]               # (L, d_k/2)
    cosF = jnp.asarray(np.tile(np.concatenate([np.cos(ang), np.cos(ang)], axis=1),
                               (H * B, 1)), jnp.float32)                             # (H*N, d_k)
    sinF = jnp.asarray(np.tile(np.concatenate([-np.sin(ang), np.sin(ang)], axis=1),
                               (H * B, 1)), jnp.float32)                             # (H*N, d_k)

    # additive mask over the head-flattened axis: same head AND same batch AND causal
    tok = np.arange(N)
    ok_tok = ((tok[:, None] // L) == (tok[None, :] // L)) & \
             ((tok[:, None] % L) >= (tok[None, :] % L))
    mask_big = np.full((H * N, H * N), -1e30, np.float32)
    for h in range(H):
        sl = slice(h * N, (h + 1) * N)
        mask_big[sl, sl] = np.where(ok_tok, 0.0, -1e30)
    mask_big = jnp.asarray(mask_big)

    # half-swap permutation: [even|odd] -> [odd|even]  (rotate-half companion)
    swap = jnp.asarray(np.roll(np.eye(d_k, dtype=np.float32), d_k // 2, axis=0))

    ids2d = token_ids.reshape(N, 1).astype(jnp.int32)

    inputs = (ids2d, emb.astype(jnp.float32), wqa, wka, wv, woh, g1, g2,
              w1t, w3t, w2t, gf.reshape(1, D), lm_w.T, cosF, sinF, mask_big, swap)

    # No grid: whole-problem single invocation (workload is launch-bound); everything
    # lives in VMEM (total footprint ~0.3 MB, fine on v5e/v6e/v7x).
    # TODO(synk): at realistic D/L/V re-tile with a layer/K grid axis + parallel batch axis
    # (v7x: 2 TCs, 64 MiB VMEM) instead of the fully resident single-step layout.
    logits = pl.pallas_call(
        _tlm_kernel,
        out_shape=jax.ShapeDtypeStruct((N, V), jnp.float32),
        in_specs=[pl.BlockSpec(memory_space=pltpu.MemorySpace.VMEM)] * len(inputs),
        out_specs=pl.BlockSpec(memory_space=pltpu.MemorySpace.VMEM),
    )(*inputs)

    return logits.reshape(B, L, V)


# ---------------- pure-JAX reference (mirrors the PyTorch forward) ----------------
def transformer_lm_ref(token_ids, params):
    emb, layers, gf, lm_w = params
    x = emb[token_ids].astype(jnp.float32)
    B, L, D = x.shape
    H, d_k = NUM_HEADS, D // NUM_HEADS

    def rmsnorm(v, g):
        ms = jnp.mean(v * v, axis=-1, keepdims=True)
        return v / jnp.sqrt(ms + EPS) * g

    inv_freq = 1.0 / THETA ** (np.arange(0, d_k, 2, dtype=np.float32) / d_k)
    ang = np.arange(L, dtype=np.float32)[:, None] * inv_freq[None, :]
    cos = jnp.asarray(np.cos(ang), jnp.float32)
    sin = jnp.asarray(np.sin(ang), jnp.float32)

    def rope(t):                                  # (B, H, L, d_k), interleaved convention
        x1 = t[..., ::2]
        x2 = t[..., 1::2]
        re = x1 * cos - x2 * sin
        ro = x1 * sin + x2 * cos
        return jnp.stack([re, ro], axis=-1).reshape(t.shape)

    mask = jnp.tril(jnp.ones((L, L), bool))
    for (qw, kw, vw, ow, g1, g2, w1, w2, w3) in layers:
        h = rmsnorm(x, g1)
        Q = jnp.einsum('bld,kd->blk', h, qw).reshape(B, L, H, d_k).transpose(0, 2, 1, 3)
        K = jnp.einsum('bld,kd->blk', h, kw).reshape(B, L, H, d_k).transpose(0, 2, 1, 3)
        Vv = jnp.einsum('bld,kd->blk', h, vw).reshape(B, L, H, d_k).transpose(0, 2, 1, 3)
        Qr, Kr = rope(Q), rope(K)
        s = jnp.einsum('bhqd,bhkd->bhqk', Qr, Kr) / math.sqrt(d_k)
        s = jnp.where(mask[None, None], s, -jnp.inf)
        p = jax.nn.softmax(s, axis=-1)
        ctx = jnp.einsum('bhqk,bhkd->bhqd', p, Vv).transpose(0, 2, 1, 3).reshape(B, L, D)
        x = x + jnp.einsum('bld,md->blm', ctx, ow)
        h2 = rmsnorm(x, g2)
        a = h2 @ w1.T
        b = h2 @ w3.T
        x = x + (jax.nn.silu(a) * b) @ w2.T

    xf = rmsnorm(x, gf)
    return jnp.einsum('bld,vd->blv', xf, lm_w)


def _xavier_uniform(key, shape):
    fan_out, fan_in = shape
    limit = math.sqrt(6.0 / (fan_in + fan_out))
    return jax.random.uniform(key, shape, jnp.float32, -limit, limit)


if __name__ == "__main__":
    B, L = 2, MAX_SEQ_LEN

    key = jax.random.PRNGKey(0)
    keys = jax.random.split(key, 4 + NUM_LAYERS)
    k_emb, k_tok, k_lm, k_gf = keys[0], keys[1], keys[2], keys[3]

    emb = jax.random.truncated_normal(k_emb, -3.0, 3.0, (VOCAB, D_MODEL), jnp.float32)
    layers = []
    for kk in keys[4:]:
        ks = jax.random.split(kk, 9)
        qw = _xavier_uniform(ks[0], (D_MODEL, D_MODEL))
        kw = _xavier_uniform(ks[1], (D_MODEL, D_MODEL))
        vw = _xavier_uniform(ks[2], (D_MODEL, D_MODEL))
        ow = _xavier_uniform(ks[3], (D_MODEL, D_MODEL))
        w1 = _xavier_uniform(ks[4], (D_FF, D_MODEL))
        w2 = _xavier_uniform(ks[5], (D_MODEL, D_FF))
        w3 = _xavier_uniform(ks[6], (D_FF, D_MODEL))
        g1 = 1.0 + 0.1 * jax.random.normal(ks[7], (D_MODEL,), jnp.float32)
        g2 = 1.0 + 0.1 * jax.random.normal(ks[8], (D_MODEL,), jnp.float32)
        layers.append((qw, kw, vw, ow, g1, g2, w1, w2, w3))
    gf = 1.0 + 0.1 * jax.random.normal(k_gf, (D_MODEL,), jnp.float32)
    lm_w = _xavier_uniform(k_lm, (VOCAB, D_MODEL))
    params = (emb, layers, gf, lm_w)

    token_ids = jax.random.randint(k_tok, (B, L), 0, VOCAB)

    out = transformer_lm_pallas(token_ids, params)
    out = jax.block_until_ready(out)

    ref = jax.block_until_ready(transformer_lm_ref(token_ids, params))
    np.testing.assert_allclose(np.asarray(out), np.asarray(ref), rtol=2e-3, atol=2e-3)

    print("KERNEL_OK")
</pallas_src>

<mosaic_0001>
module attributes {stable_mosaic.version = 11 : i64} {
  func.func @_tlm_kernel(%arg0: memref<16x1xi32, #tpu.memory_space<vmem>>, %arg1: memref<256x32xf32, #tpu.memory_space<vmem>>, %arg2: memref<2x4x32x8xf32, #tpu.memory_space<vmem>>, %arg3: memref<2x4x32x8xf32, #tpu.memory_space<vmem>>, %arg4: memref<2x4x32x8xf32, #tpu.memory_space<vmem>>, %arg5: memref<2x4x8x32xf32, #tpu.memory_space<vmem>>, %arg6: memref<2x1x32xf32, #tpu.memory_space<vmem>>, %arg7: memref<2x1x32xf32, #tpu.memory_space<vmem>>, %arg8: memref<2x32x64xf32, #tpu.memory_space<vmem>>, %arg9: memref<2x32x64xf32, #tpu.memory_space<vmem>>, %arg10: memref<2x64x32xf32, #tpu.memory_space<vmem>>, %arg11: memref<1x32xf32, #tpu.memory_space<vmem>>, %arg12: memref<32x256xf32, #tpu.memory_space<vmem>>, %arg13: memref<64x8xf32, #tpu.memory_space<vmem>>, %arg14: memref<64x8xf32, #tpu.memory_space<vmem>>, %arg15: memref<64x64xf32, #tpu.memory_space<vmem>>, %arg16: memref<8x8xf32, #tpu.memory_space<vmem>>, %arg17: memref<16x256xf32, #tpu.memory_space<vmem>>) attributes {dimension_semantics = [], scalar_prefetch = 0 : i64, scratch_operands = 0 : i64, tpu.core_type = #tpu.core_type<tc>} {
    %c0 = arith.constant 0 : index
    %c0_0 = arith.constant 0 : index
    %0 = vector.load %arg0[%c0, %c0_0] : memref<16x1xi32, #tpu.memory_space<vmem>>, vector<16x1xi32>
    %1 = tpu.iota {dimensions = array<i32: 1>} : vector<16x256xi32>
    %2 = vector.broadcast %0 : vector<16x1xi32> to vector<16x256xi32>
    %3 = arith.cmpi eq, %1, %2 : vector<16x256xi32>
    %4 = arith.extui %3 : vector<16x256xi1> to vector<16x256xi32>
    %5 = arith.sitofp %4 : vector<16x256xi32> to vector<16x256xf32>
    %c0_1 = arith.constant 0 : index
    %c0_2 = arith.constant 0 : index
    %6 = vector.load %arg1[%c0_1, %c0_2] : memref<256x32xf32, #tpu.memory_space<vmem>>, vector<256x32xf32>
    %cst = arith.constant dense<0.000000e+00> : vector<16x32xf32>
    %7 = tpu.matmul %5, %6, %cst {dimension_numbers = #tpu.dot_dimension_numbers<[1], [0], [0], [1], [0, 0, 1, 1], [], []>} : vector<16x256xf32>, vector<256x32xf32>, vector<16x32xf32> -> vector<16x32xf32>
    %c0_3 = arith.constant 0 : index
    %c0_4 = arith.constant 0 : index
    %8 = vector.load %arg13[%c0_3, %c0_4] : memref<64x8xf32, #tpu.memory_space<vmem>>, vector<64x8xf32>
    %c0_5 = arith.constant 0 : index
    %c0_6 = arith.constant 0 : index
    %9 = vector.load %arg14[%c0_5, %c0_6] : memref<64x8xf32, #tpu.memory_space<vmem>>, vector<64x8xf32>
    %c0_7 = arith.constant 0 : index
    %c0_8 = arith.constant 0 : index
    %10 = vector.load %arg15[%c0_7, %c0_8] : memref<64x64xf32, #tpu.memory_space<vmem>>, vector<64x64xf32>
    %c0_9 = arith.constant 0 : index
    %c0_10 = arith.constant 0 : index
    %11 = vector.load %arg16[%c0_9, %c0_10] : memref<8x8xf32, #tpu.memory_space<vmem>>, vector<8x8xf32>
    %c0_11 = arith.constant 0 : index
    %c0_12 = arith.constant 0 : index
    %c0_13 = arith.constant 0 : index
    %12 = vector.load %arg6[%c0_11, %c0_12, %c0_13] : memref<2x1x32xf32, #tpu.memory_space<vmem>>, vector<1x1x32xf32>
    %13 = vector.shape_cast %12 : vector<1x1x32xf32> to vector<1x32xf32>
    %14 = arith.mulf %7, %7 : vector<16x32xf32>
    %cst_14 = arith.constant dense<0.000000e+00> : vector<16xf32>
    %15 = vector.multi_reduction <add>, %14, %cst_14 [1] : vector<16x32xf32> to vector<16xf32>
    %16 = vector.shape_cast %15 : vector<16xf32> to vector<16x1xf32>
    %cst_15 = arith.constant 3.200000e+01 : f32
    %17 = vector.broadcast %cst_15 : f32 to vector<16x1xf32>
    %18 = arith.divf %16, %17 : vector<16x1xf32>
    %cst_16 = arith.constant 9.99999974E-6 : f32
    %19 = vector.broadcast %cst_16 : f32 to vector<16x1xf32>
    %20 = arith.addf %18, %19 : vector<16x1xf32>
    %21 = math.rsqrt %20 : vector<16x1xf32>
    %22 = vector.broadcast %21 : vector<16x1xf32> to vector<16x32xf32>
    %23 = arith.mulf %7, %22 : vector<16x32xf32>
    %24 = vector.broadcast %13 : vector<1x32xf32> to vector<16x32xf32>
    %25 = arith.mulf %23, %24 : vector<16x32xf32>
    %c0_17 = arith.constant 0 : index
    %c0_18 = arith.constant 0 : index
    %c0_19 = arith.constant 0 : index
    %c0_20 = arith.constant 0 : index
    %26 = vector.load %arg2[%c0_17, %c0_18, %c0_19, %c0_20] : memref<2x4x32x8xf32, #tpu.memory_space<vmem>>, vector<1x1x32x8xf32>
    %27 = vector.shape_cast %26 : vector<1x1x32x8xf32> to vector<32x8xf32>
    %cst_21 = arith.constant dense<0.000000e+00> : vector<16x8xf32>
    %28 = tpu.matmul %25, %27, %cst_21 {dimension_numbers = #tpu.dot_dimension_numbers<[1], [0], [0], [1], [0, 0, 1, 1], [], []>} : vector<16x32xf32>, vector<32x8xf32>, vector<16x8xf32> -> vector<16x8xf32>
    %c0_22 = arith.constant 0 : index
    %c1 = arith.constant 1 : index
    %c0_23 = arith.constant 0 : index
    %c0_24 = arith.constant 0 : index
    %29 = vector.load %arg2[%c0_22, %c1, %c0_23, %c0_24] : memref<2x4x32x8xf32, #tpu.memory_space<vmem>>, vector<1x1x32x8xf32>
    %30 = vector.shape_cast %29 : vector<1x1x32x8xf32> to vector<32x8xf32>
    %cst_25 = arith.constant dense<0.000000e+00> : vector<16x8xf32>
    %31 = tpu.matmul %25, %30, %cst_25 {dimension_numbers = #tpu.dot_dimension_numbers<[1], [0], [0], [1], [0, 0, 1, 1], [], []>} : vector<16x32xf32>, vector<32x8xf32>, vector<16x8xf32> -> vector<16x8xf32>
    %c0_26 = arith.constant 0 : index
    %c2 = arith.constant 2 : index
    %c0_27 = arith.constant 0 : index
    %c0_28 = arith.constant 0 : index
    %32 = vector.load %arg2[%c0_26, %c2, %c0_27, %c0_28] : memref<2x4x32x8xf32, #tpu.memory_space<vmem>>, vector<1x1x32x8xf32>
    %33 = vector.shape_cast %32 : vector<1x1x32x8xf32> to vector<32x8xf32>
    %cst_29 = arith.constant dense<0.000000e+00> : vector<16x8xf32>
    %34 = tpu.matmul %25, %33, %cst_29 {dimension_numbers = #tpu.dot_dimension_numbers<[1], [0], [0], [1], [0, 0, 1, 1], [], []>} : vector<16x32xf32>, vector<32x8xf32>, vector<16x8xf32> -> vector<16x8xf32>
    %c0_30 = arith.constant 0 : index
    %c3 = arith.constant 3 : index
    %c0_31 = arith.constant 0 : index
    %c0_32 = arith.constant 0 : index
    %35 = vector.load %arg2[%c0_30, %c3, %c0_31, %c0_32] : memref<2x4x32x8xf32, #tpu.memory_space<vmem>>, vector<1x1x32x8xf32>
    %36 = vector.shape_cast %35 : vector<1x1x32x8xf32> to vector<32x8xf32>
    %cst_33 = arith.constant dense<0.000000e+00> : vector<16x8xf32>
    %37 = tpu.matmul %25, %36, %cst_33 {dimension_numbers = #tpu.dot_dimension_numbers<[1], [0], [0], [1], [0, 0, 1, 1], [], []>} : vector<16x32xf32>, vector<32x8xf32>, vector<16x8xf32> -> vector<16x8xf32>
    %38 = tpu.concatenate %28, %31, %34, %37 in 0 : vector<16x8xf32>, vector<16x8xf32>, vector<16x8xf32>, vector<16x8xf32> -> vector<64x8xf32>
    %c0_34 = arith.constant 0 : index
    %c0_35 = arith.constant 0 : index
    %c0_36 = arith.constant 0 : index
    %c0_37 = arith.constant 0 : index
    %39 = vector.load %arg3[%c0_34, %c0_35, %c0_36, %c0_37] : memref<2x4x32x8xf32, #tpu.memory_space<vmem>>, vector<1x1x32x8xf32>
    %40 = vector.shape_cast %39 : vector<1x1x32x8xf32> to vector<32x8xf32>
    %cst_38 = arith.constant dense<0.000000e+00> : vector<16x8xf32>
    %41 = tpu.matmul %25, %40, %cst_38 {dimension_numbers = #tpu.dot_dimension_numbers<[1], [0], [0], [1], [0, 0, 1, 1], [], []>} : vector<16x32xf32>, vector<32x8xf32>, vector<16x8xf32> -> vector<16x8xf32>
    %c0_39 = arith.constant 0 : index
    %c1_40 = arith.constant 1 : index
    %c0_41 = arith.constant 0 : index
    %c0_42 = arith.constant 0 : index
    %42 = vector.load %arg3[%c0_39, %c1_40, %c0_41, %c0_42] : memref<2x4x32x8xf32, #tpu.memory_space<vmem>>, vector<1x1x32x8xf32>
    %43 = vector.shape_cast %42 : vector<1x1x32x8xf32> to vector<32x8xf32>
    %cst_43 = arith.constant dense<0.000000e+00> : vector<16x8xf32>
    %44 = tpu.matmul %25, %43, %cst_43 {dimension_numbers = #tpu.dot_dimension_numbers<[1], [0], [0], [1], [0, 0, 1, 1], [], []>} : vector<16x32xf32>, vector<32x8xf32>, vector<16x8xf32> -> vector<16x8xf32>
    %c0_44 = arith.constant 0 : index
    %c2_45 = arith.constant 2 : index
    %c0_46 = arith.constant 0 : index
    %c0_47 = arith.constant 0 : index
    %45 = vector.load %arg3[%c0_44, %c2_45, %c0_46, %c0_47] : memref<2x4x32x8xf32, #tpu.memory_space<vmem>>, vector<1x1x32x8xf32>
    %46 = vector.shape_cast %45 : vector<1x1x32x8xf32> to vector<32x8xf32>
    %cst_48 = arith.constant dense<0.000000e+00> : vector<16x8xf32>
    %47 = tpu.matmul %25, %46, %cst_48 {dimension_numbers = #tpu.dot_dimension_numbers<[1], [0], [0], [1], [0, 0, 1, 1], [], []>} : vector<16x32xf32>, vector<32x8xf32>, vector<16x8xf32> -> vector<16x8xf32>
    %c0_49 = arith.constant 0 : index
    %c3_50 = arith.constant 3 : index
    %c0_51 = arith.constant 0 : index
    %c0_52 = arith.constant 0 : index
    %48 = vector.load %arg3[%c0_49, %c3_50, %c0_51, %c0_52] : memref<2x4x32x8xf32, #tpu.memory_space<vmem>>, vector<1x1x32x8xf32>
    %49 = vector.shape_cast %48 : vector<1x1x32x8xf32> to vector<32x8xf32>
    %cst_53 = arith.constant dense<0.000000e+00> : vector<16x8xf32>
    %50 = tpu.matmul %25, %49, %cst_53 {dimension_numbers = #tpu.dot_dimension_numbers<[1], [0], [0], [1], [0, 0, 1, 1], [], []>} : vector<16x32xf32>, vector<32x8xf32>, vector<16x8xf32> -> vector<16x8xf32>
    %51 = tpu.concatenate %41, %44, %47, %50 in 0 : vector<16x8xf32>, vector<16x8xf32>, vector<16x8xf32>, vector<16x8xf32> -> vector<64x8xf32>
    %c0_54 = arith.constant 0 : index
    %c0_55 = arith.constant 0 : index
    %c0_56 = arith.constant 0 : index
    %c0_57 = arith.constant 0 : index
    %52 = vector.load %arg4[%c0_54, %c0_55, %c0_56, %c0_57] : memref<2x4x32x8xf32, #tpu.memory_space<vmem>>, vector<1x1x32x8xf32>
    %53 = vector.shape_cast %52 : vector<1x1x32x8xf32> to vector<32x8xf32>
    %cst_58 = arith.constant dense<0.000000e+00> : vector<16x8xf32>
    %54 = tpu.matmul %25, %53, %cst_58 {dimension_numbers = #tpu.dot_dimension_numbers<[1], [0], [0], [1], [0, 0, 1, 1], [], []>} : vector<16x32xf32>, vector<32x8xf32>, vector<16x8xf32> -> vector<16x8xf32>
    %c0_59 = arith.constant 0 : index
    %c1_60 = arith.constant 1 : index
    %c0_61 = arith.constant 0 : index
    %c0_62 = arith.constant 0 : index
    %55 = vector.load %arg4[%c0_59, %c1_60, %c0_61, %c0_62] : memref<2x4x32x8xf32, #tpu.memory_space<vmem>>, vector<1x1x32x8xf32>
    %56 = vector.shape_cast %55 : vector<1x1x32x8xf32> to vector<32x8xf32>
    %cst_63 = arith.constant dense<0.000000e+00> : vector<16x8xf32>
    %57 = tpu.matmul %25, %56, %cst_63 {dimension_numbers = #tpu.dot_dimension_numbers<[1], [0], [0], [1], [0, 0, 1, 1], [], []>} : vector<16x32xf32>, vector<32x8xf32>, vector<16x8xf32> -> vector<16x8xf32>
    %c0_64 = arith.constant 0 : index
    %c2_65 = arith.constant 2 : index
    %c0_66 = arith.constant 0 : index
    %c0_67 = arith.constant 0 : index
    %58 = vector.load %arg4[%c0_64, %c2_65, %c0_66, %c0_67] : memref<2x4x32x8xf32, #tpu.memory_space<vmem>>, vector<1x1x32x8xf32>
    %59 = vector.shape_cast %58 : vector<1x1x32x8xf32> to vector<32x8xf32>
    %cst_68 = arith.constant dense<0.000000e+00> : vector<16x8xf32>
    %60 = tpu.matmul %25, %59, %cst_68 {dimension_numbers = #tpu.dot_dimension_numbers<[1], [0], [0], [1], [0, 0, 1, 1], [], []>} : vector<16x32xf32>, vector<32x8xf32>, vector<16x8xf32> -> vector<16x8xf32>
    %c0_69 = arith.constant 0 : index
    %c3_70 = arith.constant 3 : index
    %c0_71 = arith.constant 0 : index
    %c0_72 = arith.constant 0 : index
    %61 = vector.load %arg4[%c0_69, %c3_70, %c0_71, %c0_72] : memref<2x4x32x8xf32, #tpu.memory_space<vmem>>, vector<1x1x32x8xf32>
    %62 = vector.shape_cast %61 : vector<1x1x32x8xf32> to vector<32x8xf32>
    %cst_73 = arith.constant dense<0.000000e+00> : vector<16x8xf32>
    %63 = tpu.matmul %25, %62, %cst_73 {dimension_numbers = #tpu.dot_dimension_numbers<[1], [0], [0], [1], [0, 0, 1, 1], [], []>} : vector<16x32xf32>, vector<32x8xf32>, vector<16x8xf32> -> vector<16x8xf32>
    %64 = tpu.concatenate %54, %57, %60, %63 in 0 : vector<16x8xf32>, vector<16x8xf32>, vector<16x8xf32>, vector<16x8xf32> -> vector<64x8xf32>
    %cst_74 = arith.constant dense<0.000000e+00> : vector<64x8xf32>
    %65 = tpu.matmul %38, %11, %cst_74 {dimension_numbers = #tpu.dot_dimension_numbers<[1], [0], [0], [1], [0, 0, 1, 1], [], []>} : vector<64x8xf32>, vector<8x8xf32>, vector<64x8xf32> -> vector<64x8xf32>
    %cst_75 = arith.constant dense<0.000000e+00> : vector<64x8xf32>
    %66 = tpu.matmul %51, %11, %cst_75 {dimension_numbers = #tpu.dot_dimension_numbers<[1], [0], [0], [1], [0, 0, 1, 1], [], []>} : vector<64x8xf32>, vector<8x8xf32>, vector<64x8xf32> -> vector<64x8xf32>
    %67 = arith.mulf %38, %8 : vector<64x8xf32>
    %68 = arith.mulf %65, %9 : vector<64x8xf32>
    %69 = arith.addf %67, %68 : vector<64x8xf32>
    %70 = arith.mulf %51, %8 : vector<64x8xf32>
    %71 = arith.mulf %66, %9 : vector<64x8xf32>
    %72 = arith.addf %70, %71 : vector<64x8xf32>
    "tpu.trace_start"() <{level = 10 : i32, message = "qd,kd->qk"}> : () -> ()
    %cst_76 = arith.constant dense<0.000000e+00> : vector<64x64xf32>
    %73 = tpu.matmul %69, %72, %cst_76 {dimension_numbers = #tpu.dot_dimension_numbers<[1], [1], [0], [0], [0, 0, 1, 0], [], []>} : vector<64x8xf32>, vector<64x8xf32>, vector<64x64xf32> -> vector<64x64xf32>
    "tpu.trace_stop"() : () -> ()
    %74 = arith.addf %73, %10 : vector<64x64xf32>
    %cst_77 = arith.constant dense<0xFF800000> : vector<64xf32>
    %75 = vector.multi_reduction <maximumf>, %74, %cst_77 [1] : vector<64x64xf32> to vector<64xf32>
    %76 = vector.shape_cast %75 : vector<64xf32> to vector<64x1xf32>
    %77 = vector.broadcast %76 : vector<64x1xf32> to vector<64x64xf32>
    %78 = arith.subf %74, %77 : vector<64x64xf32>
    %79 = math.exp %78 : vector<64x64xf32>
    %cst_78 = arith.constant dense<0.000000e+00> : vector<64xf32>
    %80 = vector.multi_reduction <add>, %79, %cst_78 [1] : vector<64x64xf32> to vector<64xf32>
    %81 = vector.shape_cast %80 : vector<64xf32> to vector<64x1xf32>
    %82 = vector.broadcast %81 : vector<64x1xf32> to vector<64x64xf32>
    %83 = arith.divf %79, %82 : vector<64x64xf32>
    %cst_79 = arith.constant dense<0.000000e+00> : vector<64x8xf32>
    %84 = tpu.matmul %83, %64, %cst_79 {dimension_numbers = #tpu.dot_dimension_numbers<[1], [0], [0], [1], [0, 0, 1, 1], [], []>} : vector<64x64xf32>, vector<64x8xf32>, vector<64x8xf32> -> vector<64x8xf32>
    %85 = vector.extract_strided_slice %84 {offsets = [0, 0], sizes = [16, 8], strides = [1, 1]} : vector<64x8xf32> to vector<16x8xf32>
    %c0_80 = arith.constant 0 : index
    %c0_81 = arith.constant 0 : index
    %c0_82 = arith.constant 0 : index
    %c0_83 = arith.constant 0 : index
    %86 = vector.load %arg5[%c0_80, %c0_81, %c0_82, %c0_83] : memref<2x4x8x32xf32, #tpu.memory_space<vmem>>, vector<1x1x8x32xf32>
    %87 = vector.shape_cast %86 : vector<1x1x8x32xf32> to vector<8x32xf32>
    %cst_84 = arith.constant dense<0.000000e+00> : vector<16x32xf32>
    %88 = tpu.matmul %85, %87, %cst_84 {dimension_numbers = #tpu.dot_dimension_numbers<[1], [0], [0], [1], [0, 0, 1, 1], [], []>} : vector<16x8xf32>, vector<8x32xf32>, vector<16x32xf32> -> vector<16x32xf32>
    %89 = vector.extract_strided_slice %84 {offsets = [16, 0], sizes = [16, 8], strides = [1, 1]} : vector<64x8xf32> to vector<16x8xf32>
    %c0_85 = arith.constant 0 : index
    %c1_86 = arith.constant 1 : index
    %c0_87 = arith.constant 0 : index
    %c0_88 = arith.constant 0 : index
    %90 = vector.load %arg5[%c0_85, %c1_86, %c0_87, %c0_88] : memref<2x4x8x32xf32, #tpu.memory_space<vmem>>, vector<1x1x8x32xf32>
    %91 = vector.shape_cast %90 : vector<1x1x8x32xf32> to vector<8x32xf32>
    %cst_89 = arith.constant dense<0.000000e+00> : vector<16x32xf32>
    %92 = tpu.matmul %89, %91, %cst_89 {dimension_numbers = #tpu.dot_dimension_numbers<[1], [0], [0], [1], [0, 0, 1, 1], [], []>} : vector<16x8xf32>, vector<8x32xf32>, vector<16x32xf32> -> vector<16x32xf32>
    %93 = arith.addf %88, %92 : vector<16x32xf32>
    %94 = vector.extract_strided_slice %84 {offsets = [32, 0], sizes = [16, 8], strides = [1, 1]} : vector<64x8xf32> to vector<16x8xf32>
    %c0_90 = arith.constant 0 : index
    %c2_91 = arith.constant 2 : index
    %c0_92 = arith.constant 0 : index
    %c0_93 = arith.constant 0 : index
    %95 = vector.load %arg5[%c0_90, %c2_91, %c0_92, %c0_93] : memref<2x4x8x32xf32, #tpu.memory_space<vmem>>, vector<1x1x8x32xf32>
    %96 = vector.shape_cast %95 : vector<1x1x8x32xf32> to vector<8x32xf32>
    %cst_94 = arith.constant dense<0.000000e+00> : vector<16x32xf32>
    %97 = tpu.matmul %94, %96, %cst_94 {dimension_numbers = #tpu.dot_dimension_numbers<[1], [0], [0], [1], [0, 0, 1, 1], [], []>} : vector<16x8xf32>, vector<8x32xf32>, vector<16x32xf32> -> vector<16x32xf32>
    %98 = arith.addf %93, %97 : vector<16x32xf32>
    %99 = vector.extract_strided_slice %84 {offsets = [48, 0], sizes = [16, 8], strides = [1, 1]} : vector<64x8xf32> to vector<16x8xf32>
    %c0_95 = arith.constant 0 : index
    %c3_96 = arith.constant 3 : index
    %c0_97 = arith.constant 0 : index
    %c0_98 = arith.constant 0 : index
    %100 = vector.load %arg5[%c0_95, %c3_96, %c0_97, %c0_98] : memref<2x4x8x32xf32, #tpu.memory_space<vmem>>, vector<1x1x8x32xf32>
    %101 = vector.shape_cast %100 : vector<1x1x8x32xf32> to vector<8x32xf32>
    %cst_99 = arith.constant dense<0.000000e+00> : vector<16x32xf32>
    %102 = tpu.matmul %99, %101, %cst_99 {dimension_numbers = #tpu.dot_dimension_numbers<[1], [0], [0], [1], [0, 0, 1, 1], [], []>} : vector<16x8xf32>, vector<8x32xf32>, vector<16x32xf32> -> vector<16x32xf32>
    %103 = arith.addf %98, %102 : vector<16x32xf32>
    %104 = arith.addf %7, %103 : vector<16x32xf32>
    %c0_100 = arith.constant 0 : index
    %c0_101 = arith.constant 0 : index
    %c0_102 = arith.constant 0 : index
    %105 = vector.load %arg7[%c0_100, %c0_101, %c0_102] : memref<2x1x32xf32, #tpu.memory_space<vmem>>, vector<1x1x32xf32>
    %106 = vector.shape_cast %105 : vector<1x1x32xf32> to vector<1x32xf32>
    %107 = arith.mulf %104, %104 : vector<16x32xf32>
    %cst_103 = arith.constant dense<0.000000e+00> : vector<16xf32>
    %108 = vector.multi_reduction <add>, %107, %cst_103 [1] : vector<16x32xf32> to vector<16xf32>
    %109 = vector.shape_cast %108 : vector<16xf32> to vector<16x1xf32>
    %cst_104 = arith.constant 3.200000e+01 : f32
    %110 = vector.broadcast %cst_104 : f32 to vector<16x1xf32>
    %111 = arith.divf %109, %110 : vector<16x1xf32>
    %cst_105 = arith.constant 9.99999974E-6 : f32
    %112 = vector.broadcast %cst_105 : f32 to vector<16x1xf32>
    %113 = arith.addf %111, %112 : vector<16x1xf32>
    %114 = math.rsqrt %113 : vector<16x1xf32>
    %115 = vector.broadcast %114 : vector<16x1xf32> to vector<16x32xf32>
    %116 = arith.mulf %104, %115 : vector<16x32xf32>
    %117 = vector.broadcast %106 : vector<1x32xf32> to vector<16x32xf32>
    %118 = arith.mulf %116, %117 : vector<16x32xf32>
    %c0_106 = arith.constant 0 : index
    %c0_107 = arith.constant 0 : index
    %c0_108 = arith.constant 0 : index
    %119 = vector.load %arg8[%c0_106, %c0_107, %c0_108] : memref<2x32x64xf32, #tpu.memory_space<vmem>>, vector<1x32x64xf32>
    %120 = vector.shape_cast %119 : vector<1x32x64xf32> to vector<32x64xf32>
    %cst_109 = arith.constant dense<0.000000e+00> : vector<16x64xf32>
    %121 = tpu.matmul %118, %120, %cst_109 {dimension_numbers = #tpu.dot_dimension_numbers<[1], [0], [0], [1], [0, 0, 1, 1], [], []>} : vector<16x32xf32>, vector<32x64xf32>, vector<16x64xf32> -> vector<16x64xf32>
    %c0_110 = arith.constant 0 : index
    %c0_111 = arith.constant 0 : index
    %c0_112 = arith.constant 0 : index
    %122 = vector.load %arg9[%c0_110, %c0_111, %c0_112] : memref<2x32x64xf32, #tpu.memory_space<vmem>>, vector<1x32x64xf32>
    %123 = vector.shape_cast %122 : vector<1x32x64xf32> to vector<32x64xf32>
    %cst_113 = arith.constant dense<0.000000e+00> : vector<16x64xf32>
    %124 = tpu.matmul %118, %123, %cst_113 {dimension_numbers = #tpu.dot_dimension_numbers<[1], [0], [0], [1], [0, 0, 1, 1], [], []>} : vector<16x32xf32>, vector<32x64xf32>, vector<16x64xf32> -> vector<16x64xf32>
    %125 = arith.negf %121 : vector<16x64xf32>
    %126 = math.exp %125 : vector<16x64xf32>
    %cst_114 = arith.constant 1.000000e+00 : f32
    %127 = vector.broadcast %cst_114 : f32 to vector<16x64xf32>
    %128 = arith.addf %127, %126 : vector<16x64xf32>
    %129 = arith.divf %127, %128 : vector<16x64xf32>
    %130 = arith.mulf %121, %129 : vector<16x64xf32>
    %131 = arith.mulf %130, %124 : vector<16x64xf32>
    %c0_115 = arith.constant 0 : index
    %c0_116 = arith.constant 0 : index
    %c0_117 = arith.constant 0 : index
    %132 = vector.load %arg10[%c0_115, %c0_116, %c0_117] : memref<2x64x32xf32, #tpu.memory_space<vmem>>, vector<1x64x32xf32>
    %133 = vector.shape_cast %132 : vector<1x64x32xf32> to vector<64x32xf32>
    %cst_118 = arith.constant dense<0.000000e+00> : vector<16x32xf32>
    %134 = tpu.matmul %131, %133, %cst_118 {dimension_numbers = #tpu.dot_dimension_numbers<[1], [0], [0], [1], [0, 0, 1, 1], [], []>} : vector<16x64xf32>, vector<64x32xf32>, vector<16x32xf32> -> vector<16x32xf32>
    %135 = arith.addf %104, %134 : vector<16x32xf32>
    %c1_119 = arith.constant 1 : index
    %c0_120 = arith.constant 0 : index
    %c0_121 = arith.constant 0 : index
    %136 = vector.load %arg6[%c1_119, %c0_120, %c0_121] : memref<2x1x32xf32, #tpu.memory_space<vmem>>, vector<1x1x32xf32>
    %137 = vector.shape_cast %136 : vector<1x1x32xf32> to vector<1x32xf32>
    %138 = arith.mulf %135, %135 : vector<16x32xf32>
    %cst_122 = arith.constant dense<0.000000e+00> : vector<16xf32>
    %139 = vector.multi_reduction <add>, %138, %cst_122 [1] : vector<16x32xf32> to vector<16xf32>
    %140 = vector.shape_cast %139 : vector<16xf32> to vector<16x1xf32>
    %cst_123 = arith.constant 3.200000e+01 : f32
    %141 = vector.broadcast %cst_123 : f32 to vector<16x1xf32>
    %142 = arith.divf %140, %141 : vector<16x1xf32>
    %cst_124 = arith.constant 9.99999974E-6 : f32
    %143 = vector.broadcast %cst_124 : f32 to vector<16x1xf32>
    %144 = arith.addf %142, %143 : vector<16x1xf32>
    %145 = math.rsqrt %144 : vector<16x1xf32>
    %146 = vector.broadcast %145 : vector<16x1xf32> to vector<16x32xf32>
    %147 = arith.mulf %135, %146 : vector<16x32xf32>
    %148 = vector.broadcast %137 : vector<1x32xf32> to vector<16x32xf32>
    %149 = arith.mulf %147, %148 : vector<16x32xf32>
    %c1_125 = arith.constant 1 : index
    %c0_126 = arith.constant 0 : index
    %c0_127 = arith.constant 0 : index
    %c0_128 = arith.constant 0 : index
    %150 = vector.load %arg2[%c1_125, %c0_126, %c0_127, %c0_128] : memref<2x4x32x8xf32, #tpu.memory_space<vmem>>, vector<1x1x32x8xf32>
    %151 = vector.shape_cast %150 : vector<1x1x32x8xf32> to vector<32x8xf32>
    %cst_129 = arith.constant dense<0.000000e+00> : vector<16x8xf32>
    %152 = tpu.matmul %149, %151, %cst_129 {dimension_numbers = #tpu.dot_dimension_numbers<[1], [0], [0], [1], [0, 0, 1, 1], [], []>} : vector<16x32xf32>, vector<32x8xf32>, vector<16x8xf32> -> vector<16x8xf32>
    %c1_130 = arith.constant 1 : index
    %c1_131 = arith.constant 1 : index
    %c0_132 = arith.constant 0 : index
    %c0_133 = arith.constant 0 : index
    %153 = vector.load %arg2[%c1_130, %c1_131, %c0_132, %c0_133] : memref<2x4x32x8xf32, #tpu.memory_space<vmem>>, vector<1x1x32x8xf32>
    %154 = vector.shape_cast %153 : vector<1x1x32x8xf32> to vector<32x8xf32>
    %cst_134 = arith.constant dense<0.000000e+00> : vector<16x8xf32>
    %155 = tpu.matmul %149, %154, %cst_134 {dimension_numbers = #tpu.dot_dimension_numbers<[1], [0], [0], [1], [0, 0, 1, 1], [], []>} : vector<16x32xf32>, vector<32x8xf32>, vector<16x8xf32> -> vector<16x8xf32>
    %c1_135 = arith.constant 1 : index
    %c2_136 = arith.constant 2 : index
    %c0_137 = arith.constant 0 : index
    %c0_138 = arith.constant 0 : index
    %156 = vector.load %arg2[%c1_135, %c2_136, %c0_137, %c0_138] : memref<2x4x32x8xf32, #tpu.memory_space<vmem>>, vector<1x1x32x8xf32>
    %157 = vector.shape_cast %156 : vector<1x1x32x8xf32> to vector<32x8xf32>
    %cst_139 = arith.constant dense<0.000000e+00> : vector<16x8xf32>
    %158 = tpu.matmul %149, %157, %cst_139 {dimension_numbers = #tpu.dot_dimension_numbers<[1], [0], [0], [1], [0, 0, 1, 1], [], []>} : vector<16x32xf32>, vector<32x8xf32>, vector<16x8xf32> -> vector<16x8xf32>
    %c1_140 = arith.constant 1 : index
    %c3_141 = arith.constant 3 : index
    %c0_142 = arith.constant 0 : index
    %c0_143 = arith.constant 0 : index
    %159 = vector.load %arg2[%c1_140, %c3_141, %c0_142, %c0_143] : memref<2x4x32x8xf32, #tpu.memory_space<vmem>>, vector<1x1x32x8xf32>
    %160 = vector.shape_cast %159 : vector<1x1x32x8xf32> to vector<32x8xf32>
    %cst_144 = arith.constant dense<0.000000e+00> : vector<16x8xf32>
    %161 = tpu.matmul %149, %160, %cst_144 {dimension_numbers = #tpu.dot_dimension_numbers<[1], [0], [0], [1], [0, 0, 1, 1], [], []>} : vector<16x32xf32>, vector<32x8xf32>, vector<16x8xf32> -> vector<16x8xf32>
    %162 = tpu.concatenate %152, %155, %158, %161 in 0 : vector<16x8xf32>, vector<16x8xf32>, vector<16x8xf32>, vector<16x8xf32> -> vector<64x8xf32>
    %c1_145 = arith.constant 1 : index
    %c0_146 = arith.constant 0 : index
    %c0_147 = arith.constant 0 : index
    %c0_148 = arith.constant 0 : index
    %163 = vector.load %arg3[%c1_145, %c0_146, %c0_147, %c0_148] : memref<2x4x32x8xf32, #tpu.memory_space<vmem>>, vector<1x1x32x8xf32>
    %164 = vector.shape_cast %163 : vector<1x1x32x8xf32> to vector<32x8xf32>
    %cst_149 = arith.constant dense<0.000000e+00> : vector<16x8xf32>
    %165 = tpu.matmul %149, %164, %cst_149 {dimension_numbers = #tpu.dot_dimension_numbers<[1], [0], [0], [1], [0, 0, 1, 1], [], []>} : vector<16x32xf32>, vector<32x8xf32>, vector<16x8xf32> -> vector<16x8xf32>
    %c1_150 = arith.constant 1 : index
    %c1_151 = arith.constant 1 : index
    %c0_152 = arith.constant 0 : index
    %c0_153 = arith.constant 0 : index
    %166 = vector.load %arg3[%c1_150, %c1_151, %c0_152, %c0_153] : memref<2x4x32x8xf32, #tpu.memory_space<vmem>>, vector<1x1x32x8xf32>
    %167 = vector.shape_cast %166 : vector<1x1x32x8xf32> to vector<32x8xf32>
    %cst_154 = arith.constant dense<0.000000e+00> : vector<16x8xf32>
    %168 = tpu.matmul %149, %167, %cst_154 {dimension_numbers = #tpu.dot_dimension_numbers<[1], [0], [0], [1], [0, 0, 1, 1], [], []>} : vector<16x32xf32>, vector<32x8xf32>, vector<16x8xf32> -> vector<16x8xf32>
    %c1_155 = arith.constant 1 : index
    %c2_156 = arith.constant 2 : index
    %c0_157 = arith.constant 0 : index
    %c0_158 = arith.constant 0 : index
    %169 = vector.load %arg3[%c1_155, %c2_156, %c0_157, %c0_158] : memref<2x4x32x8xf32, #tpu.memory_space<vmem>>, vector<1x1x32x8xf32>
    %170 = vector.shape_cast %169 : vector<1x1x32x8xf32> to vector<32x8xf32>
    %cst_159 = arith.constant dense<0.000000e+00> : vector<16x8xf32>
    %171 = tpu.matmul %149, %170, %cst_159 {dimension_numbers = #tpu.dot_dimension_numbers<[1], [0], [0], [1], [0, 0, 1, 1], [], []>} : vector<16x32xf32>, vector<32x8xf32>, vector<16x8xf32> -> vector<16x8xf32>
    %c1_160 = arith.constant 1 : index
    %c3_161 = arith.constant 3 : index
    %c0_162 = arith.constant 0 : index
    %c0_163 = arith.constant 0 : index
    %172 = vector.load %arg3[%c1_160, %c3_161, %c0_162, %c0_163] : memref<2x4x32x8xf32, #tpu.memory_space<vmem>>, vector<1x1x32x8xf32>
    %173 = vector.shape_cast %172 : vector<1x1x32x8xf32> to vector<32x8xf32>
    %cst_164 = arith.constant dense<0.000000e+00> : vector<16x8xf32>
    %174 = tpu.matmul %149, %173, %cst_164 {dimension_numbers = #tpu.dot_dimension_numbers<[1], [0], [0], [1], [0, 0, 1, 1], [], []>} : vector<16x32xf32>, vector<32x8xf32>, vector<16x8xf32> -> vector<16x8xf32>
    %175 = tpu.concatenate %165, %168, %171, %174 in 0 : vector<16x8xf32>, vector<16x8xf32>, vector<16x8xf32>, vector<16x8xf32> -> vector<64x8xf32>
    %c1_165 = arith.constant 1 : index
    %c0_166 = arith.constant 0 : index
    %c0_167 = arith.constant 0 : index
    %c0_168 = arith.constant 0 : index
    %176 = vector.load %arg4[%c1_165, %c0_166, %c0_167, %c0_168] : memref<2x4x32x8xf32, #tpu.memory_space<vmem>>, vector<1x1x32x8xf32>
    %177 = vector.shape_cast %176 : vector<1x1x32x8xf32> to vector<32x8xf32>
    %cst_169 = arith.constant dense<0.000000e+00> : vector<16x8xf32>
    %178 = tpu.matmul %149, %177, %cst_169 {dimension_numbers = #tpu.dot_dimension_numbers<[1], [0], [0], [1], [0, 0, 1, 1], [], []>} : vector<16x32xf32>, vector<32x8xf32>, vector<16x8xf32> -> vector<16x8xf32>
    %c1_170 = arith.constant 1 : index
    %c1_171 = arith.constant 1 : index
    %c0_172 = arith.constant 0 : index
    %c0_173 = arith.constant 0 : index
    %179 = vector.load %arg4[%c1_170, %c1_171, %c0_172, %c0_173] : memref<2x4x32x8xf32, #tpu.memory_space<vmem>>, vector<1x1x32x8xf32>
    %180 = vector.shape_cast %179 : vector<1x1x32x8xf32> to vector<32x8xf32>
    %cst_174 = arith.constant dense<0.000000e+00> : vector<16x8xf32>
    %181 = tpu.matmul %149, %180, %cst_174 {dimension_numbers = #tpu.dot_dimension_numbers<[1], [0], [0], [1], [0, 0, 1, 1], [], []>} : vector<16x32xf32>, vector<32x8xf32>, vector<16x8xf32> -> vector<16x8xf32>
    %c1_175 = arith.constant 1 : index
    %c2_176 = arith.constant 2 : index
    %c0_177 = arith.constant 0 : index
    %c0_178 = arith.constant 0 : index
    %182 = vector.load %arg4[%c1_175, %c2_176, %c0_177, %c0_178] : memref<2x4x32x8xf32, #tpu.memory_space<vmem>>, vector<1x1x32x8xf32>
    %183 = vector.shape_cast %182 : vector<1x1x32x8xf32> to vector<32x8xf32>
    %cst_179 = arith.constant dense<0.000000e+00> : vector<16x8xf32>
    %184 = tpu.matmul %149, %183, %cst_179 {dimension_numbers = #tpu.dot_dimension_numbers<[1], [0], [0], [1], [0, 0, 1, 1], [], []>} : vector<16x32xf32>, vector<32x8xf32>, vector<16x8xf32> -> vector<16x8xf32>
    %c1_180 = arith.constant 1 : index
    %c3_181 = arith.constant 3 : index
    %c0_182 = arith.constant 0 : index
    %c0_183 = arith.constant 0 : index
    %185 = vector.load %arg4[%c1_180, %c3_181, %c0_182, %c0_183] : memref<2x4x32x8xf32, #tpu.memory_space<vmem>>, vector<1x1x32x8xf32>
    %186 = vector.shape_cast %185 : vector<1x1x32x8xf32> to vector<32x8xf32>
    %cst_184 = arith.constant dense<0.000000e+00> : vector<16x8xf32>
    %187 = tpu.matmul %149, %186, %cst_184 {dimension_numbers = #tpu.dot_dimension_numbers<[1], [0], [0], [1], [0, 0, 1, 1], [], []>} : vector<16x32xf32>, vector<32x8xf32>, vector<16x8xf32> -> vector<16x8xf32>
    %188 = tpu.concatenate %178, %181, %184, %187 in 0 : vector<16x8xf32>, vector<16x8xf32>, vector<16x8xf32>, vector<16x8xf32> -> vector<64x8xf32>
    %cst_185 = arith.constant dense<0.000000e+00> : vector<64x8xf32>
    %189 = tpu.matmul %162, %11, %cst_185 {dimension_numbers = #tpu.dot_dimension_numbers<[1], [0], [0], [1], [0, 0, 1, 1], [], []>} : vector<64x8xf32>, vector<8x8xf32>, vector<64x8xf32> -> vector<64x8xf32>
    %cst_186 = arith.constant dense<0.000000e+00> : vector<64x8xf32>
    %190 = tpu.matmul %175, %11, %cst_186 {dimension_numbers = #tpu.dot_dimension_numbers<[1], [0], [0], [1], [0, 0, 1, 1], [], []>} : vector<64x8xf32>, vector<8x8xf32>, vector<64x8xf32> -> vector<64x8xf32>
    %191 = arith.mulf %162, %8 : vector<64x8xf32>
    %192 = arith.mulf %189, %9 : vector<64x8xf32>
    %193 = arith.addf %191, %192 : vector<64x8xf32>
    %194 = arith.mulf %175, %8 : vector<64x8xf32>
    %195 = arith.mulf %190, %9 : vector<64x8xf32>
    %196 = arith.addf %194, %195 : vector<64x8xf32>
    "tpu.trace_start"() <{level = 10 : i32, message = "qd,kd->qk"}> : () -> ()
    %cst_187 = arith.constant dense<0.000000e+00> : vector<64x64xf32>
    %197 = tpu.matmul %193, %196, %cst_187 {dimension_numbers = #tpu.dot_dimension_numbers<[1], [1], [0], [0], [0, 0, 1, 0], [], []>} : vector<64x8xf32>, vector<64x8xf32>, vector<64x64xf32> -> vector<64x64xf32>
    "tpu.trace_stop"() : () -> ()
    %198 = arith.addf %197, %10 : vector<64x64xf32>
    %cst_188 = arith.constant dense<0xFF800000> : vector<64xf32>
    %199 = vector.multi_reduction <maximumf>, %198, %cst_188 [1] : vector<64x64xf32> to vector<64xf32>
    %200 = vector.shape_cast %199 : vector<64xf32> to vector<64x1xf32>
    %201 = vector.broadcast %200 : vector<64x1xf32> to vector<64x64xf32>
    %202 = arith.subf %198, %201 : vector<64x64xf32>
    %203 = math.exp %202 : vector<64x64xf32>
    %cst_189 = arith.constant dense<0.000000e+00> : vector<64xf32>
    %204 = vector.multi_reduction <add>, %203, %cst_189 [1] : vector<64x64xf32> to vector<64xf32>
    %205 = vector.shape_cast %204 : vector<64xf32> to vector<64x1xf32>
    %206 = vector.broadcast %205 : vector<64x1xf32> to vector<64x64xf32>
    %207 = arith.divf %203, %206 : vector<64x64xf32>
    %cst_190 = arith.constant dense<0.000000e+00> : vector<64x8xf32>
    %208 = tpu.matmul %207, %188, %cst_190 {dimension_numbers = #tpu.dot_dimension_numbers<[1], [0], [0], [1], [0, 0, 1, 1], [], []>} : vector<64x64xf32>, vector<64x8xf32>, vector<64x8xf32> -> vector<64x8xf32>
    %209 = vector.extract_strided_slice %208 {offsets = [0, 0], sizes = [16, 8], strides = [1, 1]} : vector<64x8xf32> to vector<16x8xf32>
    %c1_191 = arith.constant 1 : index
    %c0_192 = arith.constant 0 : index
    %c0_193 = arith.constant 0 : index
    %c0_194 = arith.constant 0 : index
    %210 = vector.load %arg5[%c1_191, %c0_192, %c0_193, %c0_194] : memref<2x4x8x32xf32, #tpu.memory_space<vmem>>, vector<1x1x8x32xf32>
    %211 = vector.shape_cast %210 : vector<1x1x8x32xf32> to vector<8x32xf32>
    %cst_195 = arith.constant dense<0.000000e+00> : vector<16x32xf32>
    %212 = tpu.matmul %209, %211, %cst_195 {dimension_numbers = #tpu.dot_dimension_numbers<[1], [0], [0], [1], [0, 0, 1, 1], [], []>} : vector<16x8xf32>, vector<8x32xf32>, vector<16x32xf32> -> vector<16x32xf32>
    %213 = vector.extract_strided_slice %208 {offsets = [16, 0], sizes = [16, 8], strides = [1, 1]} : vector<64x8xf32> to vector<16x8xf32>
    %c1_196 = arith.constant 1 : index
    %c1_197 = arith.constant 1 : index
    %c0_198 = arith.constant 0 : index
    %c0_199 = arith.constant 0 : index
    %214 = vector.load %arg5[%c1_196, %c1_197, %c0_198, %c0_199] : memref<2x4x8x32xf32, #tpu.memory_space<vmem>>, vector<1x1x8x32xf32>
    %215 = vector.shape_cast %214 : vector<1x1x8x32xf32> to vector<8x32xf32>
    %cst_200 = arith.constant dense<0.000000e+00> : vector<16x32xf32>
    %216 = tpu.matmul %213, %215, %cst_200 {dimension_numbers = #tpu.dot_dimension_numbers<[1], [0], [0], [1], [0, 0, 1, 1], [], []>} : vector<16x8xf32>, vector<8x32xf32>, vector<16x32xf32> -> vector<16x32xf32>
    %217 = arith.addf %212, %216 : vector<16x32xf32>
    %218 = vector.extract_strided_slice %208 {offsets = [32, 0], sizes = [16, 8], strides = [1, 1]} : vector<64x8xf32> to vector<16x8xf32>
    %c1_201 = arith.constant 1 : index
    %c2_202 = arith.constant 2 : index
    %c0_203 = arith.constant 0 : index
    %c0_204 = arith.constant 0 : index
    %219 = vector.load %arg5[%c1_201, %c2_202, %c0_203, %c0_204] : memref<2x4x8x32xf32, #tpu.memory_space<vmem>>, vector<1x1x8x32xf32>
    %220 = vector.shape_cast %219 : vector<1x1x8x32xf32> to vector<8x32xf32>
    %cst_205 = arith.constant dense<0.000000e+00> : vector<16x32xf32>
    %221 = tpu.matmul %218, %220, %cst_205 {dimension_numbers = #tpu.dot_dimension_numbers<[1], [0], [0], [1], [0, 0, 1, 1], [], []>} : vector<16x8xf32>, vector<8x32xf32>, vector<16x32xf32> -> vector<16x32xf32>
    %222 = arith.addf %217, %221 : vector<16x32xf32>
    %223 = vector.extract_strided_slice %208 {offsets = [48, 0], sizes = [16, 8], strides = [1, 1]} : vector<64x8xf32> to vector<16x8xf32>
    %c1_206 = arith.constant 1 : index
    %c3_207 = arith.constant 3 : index
    %c0_208 = arith.constant 0 : index
    %c0_209 = arith.constant 0 : index
    %224 = vector.load %arg5[%c1_206, %c3_207, %c0_208, %c0_209] : memref<2x4x8x32xf32, #tpu.memory_space<vmem>>, vector<1x1x8x32xf32>
    %225 = vector.shape_cast %224 : vector<1x1x8x32xf32> to vector<8x32xf32>
    %cst_210 = arith.constant dense<0.000000e+00> : vector<16x32xf32>
    %226 = tpu.matmul %223, %225, %cst_210 {dimension_numbers = #tpu.dot_dimension_numbers<[1], [0], [0], [1], [0, 0, 1, 1], [], []>} : vector<16x8xf32>, vector<8x32xf32>, vector<16x32xf32> -> vector<16x32xf32>
    %227 = arith.addf %222, %226 : vector<16x32xf32>
    %228 = arith.addf %135, %227 : vector<16x32xf32>
    %c1_211 = arith.constant 1 : index
    %c0_212 = arith.constant 0 : index
    %c0_213 = arith.constant 0 : index
    %229 = vector.load %arg7[%c1_211, %c0_212, %c0_213] : memref<2x1x32xf32, #tpu.memory_space<vmem>>, vector<1x1x32xf32>
    %230 = vector.shape_cast %229 : vector<1x1x32xf32> to vector<1x32xf32>
    %231 = arith.mulf %228, %228 : vector<16x32xf32>
    %cst_214 = arith.constant dense<0.000000e+00> : vector<16xf32>
    %232 = vector.multi_reduction <add>, %231, %cst_214 [1] : vector<16x32xf32> to vector<16xf32>
    %233 = vector.shape_cast %232 : vector<16xf32> to vector<16x1xf32>
    %cst_215 = arith.constant 3.200000e+01 : f32
    %234 = vector.broadcast %cst_215 : f32 to vector<16x1xf32>
    %235 = arith.divf %233, %234 : vector<16x1xf32>
    %cst_216 = arith.constant 9.99999974E-6 : f32
    %236 = vector.broadcast %cst_216 : f32 to vector<16x1xf32>
    %237 = arith.addf %235, %236 : vector<16x1xf32>
    %238 = math.rsqrt %237 : vector<16x1xf32>
    %239 = vector.broadcast %238 : vector<16x1xf32> to vector<16x32xf32>
    %240 = arith.mulf %228, %239 : vector<16x32xf32>
    %241 = vector.broadcast %230 : vector<1x32xf32> to vector<16x32xf32>
    %242 = arith.mulf %240, %241 : vector<16x32xf32>
    %c1_217 = arith.constant 1 : index
    %c0_218 = arith.constant 0 : index
    %c0_219 = arith.constant 0 : index
    %243 = vector.load %arg8[%c1_217, %c0_218, %c0_219] : memref<2x32x64xf32, #tpu.memory_space<vmem>>, vector<1x32x64xf32>
    %244 = vector.shape_cast %243 : vector<1x32x64xf32> to vector<32x64xf32>
    %cst_220 = arith.constant dense<0.000000e+00> : vector<16x64xf32>
    %245 = tpu.matmul %242, %244, %cst_220 {dimension_numbers = #tpu.dot_dimension_numbers<[1], [0], [0], [1], [0, 0, 1, 1], [], []>} : vector<16x32xf32>, vector<32x64xf32>, vector<16x64xf32> -> vector<16x64xf32>
    %c1_221 = arith.constant 1 : index
    %c0_222 = arith.constant 0 : index
    %c0_223 = arith.constant 0 : index
    %246 = vector.load %arg9[%c1_221, %c0_222, %c0_223] : memref<2x32x64xf32, #tpu.memory_space<vmem>>, vector<1x32x64xf32>
    %247 = vector.shape_cast %246 : vector<1x32x64xf32> to vector<32x64xf32>
    %cst_224 = arith.constant dense<0.000000e+00> : vector<16x64xf32>
    %248 = tpu.matmul %242, %247, %cst_224 {dimension_numbers = #tpu.dot_dimension_numbers<[1], [0], [0], [1], [0, 0, 1, 1], [], []>} : vector<16x32xf32>, vector<32x64xf32>, vector<16x64xf32> -> vector<16x64xf32>
    %249 = arith.negf %245 : vector<16x64xf32>
    %250 = math.exp %249 : vector<16x64xf32>
    %cst_225 = arith.constant 1.000000e+00 : f32
    %251 = vector.broadcast %cst_225 : f32 to vector<16x64xf32>
    %252 = arith.addf %251, %250 : vector<16x64xf32>
    %253 = arith.divf %251, %252 : vector<16x64xf32>
    %254 = arith.mulf %245, %253 : vector<16x64xf32>
    %255 = arith.mulf %254, %248 : vector<16x64xf32>
    %c1_226 = arith.constant 1 : index
    %c0_227 = arith.constant 0 : index
    %c0_228 = arith.constant 0 : index
    %256 = vector.load %arg10[%c1_226, %c0_227, %c0_228] : memref<2x64x32xf32, #tpu.memory_space<vmem>>, vector<1x64x32xf32>
    %257 = vector.shape_cast %256 : vector<1x64x32xf32> to vector<64x32xf32>
    %cst_229 = arith.constant dense<0.000000e+00> : vector<16x32xf32>
    %258 = tpu.matmul %255, %257, %cst_229 {dimension_numbers = #tpu.dot_dimension_numbers<[1], [0], [0], [1], [0, 0, 1, 1], [], []>} : vector<16x64xf32>, vector<64x32xf32>, vector<16x32xf32> -> vector<16x32xf32>
    %259 = arith.addf %228, %258 : vector<16x32xf32>
    %c0_230 = arith.constant 0 : index
    %c0_231 = arith.constant 0 : index
    %260 = vector.load %arg11[%c0_230, %c0_231] : memref<1x32xf32, #tpu.memory_space<vmem>>, vector<1x32xf32>
    %261 = arith.mulf %259, %259 : vector<16x32xf32>
    %cst_232 = arith.constant dense<0.000000e+00> : vector<16xf32>
    %262 = vector.multi_reduction <add>, %261, %cst_232 [1] : vector<16x32xf32> to vector<16xf32>
    %263 = vector.shape_cast %262 : vector<16xf32> to vector<16x1xf32>
    %cst_233 = arith.constant 3.200000e+01 : f32
    %264 = vector.broadcast %cst_233 : f32 to vector<16x1xf32>
    %265 = arith.divf %263, %264 : vector<16x1xf32>
    %cst_234 = arith.constant 9.99999974E-6 : f32
    %266 = vector.broadcast %cst_234 : f32 to vector<16x1xf32>
    %267 = arith.addf %265, %266 : vector<16x1xf32>
    %268 = math.rsqrt %267 : vector<16x1xf32>
    %269 = vector.broadcast %268 : vector<16x1xf32> to vector<16x32xf32>
    %270 = arith.mulf %259, %269 : vector<16x32xf32>
    %271 = vector.broadcast %260 : vector<1x32xf32> to vector<16x32xf32>
    %272 = arith.mulf %270, %271 : vector<16x32xf32>
    %c0_235 = arith.constant 0 : index
    %c0_236 = arith.constant 0 : index
    %273 = vector.load %arg12[%c0_235, %c0_236] : memref<32x256xf32, #tpu.memory_space<vmem>>, vector<32x256xf32>
    %cst_237 = arith.constant dense<0.000000e+00> : vector<16x256xf32>
    %274 = tpu.matmul %272, %273, %cst_237 {dimension_numbers = #tpu.dot_dimension_numbers<[1], [0], [0], [1], [0, 0, 1, 1], [], []>} : vector<16x32xf32>, vector<32x256xf32>, vector<16x256xf32> -> vector<16x256xf32>
    %c0_238 = arith.constant 0 : index
    %c0_239 = arith.constant 0 : index
    %275 = vector.load %arg17[%c0_238, %c0_239] : memref<16x256xf32, #tpu.memory_space<vmem>>, vector<16x256xf32>
    tpu.vector_store %arg17[%c0_238, %c0_239], %274 {strides = array<i32>} : memref<16x256xf32, #tpu.memory_space<vmem>>, vector<16x256xf32>,
    return
  }
}

</mosaic_0001>

<llo_original>
// kernel: tpu_custom_call.1
$region0: #{tpu_custom_call.1}
  #allocation0 [shape = 'u32[]', space=smem, size = 0x4, offset = 0x4, fixed_abs, tag = 'smem constant byte address 0x4 - core index']
  #allocation1 [shape = 'u32[144,128]{1,0:T(1,128)}', space=vmem, size = 0x12000, scoped, tag = 'internal scratch']
  %s0 = inlined_call_operand.vmem [shape: s32[16,1], index: 0, kind: input, shape index: {}]
  %s1 = inlined_call_operand.vmem [shape: f32[256,32], index: 1, kind: input, shape index: {}]
  %s2 = inlined_call_operand.vmem [shape: f32[2,4,32,8], index: 2, kind: input, shape index: {}]
  %s3 = inlined_call_operand.vmem [shape: f32[2,4,32,8], index: 3, kind: input, shape index: {}]
  %s4 = inlined_call_operand.vmem [shape: f32[2,4,32,8], index: 4, kind: input, shape index: {}]
  %s5 = inlined_call_operand.vmem [shape: f32[2,4,8,32], index: 5, kind: input, shape index: {}]
  %s6 = inlined_call_operand.vmem [shape: f32[2,1,32], index: 6, kind: input, shape index: {}]
  %s7 = inlined_call_operand.vmem [shape: f32[2,1,32], index: 7, kind: input, shape index: {}]
  %s8 = inlined_call_operand.vmem [shape: f32[2,32,64], index: 8, kind: input, shape index: {}]
  %s9 = inlined_call_operand.vmem [shape: f32[2,32,64], index: 9, kind: input, shape index: {}]
  %s10 = inlined_call_operand.vmem [shape: f32[2,64,32], index: 10, kind: input, shape index: {}]
  %s11 = inlined_call_operand.vmem [shape: f32[1,32], index: 11, kind: input, shape index: {}]
  %s12 = inlined_call_operand.vmem [shape: f32[32,256], index: 12, kind: input, shape index: {}]
  %s13 = inlined_call_operand.vmem [shape: f32[64,8], index: 13, kind: input, shape index: {}]
  %s14 = inlined_call_operand.vmem [shape: f32[64,8], index: 14, kind: input, shape index: {}]
  %s15 = inlined_call_operand.vmem [shape: f32[64,64], index: 15, kind: input, shape index: {}]
  %s16 = inlined_call_operand.vmem [shape: f32[8,8], index: 16, kind: input, shape index: {}]
  %s17 = inlined_call_operand.hbm [shape: f32[16,256], index: 17, kind: output, shape index: {}]
  %s18 = sld [smem:[#allocation0]]
  $region78: #{tpu_custom_call.1} parent=0
    _
  %s20 = ssub.s32 1, %s18
  %s21 = scalar_select 0, %s20, %s18
  $region1: #{tpu_custom_call.1} parent=0
    #allocation2 [shape = 'u8[16384]{0}', space=vmem, size = 0x4000, scoped, tag = 'output window, operand 0, single buffered']
    #allocation3 [shape = 's32[1]{0}', space=sflag, size = 0x4, scoped, tag = 'scoped memory for tpu_custom_call.1']
    %22 = vsyncpa [#allocation3], 0
    // Predicated region
    $region2: #{tpu_custom_call.1} parent=1 // pred_check
      _
    $region3: #{tpu_custom_call.1} parent=1 // pred_check_branch
      %24 = sbr.rel (0) target = $region5
    $region4: #{tpu_custom_call.1} parent=1 // pred_region
      _
    $region5: #{tpu_custom_call.1} parent=1 // pred_fallthru
      _
    // Predicated region
    $region6: #{tpu_custom_call.1} parent=1 // pred_check
      _
    $region7: #{tpu_custom_call.1} parent=1 // pred_check_branch
      %26 = sbr.rel (0) target = $region9
    $region8: #{tpu_custom_call.1} parent=1 // pred_region
      _
    $region9: #{tpu_custom_call.1} parent=1 // pred_fallthru
      _
    // Predicated region
    $region10: #{tpu_custom_call.1} parent=1 // pred_check
      _
    $region11: #{tpu_custom_call.1} parent=1 // pred_check_branch
      %28 = sbr.rel (0) target = $region13
    $region12: #{tpu_custom_call.1} parent=1 // pred_region
      _
    $region13: #{tpu_custom_call.1} parent=1 // pred_fallthru
      _
    // Predicated region
    $region14: #{tpu_custom_call.1} parent=1 // pred_check
      _
    $region15: #{tpu_custom_call.1} parent=1 // pred_check_branch
      %30 = sbr.rel (0) target = $region17
    $region16: #{tpu_custom_call.1} parent=1 // pred_region
      _
    $region17: #{tpu_custom_call.1} parent=1 // pred_fallthru
      _
    // Predicated region
    $region18: #{tpu_custom_call.1} parent=1 // pred_check
      _
    $region19: #{tpu_custom_call.1} parent=1 // pred_check_branch
      %32 = sbr.rel (0) target = $region21
    $region20: #{tpu_custom_call.1} parent=1 // pred_region
      _
    $region21: #{tpu_custom_call.1} parent=1 // pred_fallthru
      _
    // Predicated region
    $region22: #{tpu_custom_call.1} parent=1 // pred_check
      _
    $region23: #{tpu_custom_call.1} parent=1 // pred_check_branch
      %34 = sbr.rel (0) target = $region25
    $region24: #{tpu_custom_call.1} parent=1 // pred_region
      _
    $region25: #{tpu_custom_call.1} parent=1 // pred_fallthru
      _
    // Predicated region
    $region26: #{tpu_custom_call.1} parent=1 // pred_check
      _
    $region27: #{tpu_custom_call.1} parent=1 // pred_check_branch
      %36 = sbr.rel (0) target = $region29
    $region28: #{tpu_custom_call.1} parent=1 // pred_region
      _
    $region29: #{tpu_custom_call.1} parent=1 // pred_fallthru
      _
    // Predicated region
    $region30: #{tpu_custom_call.1} parent=1 // pred_check
      _
    $region31: #{tpu_custom_call.1} parent=1 // pred_check_branch
      %38 = sbr.rel (0) target = $region33
    $region32: #{tpu_custom_call.1} parent=1 // pred_region
      _
    $region33: #{tpu_custom_call.1} parent=1 // pred_fallthru
      _
    // Predicated region
    $region34: #{tpu_custom_call.1} parent=1 // pred_check
      _
    $region35: #{tpu_custom_call.1} parent=1 // pred_check_branch
      %40 = sbr.rel (0) target = $region37
    $region36: #{tpu_custom_call.1} parent=1 // pred_region
      _
    $region37: #{tpu_custom_call.1} parent=1 // pred_fallthru
      _
    // Predicated region
    $region38: #{tpu_custom_call.1} parent=1 // pred_check
      _
    $region39: #{tpu_custom_call.1} parent=1 // pred_check_branch
      %42 = sbr.rel (0) target = $region41
    $region40: #{tpu_custom_call.1} parent=1 // pred_region
      _
    $region41: #{tpu_custom_call.1} parent=1 // pred_fallthru
      _
    // Predicated region
    $region42: #{tpu_custom_call.1} parent=1 // pred_check
      _
    $region43: #{tpu_custom_call.1} parent=1 // pred_check_branch
      %44 = sbr.rel (0) target = $region45
    $region44: #{tpu_custom_call.1} parent=1 // pred_region
      _
    $region45: #{tpu_custom_call.1} parent=1 // pred_fallthru
      _
    // Predicated region
    $region46: #{tpu_custom_call.1} parent=1 // pred_check
      _
    $region47: #{tpu_custom_call.1} parent=1 // pred_check_branch
      %46 = sbr.rel (0) target = $region49
    $region48: #{tpu_custom_call.1} parent=1 // pred_region
      _
    $region49: #{tpu_custom_call.1} parent=1 // pred_fallthru
      _
    // Predicated region
    $region50: #{tpu_custom_call.1} parent=1 // pred_check
      _
    $region51: #{tpu_custom_call.1} parent=1 // pred_check_branch
      %48 = sbr.rel (0) target = $region53
    $region52: #{tpu_custom_call.1} parent=1 // pred_region
      _
    $region53: #{tpu_custom_call.1} parent=1 // pred_fallthru
      _
    // Predicated region
    $region54: #{tpu_custom_call.1} parent=1 // pred_check
      _
    $region55: #{tpu_custom_call.1} parent=1 // pred_check_branch
      %50 = sbr.rel (0) target = $region57
    $region56: #{tpu_custom_call.1} parent=1 // pred_region
      _
    $region57: #{tpu_custom_call.1} parent=1 // pred_fallthru
      _
    // Predicated region
    $region58: #{tpu_custom_call.1} parent=1 // pred_check
      _
    $region59: #{tpu_custom_call.1} parent=1 // pred_check_branch
      %52 = sbr.rel (0) target = $region61
    $region60: #{tpu_custom_call.1} parent=1 // pred_region
      _
    $region61: #{tpu_custom_call.1} parent=1 // pred_fallthru
      _
    // Predicated region
    $region62: #{tpu_custom_call.1} parent=1 // pred_check
      _
    $region63: #{tpu_custom_call.1} parent=1 // pred_check_branch
      %54 = sbr.rel (0) target = $region65
    $region64: #{tpu_custom_call.1} parent=1 // pred_region
      _
    $region65: #{tpu_custom_call.1} parent=1 // pred_fallthru
      _
    // Predicated region
    $region66: #{tpu_custom_call.1} parent=1 // pred_check
      _
    $region67: #{tpu_custom_call.1} parent=1 // pred_check_branch
      %56 = sbr.rel (0) target = $region69
    $region68: #{tpu_custom_call.1} parent=1 // pred_region
      _
    $region69: #{tpu_custom_call.1} parent=1 // pred_fallthru
      _
    %v57 = vld [vmem:[%s0] sm:$0xff]
    %v58 = vld [vmem:[%s0 + $0x8] sm:$0xff]
    %v59 = vlaneseq
    %v60 = vand.u32 %v59, 127
    %v61 = vadd.s32 %v60, 128
    %62 = vset.pattern.permute.xlu0 0
    %63 = vperm.xlu0 %62, %v57
    %v64 = vpop.permute.xlu0 %63
    %65 = vset.pattern.permute.xlu0 0
    %66 = vperm.xlu0 %65, %v58
    %v67 = vpop.permute.xlu0 %66
    %vm68 = vcmp.eq.s32.totalorder %v60, %v64
    %vm69 = vcmp.eq.s32.totalorder %v61, %v64
    %vm70 = vcmp.eq.s32.totalorder %v60, %v67
    %vm71 = vcmp.eq.s32.totalorder %v61, %v67
    %v72 = vsel %vm68, 1, 0
    %v73 = vsel %vm69, 1, 0
    %v74 = vsel %vm70, 1, 0
    %v75 = vsel %vm71, 1, 0
    %v76 = vcvt.s32.f32 %v72
    %v77 = vcvt.s32.f32 %v73
    %v78 = vcvt.s32.f32 %v74
    %v79 = vcvt.s32.f32 %v75
    %v80 = vld [vmem:[%s1] sm:$0xff]
    %v81 = vld [vmem:[%s1 + $0x8] sm:$0xff]
    %v82 = vld [vmem:[%s1 + $0x10] sm:$0xff]
    %v83 = vld [vmem:[%s1 + $0x18] sm:$0xff]
    %v84 = vld [vmem:[%s1 + $0x20] sm:$0xff]
    %v85 = vld [vmem:[%s1 + $0x28] sm:$0xff]
    %v86 = vld [vmem:[%s1 + $0x30] sm:$0xff]
    %v87 = vld [vmem:[%s1 + $0x38] sm:$0xff]
    %v88 = vld [vmem:[%s1 + $0x40] sm:$0xff]
    %v89 = vld [vmem:[%s1 + $0x48] sm:$0xff]
    %v90 = vld [vmem:[%s1 + $0x50] sm:$0xff]
    %v91 = vld [vmem:[%s1 + $0x58] sm:$0xff]
    %v92 = vld [vmem:[%s1 + $0x60] sm:$0xff]
    %v93 = vld [vmem:[%s1 + $0x68] sm:$0xff]
    %v94 = vld [vmem:[%s1 + $0x70] sm:$0xff]
    %v95 = vld [vmem:[%s1 + $0x78] sm:$0xff]
    %v96 = vld [vmem:[%s1 + $0x80] sm:$0xff]
    %v97 = vld [vmem:[%s1 + $0x88] sm:$0xff]
    %v98 = vld [vmem:[%s1 + $0x90] sm:$0xff]
    %v99 = vld [vmem:[%s1 + $0x98] sm:$0xff]
    %v100 = vld [vmem:[%s1 + $0xa0] sm:$0xff]
    %v101 = vld [vmem:[%s1 + $0xa8] sm:$0xff]
    %v102 = vld [vmem:[%s1 + $0xb0] sm:$0xff]
    %v103 = vld [vmem:[%s1 + $0xb8] sm:$0xff]
    %v104 = vld [vmem:[%s1 + $0xc0] sm:$0xff]
    %v105 = vld [vmem:[%s1 + $0xc8] sm:$0xff]
    %v106 = vld [vmem:[%s1 + $0xd0] sm:$0xff]
    %v107 = vld [vmem:[%s1 + $0xd8] sm:$0xff]
    %v108 = vld [vmem:[%s1 + $0xe0] sm:$0xff]
    %v109 = vld [vmem:[%s1 + $0xe8] sm:$0xff]
    %v110 = vld [vmem:[%s1 + $0xf0] sm:$0xff]
    %v111 = vld [vmem:[%s1 + $0xf8] sm:$0xff]
    %112 = vmatprep.subr.mxu0 0.0
    %113 = vmatpush1.msra.mxu0 %v80
    %114 = vmatprep.subr.mxu0 0.0
    %115 = vmatpush1.msra.mxu0 %v81
    %116 = vmatprep.subr.mxu0 0.0
    %117 = vmatpush1.msra.mxu0 %v82
    %118 = vmatprep.subr.mxu0 0.0
    %119 = vmatpush1.msra.mxu0 %v83
    %120 = vmatprep.subr.mxu0 0.0
    %121 = vmatpush1.msra.mxu0 %v84
    %122 = vmatprep.subr.mxu0 0.0
    %123 = vmatpush1.msra.mxu0 %v85
    %124 = vmatprep.subr.mxu0 0.0
    %125 = vmatpush1.msra.mxu0 %v86
    %126 = vmatprep.subr.mxu0 0.0
    %127 = vmatpush1.msra.mxu0 %v87
    %128 = vmatprep.subr.mxu0 0.0
    %129 = vmatpush1.msra.mxu0 %v88
    %130 = vmatprep.subr.mxu0 0.0
    %131 = vmatpush1.msra.mxu0 %v89
    %132 = vmatprep.subr.mxu0 0.0
    %133 = vmatpush1.msra.mxu0 %v90
    %134 = vmatprep.subr.mxu0 0.0
    %135 = vmatpush1.msra.mxu0 %v91
    %136 = vmatprep.subr.mxu0 0.0
    %137 = vmatpush1.msra.mxu0 %v92
    %138 = vmatprep.subr.mxu0 0.0
    %139 = vmatpush1.msra.mxu0 %v93
    %140 = vmatprep.subr.mxu0 0.0
    %141 = vmatpush1.msra.mxu0 %v94
    %142 = vmatprep.subr.mxu0 0.0
    %143 = vmatpush1.msra.mxu0 %v95
    %144 = vmatprep.subr.mxu0 0.0
    %145 = vmatpush1.msra.mxu0 %v96
    %146 = vmatprep.subr.mxu0 0.0
    %147 = vmatpush1.msra.mxu0 %v97
    %148 = vmatprep.subr.mxu0 0.0
    %149 = vmatpush1.msra.mxu0 %v98
    %150 = vmatprep.subr.mxu0 0.0
    %151 = vmatpush1.msra.mxu0 %v99
    %152 = vmatprep.subr.mxu0 0.0
    %153 = vmatpush1.msra.mxu0 %v100
    %154 = vmatprep.subr.mxu0 0.0
    %155 = vmatpush1.msra.mxu0 %v101
    %156 = vmatprep.subr.mxu0 0.0
    %157 = vmatpush1.msra.mxu0 %v102
    %158 = vmatprep.subr.mxu0 0.0
    %159 = vmatpush1.msra.mxu0 %v103
    %160 = vmatprep.subr.mxu0 0.0
    %161 = vmatpush1.msra.mxu0 %v104
    %162 = vmatprep.subr.mxu0 0.0
    %163 = vmatpush1.msra.mxu0 %v105
    %164 = vmatprep.subr.mxu0 0.0
    %165 = vmatpush1.msra.mxu0 %v106
    %166 = vmatprep.subr.mxu0 0.0
    %167 = vmatpush1.msra.mxu0 %v107
    %168 = vmatprep.subr.mxu0 0.0
    %169 = vmatpush1.msra.mxu0 %v108
    %170 = vmatprep.subr.mxu0 0.0
    %171 = vmatpush1.msra.mxu0 %v109
    %172 = vmatprep.subr.mxu0 0.0
    %173 = vmatpush1.msra.mxu0 %v110
    %174 = vmatprep.subr.mxu0 0.0
    %175 = vmatpush1.msra.mxu0 %v111
    %176 = vmatprep.mubr.f32.mxu0 %v77
    %177 = vmatmul.mubr.f32.gmra.mrb[0].mxu0 %v76
    %v178 = vpop.f32.mrb[0].mxu0
    %v179 = vadd.f32 0.0, %v178
    %v180 = vpop.f32.mrb[0].mxu0
    %181 = vmatprep.mubr.f32.mxu0 %v79
    %182 = vmatmul.mubr.f32.gmra.mrb[0].mxu0 %v78
    %v183 = vpop.f32.mrb[0].mxu0
    %v184 = vadd.f32 0.0, %v183
    %v185 = vpop.f32.mrb[0].mxu0
    %186 = vdwg.mxu0
    %v187 = vld [vmem:[%s13] sm:$0xff]
    %v188 = vld [vmem:[%s13 + $0x8] sm:$0xff]
    %v189 = vld [vmem:[%s13 + $0x10] sm:$0xff]
    %v190 = vld [vmem:[%s13 + $0x18] sm:$0xff]
    %v191 = vld [vmem:[%s13 + $0x20] sm:$0xff]
    %v192 = vld [vmem:[%s13 + $0x28] sm:$0xff]
    %v193 = vld [vmem:[%s13 + $0x30] sm:$0xff]
    %v194 = vld [vmem:[%s13 + $0x38] sm:$0xff]
    %v195 = vld [vmem:[%s14] sm:$0xff]
    %v196 = vld [vmem:[%s14 + $0x8] sm:$0xff]
    %v197 = vld [vmem:[%s14 + $0x10] sm:$0xff]
    %v198 = vld [vmem:[%s14 + $0x18] sm:$0xff]
    %v199 = vld [vmem:[%s14 + $0x20] sm:$0xff]
    %v200 = vld [vmem:[%s14 + $0x28] sm:$0xff]
    %v201 = vld [vmem:[%s14 + $0x30] sm:$0xff]
    %v202 = vld [vmem:[%s14 + $0x38] sm:$0xff]
    %v203 = vld [vmem:[%s15] sm:$0xff]
    %v204 = vld [vmem:[%s15 + $0x8] sm:$0xff]
    %v205 = vld [vmem:[%s15 + $0x10] sm:$0xff]
    %v206 = vld [vmem:[%s15 + $0x18] sm:$0xff]
    %v207 = vld [vmem:[%s15 + $0x20] sm:$0xff]
    %v208 = vld [vmem:[%s15 + $0x28] sm:$0xff]
    %v209 = vld [vmem:[%s15 + $0x30] sm:$0xff]
    %v210 = vld [vmem:[%s15 + $0x38] sm:$0xff]
    %v211 = vld [vmem:[%s16] sm:$0xff]
    %v212 = vld [vmem:[%s6] sm:$0x1]
    %v213 = vmul.f32 %v179, %v179
    %v214 = vmul.f32 %v184, %v184
    %vm215 = vcmask 261120
    %v216 = vsel %vm215, %v213, 0.0
    %217 = vadd.xlane.f32.xlu0 %v216
    %v218 = vpop.xlane.xlu0 %217
    %v219 = vsel %vm215, %v214, 0.0
    %220 = vadd.xlane.f32.xlu0 %v219
    %v221 = vpop.xlane.xlu0 %220
    %v222 = vrcp.pop 32.0
    %v223 = vmul.f32 %v218, %v222
    %v224 = vmul.f32 %v221, %v222
    %v225 = vadd.f32 %v223, 1e-05
    %v226 = vadd.f32 %v224, 1e-05
    %v227 = vrsqrt.pop %v225
    %v228 = vrsqrt.pop %v226
    %v229 = vmul.f32 %v179, %v227
    %v230 = vmul.f32 %v184, %v228
    %v232 = vlaneseq
    %v233 = vshrl.u32 %v232, 7
    %v234 = vsub.s32 0, %v233
    %v235 = vrot.slane %v212, %v234
    %v237 = vmul.f32 %v229, %v235
    %v238 = vmul.f32 %v230, %v235
    %v239 = vld [vmem:[%s2] sm:$0xff]
    %v240 = vld [vmem:[%s2 + $0x8] sm:$0xff]
    %v241 = vld [vmem:[%s2 + $0x10] sm:$0xff]
    %v242 = vld [vmem:[%s2 + $0x18] sm:$0xff]
    %v244 = vsel %vm215, %v237, 0
    %v247 = vsel %vm215, %v238, 0
    %249 = vmatprep.subr.mxu0 0.0
    %250 = vmatpush1.msra.mxu0 %v239
    %251 = vmatprep.subr.mxu0 0.0
    %252 = vmatpush1.msra.mxu0 %v240
    %253 = vmatprep.subr.mxu0 0.0
    %254 = vmatpush1.msra.mxu0 %v241
    %255 = vmatprep.subr.mxu0 0.0
    %256 = vmatpush1.msra.mxu0 %v242
    %257 = vmatprep.subr.mxu0 0.0
    %258 = vmatpush1.msra.mxu0 0.0
    %259 = vmatprep.subr.mxu0 0.0
    %260 = vmatpush1.msra.mxu0 0.0
    %261 = vmatprep.subr.mxu0 0.0
    %262 = vmatpush1.msra.mxu0 0.0
    %263 = vmatprep.subr.mxu0 0.0
    %264 = vmatpush1.msra.mxu0 0.0
    %265 = vmatprep.subr.mxu0 0.0
    %266 = vmatpush1.msra.mxu0 0.0
    %267 = vmatprep.subr.mxu0 0.0
    %268 = vmatpush1.msra.mxu0 0.0
    %269 = vmatprep.subr.mxu0 0.0
    %270 = vmatpush1.msra.mxu0 0.0
    %271 = vmatprep.subr.mxu0 0.0
    %272 = vmatpush1.msra.mxu0 0.0
    %273 = vmatprep.subr.mxu0 0.0
    %274 = vmatpush1.msra.mxu0 0.0
    %275 = vmatprep.subr.mxu0 0.0
    %276 = vmatpush1.msra.mxu0 0.0
    %277 = vmatprep.subr.mxu0 0.0
    %278 = vmatpush1.msra.mxu0 0.0
    %279 = vmatprep.subr.mxu0 0.0
    %280 = vmatpush1.msra.mxu0 0.0
    %281 = vmatprep.subr.mxu0 0.0
    %282 = vmatpush1.msra.mxu0 0.0
    %283 = vmatprep.subr.mxu0 0.0
    %284 = vmatpush1.msra.mxu0 0.0
    %285 = vmatprep.subr.mxu0 0.0
    %286 = vmatpush1.msra.mxu0 0.0
    %287 = vmatprep.subr.mxu0 0.0
    %288 = vmatpush1.msra.mxu0 0.0
    %289 = vmatprep.subr.mxu0 0.0
    %290 = vmatpush1.msra.mxu0 0.0
    %291 = vmatprep.subr.mxu0 0.0
    %292 = vmatpush1.msra.mxu0 0.0
    %293 = vmatprep.subr.mxu0 0.0
    %294 = vmatpush1.msra.mxu0 0.0
    %295 = vmatprep.subr.mxu0 0.0
    %296 = vmatpush1.msra.mxu0 0.0
    %297 = vmatprep.subr.mxu0 0.0
    %298 = vmatpush1.msra.mxu0 0.0
    %299 = vmatprep.subr.mxu0 0.0
    %300 = vmatpush1.msra.mxu0 0.0
    %301 = vmatprep.subr.mxu0 0.0
    %302 = vmatpush1.msra.mxu0 0.0
    %303 = vmatprep.subr.mxu0 0.0
    %304 = vmatpush1.msra.mxu0 0.0
    %305 = vmatprep.subr.mxu0 0.0
    %306 = vmatpush1.msra.mxu0 0.0
    %307 = vmatprep.subr.mxu0 0.0
    %308 = vmatpush1.msra.mxu0 0.0
    %309 = vmatprep.subr.mxu0 0.0
    %310 = vmatpush1.msra.mxu0 0.0
    %311 = vmatprep.subr.mxu0 0.0
    %312 = vmatpush1.msra.mxu0 0.0
    %313 = vmatprep.mubr.f32.mxu0 0.0
    %314 = vmatmul.mubr.f32.gmra.mrb[0].mxu0 %v244
    %v315 = vpop.f32.mrb[0].mxu0
    %v316 = vadd.f32 0.0, %v315
    %v317 = vpop.f32.mrb[0].mxu0
    %318 = vmatprep.mubr.f32.mxu0 0.0
    %319 = vmatmul.mubr.f32.gmra.mrb[0].mxu0 %v247
    %v320 = vpop.f32.mrb[0].mxu0
    %v321 = vadd.f32 0.0, %v320
    %v322 = vpop.f32.mrb[0].mxu0
    %323 = vdwg.mxu0
    %s324 = scalar_lea.vmem %s2, 32
    %v325 = vld [vmem:[%s324] sm:$0xff]
    %v326 = vld [vmem:[%s324 + $0x8] sm:$0xff]
    %v327 = vld [vmem:[%s324 + $0x10] sm:$0xff]
    %v328 = vld [vmem:[%s324 + $0x18] sm:$0xff]
    %329 = vmatprep.subr.mxu0 0.0
    %330 = vmatpush1.msra.mxu0 %v325
    %331 = vmatprep.subr.mxu0 0.0
    %332 = vmatpush1.msra.mxu0 %v326
    %333 = vmatprep.subr.mxu0 0.0
    %334 = vmatpush1.msra.mxu0 %v327
    %335 = vmatprep.subr.mxu0 0.0
    %336 = vmatpush1.msra.mxu0 %v328
    %337 = vmatprep.subr.mxu0 0.0
    %338 = vmatpush1.msra.mxu0 0.0
    %339 = vmatprep.subr.mxu0 0.0
    %340 = vmatpush1.msra.mxu0 0.0
    %341 = vmatprep.subr.mxu0 0.0
    %342 = vmatpush1.msra.mxu0 0.0
    %343 = vmatprep.subr.mxu0 0.0
    %344 = vmatpush1.msra.mxu0 0.0
    %345 = vmatprep.subr.mxu0 0.0
    %346 = vmatpush1.msra.mxu0 0.0
    %347 = vmatprep.subr.mxu0 0.0
    %348 = vmatpush1.msra.mxu0 0.0
    %349 = vmatprep.subr.mxu0 0.0
    %350 = vmatpush1.msra.mxu0 0.0
    %351 = vmatprep.subr.mxu0 0.0
    %352 = vmatpush1.msra.mxu0 0.0
    %353 = vmatprep.subr.mxu0 0.0
    %354 = vmatpush1.msra.mxu0 0.0
    %355 = vmatprep.subr.mxu0 0.0
    %356 = vmatpush1.msra.mxu0 0.0
    %357 = vmatprep.subr.mxu0 0.0
    %358 = vmatpush1.msra.mxu0 0.0
    %359 = vmatprep.subr.mxu0 0.0
    %360 = vmatpush1.msra.mxu0 0.0
    %361 = vmatprep.subr.mxu0 0.0
    %362 = vmatpush1.msra.mxu0 0.0
    %363 = vmatprep.subr.mxu0 0.0
    %364 = vmatpush1.msra.mxu0 0.0
    %365 = vmatprep.subr.mxu0 0.0
    %366 = vmatpush1.msra.mxu0 0.0
    %367 = vmatprep.subr.mxu0 0.0
    %368 = vmatpush1.msra.mxu0 0.0
    %369 = vmatprep.subr.mxu0 0.0
    %370 = vmatpush1.msra.mxu0 0.0
    %371 = vmatprep.subr.mxu0 0.0
    %372 = vmatpush1.msra.mxu0 0.0
    %373 = vmatprep.subr.mxu0 0.0
    %374 = vmatpush1.msra.mxu0 0.0
    %375 = vmatprep.subr.mxu0 0.0
    %376 = vmatpush1.msra.mxu0 0.0
    %377 = vmatprep.subr.mxu0 0.0
    %378 = vmatpush1.msra.mxu0 0.0
    %379 = vmatprep.subr.mxu0 0.0
    %380 = vmatpush1.msra.mxu0 0.0
    %381 = vmatprep.subr.mxu0 0.0
    %382 = vmatpush1.msra.mxu0 0.0
    %383 = vmatprep.subr.mxu0 0.0
    %384 = vmatpush1.msra.mxu0 0.0
    %385 = vmatprep.subr.mxu0 0.0
    %386 = vmatpush1.msra.mxu0 0.0
    %387 = vmatprep.subr.mxu0 0.0
    %388 = vmatpush1.msra.mxu0 0.0
    %389 = vmatprep.subr.mxu0 0.0
    %390 = vmatpush1.msra.mxu0 0.0
    %391 = vmatprep.subr.mxu0 0.0
    %392 = vmatpush1.msra.mxu0 0.0
    %393 = vmatprep.mubr.f32.mxu0 0.0
    %394 = vmatmul.mubr.f32.gmra.mrb[0].mxu0 %v244
    %v395 = vpop.f32.mrb[0].mxu0
    %v396 = vadd.f32 0.0, %v395
    %v397 = vpop.f32.mrb[0].mxu0
    %398 = vmatprep.mubr.f32.mxu0 0.0
    %399 = vmatmul.mubr.f32.gmra.mrb[0].mxu0 %v247
    %v400 = vpop.f32.mrb[0].mxu0
    %v401 = vadd.f32 0.0, %v400
    %v402 = vpop.f32.mrb[0].mxu0
    %403 = vdwg.mxu0
    %s404 = scalar_lea.vmem %s2, 64
    %v405 = vld [vmem:[%s404] sm:$0xff]
    %v406 = vld [vmem:[%s404 + $0x8] sm:$0xff]
    %v407 = vld [vmem:[%s404 + $0x10] sm:$0xff]
    %v408 = vld [vmem:[%s404 + $0x18] sm:$0xff]
    %409 = vmatprep.subr.mxu0 0.0
    %410 = vmatpush1.msra.mxu0 %v405
    %411 = vmatprep.subr.mxu0 0.0
    %412 = vmatpush1.msra.mxu0 %v406
    %413 = vmatprep.subr.mxu0 0.0
    %414 = vmatpush1.msra.mxu0 %v407
    %415 = vmatprep.subr.mxu0 0.0
    %416 = vmatpush1.msra.mxu0 %v408
    %417 = vmatprep.subr.mxu0 0.0
    %418 = vmatpush1.msra.mxu0 0.0
    %419 = vmatprep.subr.mxu0 0.0
    %420 = vmatpush1.msra.mxu0 0.0
    %421 = vmatprep.subr.mxu0 0.0
    %422 = vmatpush1.msra.mxu0 0.0
    %423 = vmatprep.subr.mxu0 0.0
    %424 = vmatpush1.msra.mxu0 0.0
    %425 = vmatprep.subr.mxu0 0.0
    %426 = vmatpush1.msra.mxu0 0.0
    %427 = vmatprep.subr.mxu0 0.0
    %428 = vmatpush1.msra.mxu0 0.0
    %429 = vmatprep.subr.mxu0 0.0
    %430 = vmatpush1.msra.mxu0 0.0
    %431 = vmatprep.subr.mxu0 0.0
    %432 = vmatpush1.msra.mxu0 0.0
    %433 = vmatprep.subr.mxu0 0.0
    %434 = vmatpush1.msra.mxu0 0.0
    %435 = vmatprep.subr.mxu0 0.0
    %436 = vmatpush1.msra.mxu0 0.0
    %437 = vmatprep.subr.mxu0 0.0
    %438 = vmatpush1.msra.mxu0 0.0
    %439 = vmatprep.subr.mxu0 0.0
    %440 = vmatpush1.msra.mxu0 0.0
    %441 = vmatprep.subr.mxu0 0.0
    %442 = vmatpush1.msra.mxu0 0.0
    %443 = vmatprep.subr.mxu0 0.0
    %444 = vmatpush1.msra.mxu0 0.0
    %445 = vmatprep.subr.mxu0 0.0
    %446 = vmatpush1.msra.mxu0 0.0
    %447 = vmatprep.subr.mxu0 0.0
    %448 = vmatpush1.msra.mxu0 0.0
    %449 = vmatprep.subr.mxu0 0.0
    %450 = vmatpush1.msra.mxu0 0.0
    %451 = vmatprep.subr.mxu0 0.0
    %452 = vmatpush1.msra.mxu0 0.0
    %453 = vmatprep.subr.mxu0 0.0
    %454 = vmatpush1.msra.mxu0 0.0
    %455 = vmatprep.subr.mxu0 0.0
    %456 = vmatpush1.msra.mxu0 0.0
    %457 = vmatprep.subr.mxu0 0.0
    %458 = vmatpush1.msra.mxu0 0.0
    %459 = vmatprep.subr.mxu0 0.0
    %460 = vmatpush1.msra.mxu0 0.0
    %461 = vmatprep.subr.mxu0 0.0
    %462 = vmatpush1.msra.mxu0 0.0
    %463 = vmatprep.subr.mxu0 0.0
    %464 = vmatpush1.msra.mxu0 0.0
    %465 = vmatprep.subr.mxu0 0.0
    %466 = vmatpush1.msra.mxu0 0.0
    %467 = vmatprep.subr.mxu0 0.0
    %468 = vmatpush1.msra.mxu0 0.0
    %469 = vmatprep.subr.mxu0 0.0
    %470 = vmatpush1.msra.mxu0 0.0
    %471 = vmatprep.subr.mxu0 0.0
    %472 = vmatpush1.msra.mxu0 0.0
    %473 = vmatprep.mubr.f32.mxu0 0.0
    %474 = vmatmul.mubr.f32.gmra.mrb[0].mxu0 %v244
    %v475 = vpop.f32.mrb[0].mxu0
    %v476 = vadd.f32 0.0, %v475
    %v477 = vpop.f32.mrb[0].mxu0
    %478 = vmatprep.mubr.f32.mxu0 0.0
    %479 = vmatmul.mubr.f32.gmra.mrb[0].mxu0 %v247
    %v480 = vpop.f32.mrb[0].mxu0
    %v481 = vadd.f32 0.0, %v480
    %v482 = vpop.f32.mrb[0].mxu0
    %483 = vdwg.mxu0
    %s484 = scalar_lea.vmem %s2, 96
    %v485 = vld [vmem:[%s484] sm:$0xff]
    %v486 = vld [vmem:[%s484 + $0x8] sm:$0xff]
    %v487 = vld [vmem:[%s484 + $0x10] sm:$0xff]
    %v488 = vld [vmem:[%s484 + $0x18] sm:$0xff]
    %489 = vmatprep.subr.mxu0 0.0
    %490 = vmatpush1.msra.mxu0 %v485
    %491 = vmatprep.subr.mxu0 0.0
    %492 = vmatpush1.msra.mxu0 %v486
    %493 = vmatprep.subr.mxu0 0.0
    %494 = vmatpush1.msra.mxu0 %v487
    %495 = vmatprep.subr.mxu0 0.0
    %496 = vmatpush1.msra.mxu0 %v488
    %497 = vmatprep.subr.mxu0 0.0
    %498 = vmatpush1.msra.mxu0 0.0
    %499 = vmatprep.subr.mxu0 0.0
    %500 = vmatpush1.msra.mxu0 0.0
    %501 = vmatprep.subr.mxu0 0.0
    %502 = vmatpush1.msra.mxu0 0.0
    %503 = vmatprep.subr.mxu0 0.0
    %504 = vmatpush1.msra.mxu0 0.0
    %505 = vmatprep.subr.mxu0 0.0
    %506 = vmatpush1.msra.mxu0 0.0
    %507 = vmatprep.subr.mxu0 0.0
    %508 = vmatpush1.msra.mxu0 0.0
    %509 = vmatprep.subr.mxu0 0.0
    %510 = vmatpush1.msra.mxu0 0.0
    %511 = vmatprep.subr.mxu0 0.0
    %512 = vmatpush1.msra.mxu0 0.0
    %513 = vmatprep.subr.mxu0 0.0
    %514 = vmatpush1.msra.mxu0 0.0
    %515 = vmatprep.subr.mxu0 0.0
    %516 = vmatpush1.msra.mxu0 0.0
    %517 = vmatprep.subr.mxu0 0.0
    %518 = vmatpush1.msra.mxu0 0.0
    %519 = vmatprep.subr.mxu0 0.0
    %520 = vmatpush1.msra.mxu0 0.0
    %521 = vmatprep.subr.mxu0 0.0
    %522 = vmatpush1.msra.mxu0 0.0
    %523 = vmatprep.subr.mxu0 0.0
    %524 = vmatpush1.msra.mxu0 0.0
    %525 = vmatprep.subr.mxu0 0.0
    %526 = vmatpush1.msra.mxu0 0.0
    %527 = vmatprep.subr.mxu0 0.0
    %528 = vmatpush1.msra.mxu0 0.0
    %529 = vmatprep.subr.mxu0 0.0
    %530 = vmatpush1.msra.mxu0 0.0
    %531 = vmatprep.subr.mxu0 0.0
    %532 = vmatpush1.msra.mxu0 0.0
    %533 = vmatprep.subr.mxu0 0.0
    %534 = vmatpush1.msra.mxu0 0.0
    %535 = vmatprep.subr.mxu0 0.0
    %536 = vmatpush1.msra.mxu0 0.0
    %537 = vmatprep.subr.mxu0 0.0
    %538 = vmatpush1.msra.mxu0 0.0
    %539 = vmatprep.subr.mxu0 0.0
    %540 = vmatpush1.msra.mxu0 0.0
    %541 = vmatprep.subr.mxu0 0.0
    %542 = vmatpush1.msra.mxu0 0.0
    %543 = vmatprep.subr.mxu0 0.0
    %544 = vmatpush1.msra.mxu0 0.0
    %545 = vmatprep.subr.mxu0 0.0
    %546 = vmatpush1.msra.mxu0 0.0
    %547 = vmatprep.subr.mxu0 0.0
    %548 = vmatpush1.msra.mxu0 0.0
    %549 = vmatprep.subr.mxu0 0.0
    %550 = vmatpush1.msra.mxu0 0.0
    %551 = vmatprep.subr.mxu0 0.0
    %552 = vmatpush1.msra.mxu0 0.0
    %553 = vmatprep.mubr.f32.mxu0 0.0
    %554 = vmatmul.mubr.f32.gmra.mrb[0].mxu0 %v244
    %v555 = vpop.f32.mrb[0].mxu0
    %v556 = vadd.f32 0.0, %v555
    %v557 = vpop.f32.mrb[0].mxu0
    %558 = vmatprep.mubr.f32.mxu0 0.0
    %559 = vmatmul.mubr.f32.gmra.mrb[0].mxu0 %v247
    %v560 = vpop.f32.mrb[0].mxu0
    %v561 = vadd.f32 0.0, %v560
    %v562 = vpop.f32.mrb[0].mxu0
    %563 = vdwg.mxu0
    %v564 = vld [vmem:[%s3] sm:$0xff]
    %v565 = vld [vmem:[%s3 + $0x8] sm:$0xff]
    %v566 = vld [vmem:[%s3 + $0x10] sm:$0xff]
    %v567 = vld [vmem:[%s3 + $0x18] sm:$0xff]
    %568 = vmatprep.subr.mxu0 0.0
    %569 = vmatpush1.msra.mxu0 %v564
    %570 = vmatprep.subr.mxu0 0.0
    %571 = vmatpush1.msra.mxu0 %v565
    %572 = vmatprep.subr.mxu0 0.0
    %573 = vmatpush1.msra.mxu0 %v566
    %574 = vmatprep.subr.mxu0 0.0
    %575 = vmatpush1.msra.mxu0 %v567
    %576 = vmatprep.subr.mxu0 0.0
    %577 = vmatpush1.msra.mxu0 0.0
    %578 = vmatprep.subr.mxu0 0.0
    %579 = vmatpush1.msra.mxu0 0.0
    %580 = vmatprep.subr.mxu0 0.0
    %581 = vmatpush1.msra.mxu0 0.0
    %582 = vmatprep.subr.mxu0 0.0
    %583 = vmatpush1.msra.mxu0 0.0
    %584 = vmatprep.subr.mxu0 0.0
    %585 = vmatpush1.msra.mxu0 0.0
    %586 = vmatprep.subr.mxu0 0.0
    %587 = vmatpush1.msra.mxu0 0.0
    %588 = vmatprep.subr.mxu0 0.0
    %589 = vmatpush1.msra.mxu0 0.0
    %590 = vmatprep.subr.mxu0 0.0
    %591 = vmatpush1.msra.mxu0 0.0
    %592 = vmatprep.subr.mxu0 0.0
    %593 = vmatpush1.msra.mxu0 0.0
    %594 = vmatprep.subr.mxu0 0.0
    %595 = vmatpush1.msra.mxu0 0.0
    %596 = vmatprep.subr.mxu0 0.0
    %597 = vmatpush1.msra.mxu0 0.0
    %598 = vmatprep.subr.mxu0 0.0
    %599 = vmatpush1.msra.mxu0 0.0
    %600 = vmatprep.subr.mxu0 0.0
    %601 = vmatpush1.msra.mxu0 0.0
    %602 = vmatprep.subr.mxu0 0.0
    %603 = vmatpush1.msra.mxu0 0.0
    %604 = vmatprep.subr.mxu0 0.0
    %605 = vmatpush1.msra.mxu0 0.0
    %606 = vmatprep.subr.mxu0 0.0
    %607 = vmatpush1.msra.mxu0 0.0
    %608 = vmatprep.subr.mxu0 0.0
    %609 = vmatpush1.msra.mxu0 0.0
    %610 = vmatprep.subr.mxu0 0.0
    %611 = vmatpush1.msra.mxu0 0.0
    %612 = vmatprep.subr.mxu0 0.0
    %613 = vmatpush1.msra.mxu0 0.0
    %614 = vmatprep.subr.mxu0 0.0
    %615 = vmatpush1.msra.mxu0 0.0
    %616 = vmatprep.subr.mxu0 0.0
    %617 = vmatpush1.msra.mxu0 0.0
    %618 = vmatprep.subr.mxu0 0.0
    %619 = vmatpush1.msra.mxu0 0.0
    %620 = vmatprep.subr.mxu0 0.0
    %621 = vmatpush1.msra.mxu0 0.0
    %622 = vmatprep.subr.mxu0 0.0
    %623 = vmatpush1.msra.mxu0 0.0
    %624 = vmatprep.subr.mxu0 0.0
    %625 = vmatpush1.msra.mxu0 0.0
    %626 = vmatprep.subr.mxu0 0.0
    %627 = vmatpush1.msra.mxu0 0.0
    %628 = vmatprep.subr.mxu0 0.0
    %629 = vmatpush1.msra.mxu0 0.0
    %630 = vmatprep.subr.mxu0 0.0
    %631 = vmatpush1.msra.mxu0 0.0
    %632 = vmatprep.mubr.f32.mxu0 0.0
    %633 = vmatmul.mubr.f32.gmra.mrb[0].mxu0 %v244
    %v634 = vpop.f32.mrb[0].mxu0
    %v635 = vadd.f32 0.0, %v634
    %v636 = vpop.f32.mrb[0].mxu0
    %637 = vmatprep.mubr.f32.mxu0 0.0
    %638 = vmatmul.mubr.f32.gmra.mrb[0].mxu0 %v247
    %v639 = vpop.f32.mrb[0].mxu0
    %v640 = vadd.f32 0.0, %v639
    %v641 = vpop.f32.mrb[0].mxu0
    %642 = vdwg.mxu0
    %s643 = scalar_lea.vmem %s3, 32
    %v644 = vld [vmem:[%s643] sm:$0xff]
    %v645 = vld [vmem:[%s643 + $0x8] sm:$0xff]
    %v646 = vld [vmem:[%s643 + $0x10] sm:$0xff]
    %v647 = vld [vmem:[%s643 + $0x18] sm:$0xff]
    %648 = vmatprep.subr.mxu0 0.0
    %649 = vmatpush1.msra.mxu0 %v644
    %650 = vmatprep.subr.mxu0 0.0
    %651 = vmatpush1.msra.mxu0 %v645
    %652 = vmatprep.subr.mxu0 0.0
    %653 = vmatpush1.msra.mxu0 %v646
    %654 = vmatprep.subr.mxu0 0.0
    %655 = vmatpush1.msra.mxu0 %v647
    %656 = vmatprep.subr.mxu0 0.0
    %657 = vmatpush1.msra.mxu0 0.0
    %658 = vmatprep.subr.mxu0 0.0
    %659 = vmatpush1.msra.mxu0 0.0
    %660 = vmatprep.subr.mxu0 0.0
    %661 = vmatpush1.msra.mxu0 0.0
    %662 = vmatprep.subr.mxu0 0.0
    %663 = vmatpush1.msra.mxu0 0.0
    %664 = vmatprep.subr.mxu0 0.0
    %665 = vmatpush1.msra.mxu0 0.0
    %666 = vmatprep.subr.mxu0 0.0
    %667 = vmatpush1.msra.mxu0 0.0
    %668 = vmatprep.subr.mxu0 0.0
    %669 = vmatpush1.msra.mxu0 0.0
    %670 = vmatprep.subr.mxu0 0.0
    %671 = vmatpush1.msra.mxu0 0.0
    %672 = vmatprep.subr.mxu0 0.0
    %673 = vmatpush1.msra.mxu0 0.0
    %674 = vmatprep.subr.mxu0 0.0
    %675 = vmatpush1.msra.mxu0 0.0
    %676 = vmatprep.subr.mxu0 0.0
    %677 = vmatpush1.msra.mxu0 0.0
    %678 = vmatprep.subr.mxu0 0.0
    %679 = vmatpush1.msra.mxu0 0.0
    %680 = vmatprep.subr.mxu0 0.0
    %681 = vmatpush1.msra.mxu0 0.0
    %682 = vmatprep.subr.mxu0 0.0
    %683 = vmatpush1.msra.mxu0 0.0
    %684 = vmatprep.subr.mxu0 0.0
    %685 = vmatpush1.msra.mxu0 0.0
    %686 = vmatprep.subr.mxu0 0.0
    %687 = vmatpush1.msra.mxu0 0.0
    %688 = vmatprep.subr.mxu0 0.0
    %689 = vmatpush1.msra.mxu0 0.0
    %690 = vmatprep.subr.mxu0 0.0
    %691 = vmatpush1.msra.mxu0 0.0
    %692 = vmatprep.subr.mxu0 0.0
    %693 = vmatpush1.msra.mxu0 0.0
    %694 = vmatprep.subr.mxu0 0.0
    %695 = vmatpush1.msra.mxu0 0.0
    %696 = vmatprep.subr.mxu0 0.0
    %697 = vmatpush1.msra.mxu0 0.0
    %698 = vmatprep.subr.mxu0 0.0
    %699 = vmatpush1.msra.mxu0 0.0
    %700 = vmatprep.subr.mxu0 0.0
    %701 = vmatpush1.msra.mxu0 0.0
    %702 = vmatprep.subr.mxu0 0.0
    %703 = vmatpush1.msra.mxu0 0.0
    %704 = vmatprep.subr.mxu0 0.0
    %705 = vmatpush1.msra.mxu0 0.0
    %706 = vmatprep.subr.mxu0 0.0
    %707 = vmatpush1.msra.mxu0 0.0
    %708 = vmatprep.subr.mxu0 0.0
    %709 = vmatpush1.msra.mxu0 0.0
    %710 = vmatprep.subr.mxu0 0.0
    %711 = vmatpush1.msra.mxu0 0.0
    %712 = vmatprep.mubr.f32.mxu0 0.0
    %713 = vmatmul.mubr.f32.gmra.mrb[0].mxu0 %v244
    %v714 = vpop.f32.mrb[0].mxu0
    %v715 = vadd.f32 0.0, %v714
    %v716 = vpop.f32.mrb[0].mxu0
    %717 = vmatprep.mubr.f32.mxu0 0.0
    %718 = vmatmul.mubr.f32.gmra.mrb[0].mxu0 %v247
    %v719 = vpop.f32.mrb[0].mxu0
    %v720 = vadd.f32 0.0, %v719
    %v721 = vpop.f32.mrb[0].mxu0
    %722 = vdwg.mxu0
    %s723 = scalar_lea.vmem %s3, 64
    %v724 = vld [vmem:[%s723] sm:$0xff]
    %v725 = vld [vmem:[%s723 + $0x8] sm:$0xff]
    %v726 = vld [vmem:[%s723 + $0x10] sm:$0xff]
    %v727 = vld [vmem:[%s723 + $0x18] sm:$0xff]
    %728 = vmatprep.subr.mxu0 0.0
    %729 = vmatpush1.msra.mxu0 %v724
    %730 = vmatprep.subr.mxu0 0.0
    %731 = vmatpush1.msra.mxu0 %v725
    %732 = vmatprep.subr.mxu0 0.0
    %733 = vmatpush1.msra.mxu0 %v726
    %734 = vmatprep.subr.mxu0 0.0
    %735 = vmatpush1.msra.mxu0 %v727
    %736 = vmatprep.subr.mxu0 0.0
    %737 = vmatpush1.msra.mxu0 0.0
    %738 = vmatprep.subr.mxu0 0.0
    %739 = vmatpush1.msra.mxu0 0.0
    %740 = vmatprep.subr.mxu0 0.0
    %741 = vmatpush1.msra.mxu0 0.0
    %742 = vmatprep.subr.mxu0 0.0
    %743 = vmatpush1.msra.mxu0 0.0
    %744 = vmatprep.subr.mxu0 0.0
    %745 = vmatpush1.msra.mxu0 0.0
    %746 = vmatprep.subr.mxu0 0.0
    %747 = vmatpush1.msra.mxu0 0.0
    %748 = vmatprep.subr.mxu0 0.0
    %749 = vmatpush1.msra.mxu0 0.0
    %750 = vmatprep.subr.mxu0 0.0
    %751 = vmatpush1.msra.mxu0 0.0
    %752 = vmatprep.subr.mxu0 0.0
    %753 = vmatpush1.msra.mxu0 0.0
    %754 = vmatprep.subr.mxu0 0.0
    %755 = vmatpush1.msra.mxu0 0.0
    %756 = vmatprep.subr.mxu0 0.0
    %757 = vmatpush1.msra.mxu0 0.0
    %758 = vmatprep.subr.mxu0 0.0
    %759 = vmatpush1.msra.mxu0 0.0
    %760 = vmatprep.subr.mxu0 0.0
    %761 = vmatpush1.msra.mxu0 0.0
    %762 = vmatprep.subr.mxu0 0.0
    %763 = vmatpush1.msra.mxu0 0.0
    %764 = vmatprep.subr.mxu0 0.0
    %765 = vmatpush1.msra.mxu0 0.0
    %766 = vmatprep.subr.mxu0 0.0
    %767 = vmatpush1.msra.mxu0 0.0
    %768 = vmatprep.subr.mxu0 0.0
    %769 = vmatpush1.msra.mxu0 0.0
    %770 = vmatprep.subr.mxu0 0.0
    %771 = vmatpush1.msra.mxu0 0.0
    %772 = vmatprep.subr.mxu0 0.0
    %773 = vmatpush1.msra.mxu0 0.0
    %774 = vmatprep.subr.mxu0 0.0
    %775 = vmatpush1.msra.mxu0 0.0
    %776 = vmatprep.subr.mxu0 0.0
    %777 = vmatpush1.msra.mxu0 0.0
    %778 = vmatprep.subr.mxu0 0.0
    %779 = vmatpush1.msra.mxu0 0.0
    %780 = vmatprep.subr.mxu0 0.0
    %781 = vmatpush1.msra.mxu0 0.0
    %782 = vmatprep.subr.mxu0 0.0
    %783 = vmatpush1.msra.mxu0 0.0
    %784 = vmatprep.subr.mxu0 0.0
    %785 = vmatpush1.msra.mxu0 0.0
    %786 = vmatprep.subr.mxu0 0.0
    %787 = vmatpush1.msra.mxu0 0.0
    %788 = vmatprep.subr.mxu0 0.0
    %789 = vmatpush1.msra.mxu0 0.0
    %790 = vmatprep.subr.mxu0 0.0
    %791 = vmatpush1.msra.mxu0 0.0
    %792 = vmatprep.mubr.f32.mxu0 0.0
    %793 = vmatmul.mubr.f32.gmra.mrb[0].mxu0 %v244
    %v794 = vpop.f32.mrb[0].mxu0
    %v795 = vadd.f32 0.0, %v794
    %v796 = vpop.f32.mrb[0].mxu0
    %797 = vmatprep.mubr.f32.mxu0 0.0
    %798 = vmatmul.mubr.f32.gmra.mrb[0].mxu0 %v247
    %v799 = vpop.f32.mrb[0].mxu0
    %v800 = vadd.f32 0.0, %v799
    %v801 = vpop.f32.mrb[0].mxu0
    %802 = vdwg.mxu0
    %s803 = scalar_lea.vmem %s3, 96
    %v804 = vld [vmem:[%s803] sm:$0xff]
    %v805 = vld [vmem:[%s803 + $0x8] sm:$0xff]
    %v806 = vld [vmem:[%s803 + $0x10] sm:$0xff]
    %v807 = vld [vmem:[%s803 + $0x18] sm:$0xff]
    %808 = vmatprep.subr.mxu0 0.0
    %809 = vmatpush1.msra.mxu0 %v804
    %810 = vmatprep.subr.mxu0 0.0
    %811 = vmatpush1.msra.mxu0 %v805
    %812 = vmatprep.subr.mxu0 0.0
    %813 = vmatpush1.msra.mxu0 %v806
    %814 = vmatprep.subr.mxu0 0.0
    %815 = vmatpush1.msra.mxu0 %v807
    %816 = vmatprep.subr.mxu0 0.0
    %817 = vmatpush1.msra.mxu0 0.0
    %818 = vmatprep.subr.mxu0 0.0
    %819 = vmatpush1.msra.mxu0 0.0
    %820 = vmatprep.subr.mxu0 0.0
    %821 = vmatpush1.msra.mxu0 0.0
    %822 = vmatprep.subr.mxu0 0.0
    %823 = vmatpush1.msra.mxu0 0.0
    %824 = vmatprep.subr.mxu0 0.0
    %825 = vmatpush1.msra.mxu0 0.0
    %826 = vmatprep.subr.mxu0 0.0
    %827 = vmatpush1.msra.mxu0 0.0
    %828 = vmatprep.subr.mxu0 0.0
    %829 = vmatpush1.msra.mxu0 0.0
    %830 = vmatprep.subr.mxu0 0.0
    %831 = vmatpush1.msra.mxu0 0.0
    %832 = vmatprep.subr.mxu0 0.0
    %833 = vmatpush1.msra.mxu0 0.0
    %834 = vmatprep.subr.mxu0 0.0
    %835 = vmatpush1.msra.mxu0 0.0
    %836 = vmatprep.subr.mxu0 0.0
    %837 = vmatpush1.msra.mxu0 0.0
    %838 = vmatprep.subr.mxu0 0.0
    %839 = vmatpush1.msra.mxu0 0.0
    %840 = vmatprep.subr.mxu0 0.0
    %841 = vmatpush1.msra.mxu0 0.0
    %842 = vmatprep.subr.mxu0 0.0
    %843 = vmatpush1.msra.mxu0 0.0
    %844 = vmatprep.subr.mxu0 0.0
    %845 = vmatpush1.msra.mxu0 0.0
    %846 = vmatprep.subr.mxu0 0.0
    %847 = vmatpush1.msra.mxu0 0.0
    %848 = vmatprep.subr.mxu0 0.0
    %849 = vmatpush1.msra.mxu0 0.0
    %850 = vmatprep.subr.mxu0 0.0
    %851 = vmatpush1.msra.mxu0 0.0
    %852 = vmatprep.subr.mxu0 0.0
    %853 = vmatpush1.msra.mxu0 0.0
    %854 = vmatprep.subr.mxu0 0.0
    %855 = vmatpush1.msra.mxu0 0.0
    %856 = vmatprep.subr.mxu0 0.0
    %857 = vmatpush1.msra.mxu0 0.0
    %858 = vmatprep.subr.mxu0 0.0
    %859 = vmatpush1.msra.mxu0 0.0
    %860 = vmatprep.subr.mxu0 0.0
    %861 = vmatpush1.msra.mxu0 0.0
    %862 = vmatprep.subr.mxu0 0.0
    %863 = vmatpush1.msra.mxu0 0.0
    %864 = vmatprep.subr.mxu0 0.0
    %865 = vmatpush1.msra.mxu0 0.0
    %866 = vmatprep.subr.mxu0 0.0
    %867 = vmatpush1.msra.mxu0 0.0
    %868 = vmatprep.subr.mxu0 0.0
    %869 = vmatpush1.msra.mxu0 0.0
    %870 = vmatprep.subr.mxu0 0.0
    %871 = vmatpush1.msra.mxu0 0.0
    %872 = vmatprep.mubr.f32.mxu0 0.0
    %873 = vmatmul.mubr.f32.gmra.mrb[0].mxu0 %v244
    %v874 = vpop.f32.mrb[0].mxu0
    %v875 = vadd.f32 0.0, %v874
    %v876 = vpop.f32.mrb[0].mxu0
    %877 = vmatprep.mubr.f32.mxu0 0.0
    %878 = vmatmul.mubr.f32.gmra.mrb[0].mxu0 %v247
    %v879 = vpop.f32.mrb[0].mxu0
    %v880 = vadd.f32 0.0, %v879
    %v881 = vpop.f32.mrb[0].mxu0
    %882 = vdwg.mxu0
    %v883 = vld [vmem:[%s4] sm:$0xff]
    %v884 = vld [vmem:[%s4 + $0x8] sm:$0xff]
    %v885 = vld [vmem:[%s4 + $0x10] sm:$0xff]
    %v886 = vld [vmem:[%s4 + $0x18] sm:$0xff]
    %887 = vmatprep.subr.mxu0 0.0
    %888 = vmatpush1.msra.mxu0 %v883
    %889 = vmatprep.subr.mxu0 0.0
    %890 = vmatpush1.msra.mxu0 %v884
    %891 = vmatprep.subr.mxu0 0.0
    %892 = vmatpush1.msra.mxu0 %v885
    %893 = vmatprep.subr.mxu0 0.0
    %894 = vmatpush1.msra.mxu0 %v886
    %895 = vmatprep.subr.mxu0 0.0
    %896 = vmatpush1.msra.mxu0 0.0
    %897 = vmatprep.subr.mxu0 0.0
    %898 = vmatpush1.msra.mxu0 0.0
    %899 = vmatprep.subr.mxu0 0.0
    %900 = vmatpush1.msra.mxu0 0.0
    %901 = vmatprep.subr.mxu0 0.0
    %902 = vmatpush1.msra.mxu0 0.0
    %903 = vmatprep.subr.mxu0 0.0
    %904 = vmatpush1.msra.mxu0 0.0
    %905 = vmatprep.subr.mxu0 0.0
    %906 = vmatpush1.msra.mxu0 0.0
    %907 = vmatprep.subr.mxu0 0.0
    %908 = vmatpush1.msra.mxu0 0.0
    %909 = vmatprep.subr.mxu0 0.0
    %910 = vmatpush1.msra.mxu0 0.0
    %911 = vmatprep.subr.mxu0 0.0
    %912 = vmatpush1.msra.mxu0 0.0
    %913 = vmatprep.subr.mxu0 0.0
    %914 = vmatpush1.msra.mxu0 0.0
    %915 = vmatprep.subr.mxu0 0.0
    %916 = vmatpush1.msra.mxu0 0.0
    %917 = vmatprep.subr.mxu0 0.0
    %918 = vmatpush1.msra.mxu0 0.0
    %919 = vmatprep.subr.mxu0 0.0
    %920 = vmatpush1.msra.mxu0 0.0
    %921 = vmatprep.subr.mxu0 0.0
    %922 = vmatpush1.msra.mxu0 0.0
    %923 = vmatprep.subr.mxu0 0.0
    %924 = vmatpush1.msra.mxu0 0.0
    %925 = vmatprep.subr.mxu0 0.0
    %926 = vmatpush1.msra.mxu0 0.0
    %927 = vmatprep.subr.mxu0 0.0
    %928 = vmatpush1.msra.mxu0 0.0
    %929 = vmatprep.subr.mxu0 0.0
    %930 = vmatpush1.msra.mxu0 0.0
    %931 = vmatprep.subr.mxu0 0.0
    %932 = vmatpush1.msra.mxu0 0.0
    %933 = vmatprep.subr.mxu0 0.0
    %934 = vmatpush1.msra.mxu0 0.0
    %935 = vmatprep.subr.mxu0 0.0
    %936 = vmatpush1.msra.mxu0 0.0
    %937 = vmatprep.subr.mxu0 0.0
    %938 = vmatpush1.msra.mxu0 0.0
    %939 = vmatprep.subr.mxu0 0.0
    %940 = vmatpush1.msra.mxu0 0.0
    %941 = vmatprep.subr.mxu0 0.0
    %942 = vmatpush1.msra.mxu0 0.0
    %943 = vmatprep.subr.mxu0 0.0
    %944 = vmatpush1.msra.mxu0 0.0
    %945 = vmatprep.subr.mxu0 0.0
    %946 = vmatpush1.msra.mxu0 0.0
    %947 = vmatprep.subr.mxu0 0.0
    %948 = vmatpush1.msra.mxu0 0.0
    %949 = vmatprep.subr.mxu0 0.0
    %950 = vmatpush1.msra.mxu0 0.0
    %951 = vmatprep.mubr.f32.mxu0 0.0
    %952 = vmatmul.mubr.f32.gmra.mrb[0].mxu0 %v244
    %v953 = vpop.f32.mrb[0].mxu0
    %v954 = vadd.f32 0.0, %v953
    %v955 = vpop.f32.mrb[0].mxu0
    %956 = vmatprep.mubr.f32.mxu0 0.0
    %957 = vmatmul.mubr.f32.gmra.mrb[0].mxu0 %v247
    %v958 = vpop.f32.mrb[0].mxu0
    %v959 = vadd.f32 0.0, %v958
    %v960 = vpop.f32.mrb[0].mxu0
    %961 = vdwg.mxu0
    %s962 = scalar_lea.vmem %s4, 32
    %v963 = vld [vmem:[%s962] sm:$0xff]
    %v964 = vld [vmem:[%s962 + $0x8] sm:$0xff]
    %v965 = vld [vmem:[%s962 + $0x10] sm:$0xff]
    %v966 = vld [vmem:[%s962 + $0x18] sm:$0xff]
    %967 = vmatprep.subr.mxu0 0.0
    %968 = vmatpush1.msra.mxu0 %v963
    %969 = vmatprep.subr.mxu0 0.0
    %970 = vmatpush1.msra.mxu0 %v964
    %971 = vmatprep.subr.mxu0 0.0
    %972 = vmatpush1.msra.mxu0 %v965
    %973 = vmatprep.subr.mxu0 0.0
    %974 = vmatpush1.msra.mxu0 %v966
    %975 = vmatprep.subr.mxu0 0.0
    %976 = vmatpush1.msra.mxu0 0.0
    %977 = vmatprep.subr.mxu0 0.0
    %978 = vmatpush1.msra.mxu0 0.0
    %979 = vmatprep.subr.mxu0 0.0
    %980 = vmatpush1.msra.mxu0 0.0
    %981 = vmatprep.subr.mxu0 0.0
    %982 = vmatpush1.msra.mxu0 0.0
    %983 = vmatprep.subr.mxu0 0.0
    %984 = vmatpush1.msra.mxu0 0.0
    %985 = vmatprep.subr.mxu0 0.0
    %986 = vmatpush1.msra.mxu0 0.0
    %987 = vmatprep.subr.mxu0 0.0
    %988 = vmatpush1.msra.mxu0 0.0
    %989 = vmatprep.subr.mxu0 0.0
    %990 = vmatpush1.msra.mxu0 0.0
    %991 = vmatprep.subr.mxu0 0.0
    %992 = vmatpush1.msra.mxu0 0.0
    %993 = vmatprep.subr.mxu0 0.0
    %994 = vmatpush1.msra.mxu0 0.0
    %995 = vmatprep.subr.mxu0 0.0
    %996 = vmatpush1.msra.mxu0 0.0
    %997 = vmatprep.subr.mxu0 0.0
    %998 = vmatpush1.msra.mxu0 0.0
    %999 = vmatprep.subr.mxu0 0.0
    %1000 = vmatpush1.msra.mxu0 0.0
    %1001 = vmatprep.subr.mxu0 0.0
    %1002 = vmatpush1.msra.mxu0 0.0
    %1003 = vmatprep.subr.mxu0 0.0
    %1004 = vmatpush1.msra.mxu0 0.0
    %1005 = vmatprep.subr.mxu0 0.0
    %1006 = vmatpush1.msra.mxu0 0.0
    %1007 = vmatprep.subr.mxu0 0.0
    %1008 = vmatpush1.msra.mxu0 0.0
    %1009 = vmatprep.subr.mxu0 0.0
    %1010 = vmatpush1.msra.mxu0 0.0
    %1011 = vmatprep.subr.mxu0 0.0
    %1012 = vmatpush1.msra.mxu0 0.0
    %1013 = vmatprep.subr.mxu0 0.0
    %1014 = vmatpush1.msra.mxu0 0.0
    %1015 = vmatprep.subr.mxu0 0.0
    %1016 = vmatpush1.msra.mxu0 0.0
    %1017 = vmatprep.subr.mxu0 0.0
    %1018 = vmatpush1.msra.mxu0 0.0
    %1019 = vmatprep.subr.mxu0 0.0
    %1020 = vmatpush1.msra.mxu0 0.0
    %1021 = vmatprep.subr.mxu0 0.0
    %1022 = vmatpush1.msra.mxu0 0.0
    %1023 = vmatprep.subr.mxu0 0.0
    %1024 = vmatpush1.msra.mxu0 0.0
    %1025 = vmatprep.subr.mxu0 0.0
    %1026 = vmatpush1.msra.mxu0 0.0
    %1027 = vmatprep.subr.mxu0 0.0
    %1028 = vmatpush1.msra.mxu0 0.0
    %1029 = vmatprep.subr.mxu0 0.0
    %1030 = vmatpush1.msra.mxu0 0.0
    %1031 = vmatprep.mubr.f32.mxu0 0.0
    %1032 = vmatmul.mubr.f32.gmra.mrb[0].mxu0 %v244
    %v1033 = vpop.f32.mrb[0].mxu0
    %v1034 = vadd.f32 0.0, %v1033
    %v1035 = vpop.f32.mrb[0].mxu0
    %1036 = vmatprep.mubr.f32.mxu0 0.0
    %1037 = vmatmul.mubr.f32.gmra.mrb[0].mxu0 %v247
    %v1038 = vpop.f32.mrb[0].mxu0
    %v1039 = vadd.f32 0.0, %v1038
    %v1040 = vpop.f32.mrb[0].mxu0
    %1041 = vdwg.mxu0
    %s1042 = scalar_lea.vmem %s4, 64
    %v1043 = vld [vmem:[%s1042] sm:$0xff]
    %v1044 = vld [vmem:[%s1042 + $0x8] sm:$0xff]
    %v1045 = vld [vmem:[%s1042 + $0x10] sm:$0xff]
    %v1046 = vld [vmem:[%s1042 + $0x18] sm:$0xff]
    %1047 = vmatprep.subr.mxu0 0.0
    %1048 = vmatpush1.msra.mxu0 %v1043
    %1049 = vmatprep.subr.mxu0 0.0
    %1050 = vmatpush1.msra.mxu0 %v1044
    %1051 = vmatprep.subr.mxu0 0.0
    %1052 = vmatpush1.msra.mxu0 %v1045
    %1053 = vmatprep.subr.mxu0 0.0
    %1054 = vmatpush1.msra.mxu0 %v1046
    %1055 = vmatprep.subr.mxu0 0.0
    %1056 = vmatpush1.msra.mxu0 0.0
    %1057 = vmatprep.subr.mxu0 0.0
    %1058 = vmatpush1.msra.mxu0 0.0
    %1059 = vmatprep.subr.mxu0 0.0
    %1060 = vmatpush1.msra.mxu0 0.0
    %1061 = vmatprep.subr.mxu0 0.0
    %1062 = vmatpush1.msra.mxu0 0.0
    %1063 = vmatprep.subr.mxu0 0.0
    %1064 = vmatpush1.msra.mxu0 0.0
    %1065 = vmatprep.subr.mxu0 0.0
    %1066 = vmatpush1.msra.mxu0 0.0
    %1067 = vmatprep.subr.mxu0 0.0
    %1068 = vmatpush1.msra.mxu0 0.0
    %1069 = vmatprep.subr.mxu0 0.0
    %1070 = vmatpush1.msra.mxu0 0.0
    %1071 = vmatprep.subr.mxu0 0.0
    %1072 = vmatpush1.msra.mxu0 0.0
    %1073 = vmatprep.subr.mxu0 0.0
    %1074 = vmatpush1.msra.mxu0 0.0
    %1075 = vmatprep.subr.mxu0 0.0
    %1076 = vmatpush1.msra.mxu0 0.0
    %1077 = vmatprep.subr.mxu0 0.0
    %1078 = vmatpush1.msra.mxu0 0.0
    %1079 = vmatprep.subr.mxu0 0.0
    %1080 = vmatpush1.msra.mxu0 0.0
    %1081 = vmatprep.subr.mxu0 0.0
    %1082 = vmatpush1.msra.mxu0 0.0
    %1083 = vmatprep.subr.mxu0 0.0
    %1084 = vmatpush1.msra.mxu0 0.0
    %1085 = vmatprep.subr.mxu0 0.0
    %1086 = vmatpush1.msra.mxu0 0.0
    %1087 = vmatprep.subr.mxu0 0.0
    %1088 = vmatpush1.msra.mxu0 0.0
    %1089 = vmatprep.subr.mxu0 0.0
    %1090 = vmatpush1.msra.mxu0 0.0
    %1091 = vmatprep.subr.mxu0 0.0
    %1092 = vmatpush1.msra.mxu0 0.0
    %1093 = vmatprep.subr.mxu0 0.0
    %1094 = vmatpush1.msra.mxu0 0.0
    %1095 = vmatprep.subr.mxu0 0.0
    %1096 = vmatpush1.msra.mxu0 0.0
    %1097 = vmatprep.subr.mxu0 0.0
    %1098 = vmatpush1.msra.mxu0 0.0
    %1099 = vmatprep.subr.mxu0 0.0
    %1100 = vmatpush1.msra.mxu0 0.0
    %1101 = vmatprep.subr.mxu0 0.0
    %1102 = vmatpush1.msra.mxu0 0.0
    %1103 = vmatprep.subr.mxu0 0.0
    %1104 = vmatpush1.msra.mxu0 0.0
    %1105 = vmatprep.subr.mxu0 0.0
    %1106 = vmatpush1.msra.mxu0 0.0
    %1107 = vmatprep.subr.mxu0 0.0
    %1108 = vmatpush1.msra.mxu0 0.0
    %1109 = vmatprep.subr.mxu0 0.0
    %1110 = vmatpush1.msra.mxu0 0.0
    %1111 = vmatprep.mubr.f32.mxu0 0.0
    %1112 = vmatmul.mubr.f32.gmra.mrb[0].mxu0 %v244
    %v1113 = vpop.f32.mrb[0].mxu0
    %v1114 = vadd.f32 0.0, %v1113
    %v1115 = vpop.f32.mrb[0].mxu0
    %1116 = vmatprep.mubr.f32.mxu0 0.0
    %1117 = vmatmul.mubr.f32.gmra.mrb[0].mxu0 %v247
    %v1118 = vpop.f32.mrb[0].mxu0
    %v1119 = vadd.f32 0.0, %v1118
    %v1120 = vpop.f32.mrb[0].mxu0
    %1121 = vdwg.mxu0
    %s1122 = scalar_lea.vmem %s4, 96
    %v1123 = vld [vmem:[%s1122] sm:$0xff]
    %v1124 = vld [vmem:[%s1122 + $0x8] sm:$0xff]
    %v1125 = vld [vmem:[%s1122 + $0x10] sm:$0xff]
    %v1126 = vld [vmem:[%s1122 + $0x18] sm:$0xff]
    %1127 = vmatprep.subr.mxu0 0.0
    %1128 = vmatpush1.msra.mxu0 %v1123
    %1129 = vmatprep.subr.mxu0 0.0
    %1130 = vmatpush1.msra.mxu0 %v1124
    %1131 = vmatprep.subr.mxu0 0.0
    %1132 = vmatpush1.msra.mxu0 %v1125
    %1133 = vmatprep.subr.mxu0 0.0
    %1134 = vmatpush1.msra.mxu0 %v1126
    %1135 = vmatprep.subr.mxu0 0.0
    %1136 = vmatpush1.msra.mxu0 0.0
    %1137 = vmatprep.subr.mxu0 0.0
    %1138 = vmatpush1.msra.mxu0 0.0
    %1139 = vmatprep.subr.mxu0 0.0
    %1140 = vmatpush1.msra.mxu0 0.0
    %1141 = vmatprep.subr.mxu0 0.0
    %1142 = vmatpush1.msra.mxu0 0.0
    %1143 = vmatprep.subr.mxu0 0.0
    %1144 = vmatpush1.msra.mxu0 0.0
    %1145 = vmatprep.subr.mxu0 0.0
    %1146 = vmatpush1.msra.mxu0 0.0
    %1147 = vmatprep.subr.mxu0 0.0
    %1148 = vmatpush1.msra.mxu0 0.0
    %1149 = vmatprep.subr.mxu0 0.0
    %1150 = vmatpush1.msra.mxu0 0.0
    %1151 = vmatprep.subr.mxu0 0.0
    %1152 = vmatpush1.msra.mxu0 0.0
    %1153 = vmatprep.subr.mxu0 0.0
    %1154 = vmatpush1.msra.mxu0 0.0
    %1155 = vmatprep.subr.mxu0 0.0
    %1156 = vmatpush1.msra.mxu0 0.0
    %1157 = vmatprep.subr.mxu0 0.0
    %1158 = vmatpush1.msra.mxu0 0.0
    %1159 = vmatprep.subr.mxu0 0.0
    %1160 = vmatpush1.msra.mxu0 0.0
    %1161 = vmatprep.subr.mxu0 0.0
    %1162 = vmatpush1.msra.mxu0 0.0
    %1163 = vmatprep.subr.mxu0 0.0
    %1164 = vmatpush1.msra.mxu0 0.0
    %1165 = vmatprep.subr.mxu0 0.0
    %1166 = vmatpush1.msra.mxu0 0.0
    %1167 = vmatprep.subr.mxu0 0.0
    %1168 = vmatpush1.msra.mxu0 0.0
    %1169 = vmatprep.subr.mxu0 0.0
    %1170 = vmatpush1.msra.mxu0 0.0
    %1171 = vmatprep.subr.mxu0 0.0
    %1172 = vmatpush1.msra.mxu0 0.0
    %1173 = vmatprep.subr.mxu0 0.0
    %1174 = vmatpush1.msra.mxu0 0.0
    %1175 = vmatprep.subr.mxu0 0.0
    %1176 = vmatpush1.msra.mxu0 0.0
    %1177 = vmatprep.subr.mxu0 0.0
    %1178 = vmatpush1.msra.mxu0 0.0
    %1179 = vmatprep.subr.mxu0 0.0
    %1180 = vmatpush1.msra.mxu0 0.0
    %1181 = vmatprep.subr.mxu0 0.0
    %1182 = vmatpush1.msra.mxu0 0.0
    %1183 = vmatprep.subr.mxu0 0.0
    %1184 = vmatpush1.msra.mxu0 0.0
    %1185 = vmatprep.subr.mxu0 0.0
    %1186 = vmatpush1.msra.mxu0 0.0
    %1187 = vmatprep.subr.mxu0 0.0
    %1188 = vmatpush1.msra.mxu0 0.0
    %1189 = vmatprep.subr.mxu0 0.0
    %1190 = vmatpush1.msra.mxu0 0.0
    %1191 = vmatprep.mubr.f32.mxu0 0.0
    %1192 = vmatmul.mubr.f32.gmra.mrb[0].mxu0 %v244
    %v1193 = vpop.f32.mrb[0].mxu0
    %v1194 = vadd.f32 0.0, %v1193
    %v1195 = vpop.f32.mrb[0].mxu0
    %1196 = vmatprep.mubr.f32.mxu0 0.0
    %1197 = vmatmul.mubr.f32.gmra.mrb[0].mxu0 %v247
    %v1198 = vpop.f32.mrb[0].mxu0
    %v1199 = vadd.f32 0.0, %v1198
    %v1200 = vpop.f32.mrb[0].mxu0
    %1201 = vdwg.mxu0
    %vm1202 = vcmask 64512
    %v1204 = vsel %vm1202, %v316, 0
    %v1207 = vsel %vm1202, %v321, 0
    %v1210 = vsel %vm1202, %v396, 0
    %v1213 = vsel %vm1202, %v401, 0
    %v1216 = vsel %vm1202, %v476, 0
    %v1219 = vsel %vm1202, %v481, 0
    %v1222 = vsel %vm1202, %v556, 0
    %v1225 = vsel %vm1202, %v561, 0
    %1227 = vmatprep.subr.mxu0 0.0
    %1228 = vmatpush1.msra.mxu0 %v211
    %1229 = vmatprep.subr.mxu0 0.0
    %1230 = vmatpush1.msra.mxu0 0.0
    %1231 = vmatprep.subr.mxu0 0.0
    %1232 = vmatpush1.msra.mxu0 0.0
    %1233 = vmatprep.subr.mxu0 0.0
    %1234 = vmatpush1.msra.mxu0 0.0
    %1235 = vmatprep.subr.mxu0 0.0
    %1236 = vmatpush1.msra.mxu0 0.0
    %1237 = vmatprep.subr.mxu0 0.0
    %1238 = vmatpush1.msra.mxu0 0.0
    %1239 = vmatprep.subr.mxu0 0.0
    %1240 = vmatpush1.msra.mxu0 0.0
    %1241 = vmatprep.subr.mxu0 0.0
    %1242 = vmatpush1.msra.mxu0 0.0
    %1243 = vmatprep.subr.mxu0 0.0
    %1244 = vmatpush1.msra.mxu0 0.0
    %1245 = vmatprep.subr.mxu0 0.0
    %1246 = vmatpush1.msra.mxu0 0.0
    %1247 = vmatprep.subr.mxu0 0.0
    %1248 = vmatpush1.msra.mxu0 0.0
    %1249 = vmatprep.subr.mxu0 0.0
    %1250 = vmatpush1.msra.mxu0 0.0
    %1251 = vmatprep.subr.mxu0 0.0
    %1252 = vmatpush1.msra.mxu0 0.0
    %1253 = vmatprep.subr.mxu0 0.0
    %1254 = vmatpush1.msra.mxu0 0.0
    %1255 = vmatprep.subr.mxu0 0.0
    %1256 = vmatpush1.msra.mxu0 0.0
    %1257 = vmatprep.subr.mxu0 0.0
    %1258 = vmatpush1.msra.mxu0 0.0
    %1259 = vmatprep.subr.mxu0 0.0
    %1260 = vmatpush1.msra.mxu0 0.0
    %1261 = vmatprep.subr.mxu0 0.0
    %1262 = vmatpush1.msra.mxu0 0.0
    %1263 = vmatprep.subr.mxu0 0.0
    %1264 = vmatpush1.msra.mxu0 0.0
    %1265 = vmatprep.subr.mxu0 0.0
    %1266 = vmatpush1.msra.mxu0 0.0
    %1267 = vmatprep.subr.mxu0 0.0
    %1268 = vmatpush1.msra.mxu0 0.0
    %1269 = vmatprep.subr.mxu0 0.0
    %1270 = vmatpush1.msra.mxu0 0.0
    %1271 = vmatprep.subr.mxu0 0.0
    %1272 = vmatpush1.msra.mxu0 0.0
    %1273 = vmatprep.subr.mxu0 0.0
    %1274 = vmatpush1.msra.mxu0 0.0
    %1275 = vmatprep.subr.mxu0 0.0
    %1276 = vmatpush1.msra.mxu0 0.0
    %1277 = vmatprep.subr.mxu0 0.0
    %1278 = vmatpush1.msra.mxu0 0.0
    %1279 = vmatprep.subr.mxu0 0.0
    %1280 = vmatpush1.msra.mxu0 0.0
    %1281 = vmatprep.subr.mxu0 0.0
    %1282 = vmatpush1.msra.mxu0 0.0
    %1283 = vmatprep.subr.mxu0 0.0
    %1284 = vmatpush1.msra.mxu0 0.0
    %1285 = vmatprep.subr.mxu0 0.0
    %1286 = vmatpush1.msra.mxu0 0.0
    %1287 = vmatprep.subr.mxu0 0.0
    %1288 = vmatpush1.msra.mxu0 0.0
    %1289 = vmatprep.subr.mxu0 0.0
    %1290 = vmatpush1.msra.mxu0 0.0
    %1291 = vmatprep.mubr.f32.mxu0 0.0
    %1292 = vmatmul.mubr.f32.gmra.mrb[0].mxu0 %v1204
    %v1293 = vpop.f32.mrb[0].mxu0
    %v1294 = vadd.f32 0.0, %v1293
    %v1295 = vpop.f32.mrb[0].mxu0
    %1296 = vmatprep.mubr.f32.mxu0 0.0
    %1297 = vmatmul.mubr.f32.gmra.mrb[0].mxu0 %v1207
    %v1298 = vpop.f32.mrb[0].mxu0
    %v1299 = vadd.f32 0.0, %v1298
    %v1300 = vpop.f32.mrb[0].mxu0
    %1301 = vmatprep.mubr.f32.mxu0 0.0
    %1302 = vmatmul.mubr.f32.gmra.mrb[0].mxu0 %v1210
    %v1303 = vpop.f32.mrb[0].mxu0
    %v1304 = vadd.f32 0.0, %v1303
    %v1305 = vpop.f32.mrb[0].mxu0
    %1306 = vmatprep.mubr.f32.mxu0 0.0
    %1307 = vmatmul.mubr.f32.gmra.mrb[0].mxu0 %v1213
    %v1308 = vpop.f32.mrb[0].mxu0
    %v1309 = vadd.f32 0.0, %v1308
    %v1310 = vpop.f32.mrb[0].mxu0
    %1311 = vmatprep.mubr.f32.mxu0 0.0
    %1312 = vmatmul.mubr.f32.gmra.mrb[0].mxu0 %v1216
    %v1313 = vpop.f32.mrb[0].mxu0
    %v1314 = vadd.f32 0.0, %v1313
    %v1315 = vpop.f32.mrb[0].mxu0
    %1316 = vmatprep.mubr.f32.mxu0 0.0
    %1317 = vmatmul.mubr.f32.gmra.mrb[0].mxu0 %v1219
    %v1318 = vpop.f32.mrb[0].mxu0
    %v1319 = vadd.f32 0.0, %v1318
    %v1320 = vpop.f32.mrb[0].mxu0
    %1321 = vmatprep.mubr.f32.mxu0 0.0
    %1322 = vmatmul.mubr.f32.gmra.mrb[0].mxu0 %v1222
    %v1323 = vpop.f32.mrb[0].mxu0
    %v1324 = vadd.f32 0.0, %v1323
    %v1325 = vpop.f32.mrb[0].mxu0
    %1326 = vmatprep.mubr.f32.mxu0 0.0
    %1327 = vmatmul.mubr.f32.gmra.mrb[0].mxu0 %v1225
    %v1328 = vpop.f32.mrb[0].mxu0
    %v1329 = vadd.f32 0.0, %v1328
    %v1330 = vpop.f32.mrb[0].mxu0
    %1331 = vdwg.mxu0
    %v1333 = vsel %vm1202, %v635, 0
    %v1336 = vsel %vm1202, %v640, 0
    %v1339 = vsel %vm1202, %v715, 0
    %v1342 = vsel %vm1202, %v720, 0
    %v1345 = vsel %vm1202, %v795, 0
    %v1348 = vsel %vm1202, %v800, 0
    %v1351 = vsel %vm1202, %v875, 0
    %v1354 = vsel %vm1202, %v880, 0
    %1356 = vmatprep.subr.mxu0 0.0
    %1357 = vmatpush1.msra.mxu0 %v211
    %1358 = vmatprep.subr.mxu0 0.0
    %1359 = vmatpush1.msra.mxu0 0.0
    %1360 = vmatprep.subr.mxu0 0.0
    %1361 = vmatpush1.msra.mxu0 0.0
    %1362 = vmatprep.subr.mxu0 0.0
    %1363 = vmatpush1.msra.mxu0 0.0
    %1364 = vmatprep.subr.mxu0 0.0
    %1365 = vmatpush1.msra.mxu0 0.0
    %1366 = vmatprep.subr.mxu0 0.0
    %1367 = vmatpush1.msra.mxu0 0.0
    %1368 = vmatprep.subr.mxu0 0.0
    %1369 = vmatpush1.msra.mxu0 0.0
    %1370 = vmatprep.subr.mxu0 0.0
    %1371 = vmatpush1.msra.mxu0 0.0
    %1372 = vmatprep.subr.mxu0 0.0
    %1373 = vmatpush1.msra.mxu0 0.0
    %1374 = vmatprep.subr.mxu0 0.0
    %1375 = vmatpush1.msra.mxu0 0.0
    %1376 = vmatprep.subr.mxu0 0.0
    %1377 = vmatpush1.msra.mxu0 0.0
    %1378 = vmatprep.subr.mxu0 0.0
    %1379 = vmatpush1.msra.mxu0 0.0
    %1380 = vmatprep.subr.mxu0 0.0
    %1381 = vmatpush1.msra.mxu0 0.0
    %1382 = vmatprep.subr.mxu0 0.0
    %1383 = vmatpush1.msra.mxu0 0.0
    %1384 = vmatprep.subr.mxu0 0.0
    %1385 = vmatpush1.msra.mxu0 0.0
    %1386 = vmatprep.subr.mxu0 0.0
    %1387 = vmatpush1.msra.mxu0 0.0
    %1388 = vmatprep.subr.mxu0 0.0
    %1389 = vmatpush1.msra.mxu0 0.0
    %1390 = vmatprep.subr.mxu0 0.0
    %1391 = vmatpush1.msra.mxu0 0.0
    %1392 = vmatprep.subr.mxu0 0.0
    %1393 = vmatpush1.msra.mxu0 0.0
    %1394 = vmatprep.subr.mxu0 0.0
    %1395 = vmatpush1.msra.mxu0 0.0
    %1396 = vmatprep.subr.mxu0 0.0
    %1397 = vmatpush1.msra.mxu0 0.0
    %1398 = vmatprep.subr.mxu0 0.0
    %1399 = vmatpush1.msra.mxu0 0.0
    %1400 = vmatprep.subr.mxu0 0.0
    %1401 = vmatpush1.msra.mxu0 0.0
    %1402 = vmatprep.subr.mxu0 0.0
    %1403 = vmatpush1.msra.mxu0 0.0
    %1404 = vmatprep.subr.mxu0 0.0
    %1405 = vmatpush1.msra.mxu0 0.0
    %1406 = vmatprep.subr.mxu0 0.0
    %1407 = vmatpush1.msra.mxu0 0.0
    %1408 = vmatprep.subr.mxu0 0.0
    %1409 = vmatpush1.msra.mxu0 0.0
    %1410 = vmatprep.subr.mxu0 0.0
    %1411 = vmatpush1.msra.mxu0 0.0
    %1412 = vmatprep.subr.mxu0 0.0
    %1413 = vmatpush1.msra.mxu0 0.0
    %1414 = vmatprep.subr.mxu0 0.0
    %1415 = vmatpush1.msra.mxu0 0.0
    %1416 = vmatprep.subr.mxu0 0.0
    %1417 = vmatpush1.msra.mxu0 0.0
    %1418 = vmatprep.subr.mxu0 0.0
    %1419 = vmatpush1.msra.mxu0 0.0
    %1420 = vmatprep.mubr.f32.mxu0 0.0
    %1421 = vmatmul.mubr.f32.gmra.mrb[0].mxu0 %v1333
    %v1422 = vpop.f32.mrb[0].mxu0
    %v1423 = vadd.f32 0.0, %v1422
    %v1424 = vpop.f32.mrb[0].mxu0
    %1425 = vmatprep.mubr.f32.mxu0 0.0
    %1426 = vmatmul.mubr.f32.gmra.mrb[0].mxu0 %v1336
    %v1427 = vpop.f32.mrb[0].mxu0
    %v1428 = vadd.f32 0.0, %v1427
    %v1429 = vpop.f32.mrb[0].mxu0
    %1430 = vmatprep.mubr.f32.mxu0 0.0
    %1431 = vmatmul.mubr.f32.gmra.mrb[0].mxu0 %v1339
    %v1432 = vpop.f32.mrb[0].mxu0
    %v1433 = vadd.f32 0.0, %v1432
    %v1434 = vpop.f32.mrb[0].mxu0
    %1435 = vmatprep.mubr.f32.mxu0 0.0
    %1436 = vmatmul.mubr.f32.gmra.mrb[0].mxu0 %v1342
    %v1437 = vpop.f32.mrb[0].mxu0
    %v1438 = vadd.f32 0.0, %v1437
    %v1439 = vpop.f32.mrb[0].mxu0
    %1440 = vmatprep.mubr.f32.mxu0 0.0
    %1441 = vmatmul.mubr.f32.gmra.mrb[0].mxu0 %v1345
    %v1442 = vpop.f32.mrb[0].mxu0
    %v1443 = vadd.f32 0.0, %v1442
    %v1444 = vpop.f32.mrb[0].mxu0
    %1445 = vmatprep.mubr.f32.mxu0 0.0
    %1446 = vmatmul.mubr.f32.gmra.mrb[0].mxu0 %v1348
    %v1447 = vpop.f32.mrb[0].mxu0
    %v1448 = vadd.f32 0.0, %v1447
    %v1449 = vpop.f32.mrb[0].mxu0
    %1450 = vmatprep.mubr.f32.mxu0 0.0
    %1451 = vmatmul.mubr.f32.gmra.mrb[0].mxu0 %v1351
    %v1452 = vpop.f32.mrb[0].mxu0
    %v1453 = vadd.f32 0.0, %v1452
    %v1454 = vpop.f32.mrb[0].mxu0
    %1455 = vmatprep.mubr.f32.mxu0 0.0
    %1456 = vmatmul.mubr.f32.gmra.mrb[0].mxu0 %v1354
    %v1457 = vpop.f32.mrb[0].mxu0
    %v1458 = vadd.f32 0.0, %v1457
    %v1459 = vpop.f32.mrb[0].mxu0
    %1460 = vdwg.mxu0
    %v1461 = vmul.f32 %v316, %v187
    %v1462 = vmul.f32 %v321, %v188
    %v1463 = vmul.f32 %v396, %v189
    %v1464 = vmul.f32 %v401, %v190
    %v1465 = vmul.f32 %v476, %v191
    %v1466 = vmul.f32 %v481, %v192
    %v1467 = vmul.f32 %v556, %v193
    %v1468 = vmul.f32 %v561, %v194
    %v1469 = vmul.f32 %v1294, %v195
    %v1470 = vmul.f32 %v1299, %v196
    %v1471 = vmul.f32 %v1304, %v197
    %v1472 = vmul.f32 %v1309, %v198
    %v1473 = vmul.f32 %v1314, %v199
    %v1474 = vmul.f32 %v1319, %v200
    %v1475 = vmul.f32 %v1324, %v201
    %v1476 = vmul.f32 %v1329, %v202
    %v1477 = vadd.f32 %v1461, %v1469
    %v1478 = vadd.f32 %v1462, %v1470
    %v1479 = vadd.f32 %v1463, %v1471
    %v1480 = vadd.f32 %v1464, %v1472
    %v1481 = vadd.f32 %v1465, %v1473
    %v1482 = vadd.f32 %v1466, %v1474
    %v1483 = vadd.f32 %v1467, %v1475
    %v1484 = vadd.f32 %v1468, %v1476
    %v1485 = vmul.f32 %v635, %v187
    %v1486 = vmul.f32 %v640, %v188
    %v1487 = vmul.f32 %v715, %v189
    %v1488 = vmul.f32 %v720, %v190
    %v1489 = vmul.f32 %v795, %v191
    %v1490 = vmul.f32 %v800, %v192
    %v1491 = vmul.f32 %v875, %v193
    %v1492 = vmul.f32 %v880, %v194
    %v1493 = vmul.f32 %v1423, %v195
    %v1494 = vmul.f32 %v1428, %v196
    %v1495 = vmul.f32 %v1433, %v197
    %v1496 = vmul.f32 %v1438, %v198
    %v1497 = vmul.f32 %v1443, %v199
    %v1498 = vmul.f32 %v1448, %v200
    %v1499 = vmul.f32 %v1453, %v201
    %v1500 = vmul.f32 %v1458, %v202
    %v1501 = vadd.f32 %v1485, %v1493
    %v1502 = vadd.f32 %v1486, %v1494
    %v1503 = vadd.f32 %v1487, %v1495
    %v1504 = vadd.f32 %v1488, %v1496
    %v1505 = vadd.f32 %v1489, %v1497
    %v1506 = vadd.f32 %v1490, %v1498
    %v1507 = vadd.f32 %v1491, %v1499
    %v1508 = vadd.f32 %v1492, %v1500
    %v1510 = vsel %vm1202, %v1477, 0
    %v1513 = vsel %vm1202, %v1478, 0
    %v1516 = vsel %vm1202, %v1479, 0
    %v1519 = vsel %vm1202, %v1480, 0
    %v1522 = vsel %vm1202, %v1481, 0
    %v1525 = vsel %vm1202, %v1482, 0
    %v1528 = vsel %vm1202, %v1483, 0
    %v1531 = vsel %vm1202, %v1484, 0
    %v1534 = vsel %vm1202, %v1501, 0
    %v1537 = vsel %vm1202, %v1502, 0
    %v1540 = vsel %vm1202, %v1503, 0
    %v1543 = vsel %vm1202, %v1504, 0
    %v1546 = vsel %vm1202, %v1505, 0
    %v1549 = vsel %vm1202, %v1506, 0
    %v1552 = vsel %vm1202, %v1507, 0
    %v1555 = vsel %vm1202, %v1508, 0
    %1557 = vmatprep.subr.mxu0 0.0
    %1558 = vmatpush1.xpose.msra.mxu0 %v1534
    %1559 = vmatprep.subr.mxu0 0.0
    %1560 = vmatpush1.xpose.msra.mxu0 %v1537
    %1561 = vmatprep.subr.mxu0 0.0
    %1562 = vmatpush1.xpose.msra.mxu0 %v1540
    %1563 = vmatprep.subr.mxu0 0.0
    %1564 = vmatpush1.xpose.msra.mxu0 %v1543
    %1565 = vmatprep.subr.mxu0 0.0
    %1566 = vmatpush1.xpose.msra.mxu0 %v1546
    %1567 = vmatprep.subr.mxu0 0.0
    %1568 = vmatpush1.xpose.msra.mxu0 %v1549
    %1569 = vmatprep.subr.mxu0 0.0
    %1570 = vmatpush1.xpose.msra.mxu0 %v1552
    %1571 = vmatprep.subr.mxu0 0.0
    %1572 = vmatpush1.xpose.msra.mxu0 %v1555
    %1573 = vmatprep.subr.mxu0 0.0
    %1574 = vmatpush1.xpose.msra.mxu0 0.0
    %1575 = vmatprep.subr.mxu0 0.0
    %1576 = vmatpush1.xpose.msra.mxu0 0.0
    %1577 = vmatprep.subr.mxu0 0.0
    %1578 = vmatpush1.xpose.msra.mxu0 0.0
    %1579 = vmatprep.subr.mxu0 0.0
    %1580 = vmatpush1.xpose.msra.mxu0 0.0
    %1581 = vmatprep.subr.mxu0 0.0
    %1582 = vmatpush1.xpose.msra.mxu0 0.0
    %1583 = vmatprep.subr.mxu0 0.0
    %1584 = vmatpush1.xpose.msra.mxu0 0.0
    %1585 = vmatprep.subr.mxu0 0.0
    %1586 = vmatpush1.xpose.msra.mxu0 0.0
    %1587 = vmatprep.subr.mxu0 0.0
    %1588 = vmatpush1.xpose.msra.mxu0 0.0
    %1589 = vmatprep.subr.mxu0 0.0
    %1590 = vmatpush1.xpose.msra.mxu0 0.0
    %1591 = vmatprep.subr.mxu0 0.0
    %1592 = vmatpush1.xpose.msra.mxu0 0.0
    %1593 = vmatprep.subr.mxu0 0.0
    %1594 = vmatpush1.xpose.msra.mxu0 0.0
    %1595 = vmatprep.subr.mxu0 0.0
    %1596 = vmatpush1.xpose.msra.mxu0 0.0
    %1597 = vmatprep.subr.mxu0 0.0
    %1598 = vmatpush1.xpose.msra.mxu0 0.0
    %1599 = vmatprep.subr.mxu0 0.0
    %1600 = vmatpush1.xpose.msra.mxu0 0.0
    %1601 = vmatprep.subr.mxu0 0.0
    %1602 = vmatpush1.xpose.msra.mxu0 0.0
    %1603 = vmatprep.subr.mxu0 0.0
    %1604 = vmatpush1.xpose.msra.mxu0 0.0
    %1605 = vmatprep.subr.mxu0 0.0
    %1606 = vmatpush1.xpose.msra.mxu0 0.0
    %1607 = vmatprep.subr.mxu0 0.0
    %1608 = vmatpush1.xpose.msra.mxu0 0.0
    %1609 = vmatprep.subr.mxu0 0.0
    %1610 = vmatpush1.xpose.msra.mxu0 0.0
    %1611 = vmatprep.subr.mxu0 0.0
    %1612 = vmatpush1.xpose.msra.mxu0 0.0
    %1613 = vmatprep.subr.mxu0 0.0
    %1614 = vmatpush1.xpose.msra.mxu0 0.0
    %1615 = vmatprep.subr.mxu0 0.0
    %1616 = vmatpush1.xpose.msra.mxu0 0.0
    %1617 = vmatprep.subr.mxu0 0.0
    %1618 = vmatpush1.xpose.msra.mxu0 0.0
    %1619 = vmatprep.subr.mxu0 0.0
    %1620 = vmatpush1.xpose.msra.mxu0 0.0
    %1621 = vmatprep.mubr.f32.mxu0 0.0
    %1622 = vmatmul.mubr.f32.gmra.mrb[0].mxu0 %v1510
    %v1623 = vpop.f32.mrb[0].mxu0
    %v1624 = vadd.f32 %v203, %v1623
    %v1625 = vpop.f32.mrb[0].mxu0
    %1626 = vmatprep.mubr.f32.mxu0 0.0
    %1627 = vmatmul.mubr.f32.gmra.mrb[0].mxu0 %v1513
    %v1628 = vpop.f32.mrb[0].mxu0
    %v1629 = vadd.f32 %v204, %v1628
    %v1630 = vpop.f32.mrb[0].mxu0
    %1631 = vmatprep.mubr.f32.mxu0 0.0
    %1632 = vmatmul.mubr.f32.gmra.mrb[0].mxu0 %v1516
    %v1633 = vpop.f32.mrb[0].mxu0
    %v1634 = vadd.f32 %v205, %v1633
    %v1635 = vpop.f32.mrb[0].mxu0
    %1636 = vmatprep.mubr.f32.mxu0 0.0
    %1637 = vmatmul.mubr.f32.gmra.mrb[0].mxu0 %v1519
    %v1638 = vpop.f32.mrb[0].mxu0
    %v1639 = vadd.f32 %v206, %v1638
    %v1640 = vpop.f32.mrb[0].mxu0
    %1641 = vmatprep.mubr.f32.mxu0 0.0
    %1642 = vmatmul.mubr.f32.gmra.mrb[0].mxu0 %v1522
    %v1643 = vpop.f32.mrb[0].mxu0
    %v1644 = vadd.f32 %v207, %v1643
    %v1645 = vpop.f32.mrb[0].mxu0
    %1646 = vmatprep.mubr.f32.mxu0 0.0
    %1647 = vmatmul.mubr.f32.gmra.mrb[0].mxu0 %v1525
    %v1648 = vpop.f32.mrb[0].mxu0
    %v1649 = vadd.f32 %v208, %v1648
    %v1650 = vpop.f32.mrb[0].mxu0
    %1651 = vmatprep.mubr.f32.mxu0 0.0
    %1652 = vmatmul.mubr.f32.gmra.mrb[0].mxu0 %v1528
    %v1653 = vpop.f32.mrb[0].mxu0
    %v1654 = vadd.f32 %v209, %v1653
    %v1655 = vpop.f32.mrb[0].mxu0
    %1656 = vmatprep.mubr.f32.mxu0 0.0
    %1657 = vmatmul.mubr.f32.gmra.mrb[0].mxu0 %v1531
    %v1658 = vpop.f32.mrb[0].mxu0
    %v1659 = vadd.f32 %v210, %v1658
    %v1660 = vpop.f32.mrb[0].mxu0
    %1661 = vdwg.mxu0
    %vm1662 = vcmask 523264
    %v1663 = vsel %vm1662, %v1624, -inf
    %1664 = vmax.xlane.f32.xlu0 %v1663
    %v1665 = vpop.xlane.xlu0 %1664
    %v1666 = vsel %vm1662, %v1629, -inf
    %1667 = vmax.xlane.f32.xlu0 %v1666
    %v1668 = vpop.xlane.xlu0 %1667
    %v1669 = vsel %vm1662, %v1634, -inf
    %1670 = vmax.xlane.f32.xlu0 %v1669
    %v1671 = vpop.xlane.xlu0 %1670
    %v1672 = vsel %vm1662, %v1639, -inf
    %1673 = vmax.xlane.f32.xlu0 %v1672
    %v1674 = vpop.xlane.xlu0 %1673
    %v1675 = vsel %vm1662, %v1644, -inf
    %1676 = vmax.xlane.f32.xlu0 %v1675
    %v1677 = vpop.xlane.xlu0 %1676
    %v1678 = vsel %vm1662, %v1649, -inf
    %1679 = vmax.xlane.f32.xlu0 %v1678
    %v1680 = vpop.xlane.xlu0 %1679
    %v1681 = vsel %vm1662, %v1654, -inf
    %1682 = vmax.xlane.f32.xlu0 %v1681
    %v1683 = vpop.xlane.xlu0 %1682
    %v1684 = vsel %vm1662, %v1659, -inf
    %1685 = vmax.xlane.f32.xlu0 %v1684
    %v1686 = vpop.xlane.xlu0 %1685
    %v1687 = vsub.f32 %v1624, %v1665
    %v1688 = vsub.f32 %v1629, %v1668
    %v1689 = vsub.f32 %v1634, %v1671
    %v1690 = vsub.f32 %v1639, %v1674
    %v1691 = vsub.f32 %v1644, %v1677
    %v1692 = vsub.f32 %v1649, %v1680
    %v1693 = vsub.f32 %v1654, %v1683
    %v1694 = vsub.f32 %v1659, %v1686
    %v1695 = vmul.f32 %v1687, 1.442695
    %v1696 = vpow.pop %v1695
    %v1697 = vmul.f32 %v1688, 1.442695
    %v1698 = vpow.pop %v1697
    %v1699 = vmul.f32 %v1689, 1.442695
    %v1700 = vpow.pop %v1699
    %v1701 = vmul.f32 %v1690, 1.442695
    %v1702 = vpow.pop %v1701
    %v1703 = vmul.f32 %v1691, 1.442695
    %v1704 = vpow.pop %v1703
    %v1705 = vmul.f32 %v1692, 1.442695
    %v1706 = vpow.pop %v1705
    %v1707 = vmul.f32 %v1693, 1.442695
    %v1708 = vpow.pop %v1707
    %v1709 = vmul.f32 %v1694, 1.442695
    %v1710 = vpow.pop %v1709
    %v1711 = vsel %vm1662, %v1696, 0.0
    %1712 = vadd.xlane.f32.xlu0 %v1711
    %v1713 = vpop.xlane.xlu0 %1712
    %v1714 = vsel %vm1662, %v1698, 0.0
    %1715 = vadd.xlane.f32.xlu0 %v1714
    %v1716 = vpop.xlane.xlu0 %1715
    %v1717 = vsel %vm1662, %v1700, 0.0
    %1718 = vadd.xlane.f32.xlu0 %v1717
    %v1719 = vpop.xlane.xlu0 %1718
    %v1720 = vsel %vm1662, %v1702, 0.0
    %1721 = vadd.xlane.f32.xlu0 %v1720
    %v1722 = vpop.xlane.xlu0 %1721
    %v1723 = vsel %vm1662, %v1704, 0.0
    %1724 = vadd.xlane.f32.xlu0 %v1723
    %v1725 = vpop.xlane.xlu0 %1724
    %v1726 = vsel %vm1662, %v1706, 0.0
    %1727 = vadd.xlane.f32.xlu0 %v1726
    %v1728 = vpop.xlane.xlu0 %1727
    %v1729 = vsel %vm1662, %v1708, 0.0
    %1730 = vadd.xlane.f32.xlu0 %v1729
    %v1731 = vpop.xlane.xlu0 %1730
    %v1732 = vsel %vm1662, %v1710, 0.0
    %1733 = vadd.xlane.f32.xlu0 %v1732
    %v1734 = vpop.xlane.xlu0 %1733
    %v1735 = vrcp.pop %v1713
    %v1736 = vmul.f32 %v1696, %v1735
    %v1737 = vrcp.pop %v1716
    %v1738 = vmul.f32 %v1698, %v1737
    %v1739 = vrcp.pop %v1719
    %v1740 = vmul.f32 %v1700, %v1739
    %v1741 = vrcp.pop %v1722
    %v1742 = vmul.f32 %v1702, %v1741
    %v1743 = vrcp.pop %v1725
    %v1744 = vmul.f32 %v1704, %v1743
    %v1745 = vrcp.pop %v1728
    %v1746 = vmul.f32 %v1706, %v1745
    %v1747 = vrcp.pop %v1731
    %v1748 = vmul.f32 %v1708, %v1747
    %v1749 = vrcp.pop %v1734
    %v1750 = vmul.f32 %v1710, %v1749
    %v1752 = vsel %vm1662, %v1736, 0
    %v1755 = vsel %vm1662, %v1738, 0
    %v1758 = vsel %vm1662, %v1740, 0
    %v1761 = vsel %vm1662, %v1742, 0
    %v1764 = vsel %vm1662, %v1744, 0
    %v1767 = vsel %vm1662, %v1746, 0
    %v1770 = vsel %vm1662, %v1748, 0
    %v1773 = vsel %vm1662, %v1750, 0
    %1775 = vmatprep.subr.mxu0 0.0
    %1776 = vmatpush1.msra.mxu0 %v954
    %1777 = vmatprep.subr.mxu0 0.0
    %1778 = vmatpush1.msra.mxu0 %v959
    %1779 = vmatprep.subr.mxu0 0.0
    %1780 = vmatpush1.msra.mxu0 %v1034
    %1781 = vmatprep.subr.mxu0 0.0
    %1782 = vmatpush1.msra.mxu0 %v1039
    %1783 = vmatprep.subr.mxu0 0.0
    %1784 = vmatpush1.msra.mxu0 %v1114
    %1785 = vmatprep.subr.mxu0 0.0
    %1786 = vmatpush1.msra.mxu0 %v1119
    %1787 = vmatprep.subr.mxu0 0.0
    %1788 = vmatpush1.msra.mxu0 %v1194
    %1789 = vmatprep.subr.mxu0 0.0
    %1790 = vmatpush1.msra.mxu0 %v1199
    %1791 = vmatprep.subr.mxu0 0.0
    %1792 = vmatpush1.msra.mxu0 0.0
    %1793 = vmatprep.subr.mxu0 0.0
    %1794 = vmatpush1.msra.mxu0 0.0
    %1795 = vmatprep.subr.mxu0 0.0
    %1796 = vmatpush1.msra.mxu0 0.0
    %1797 = vmatprep.subr.mxu0 0.0
    %1798 = vmatpush1.msra.mxu0 0.0
    %1799 = vmatprep.subr.mxu0 0.0
    %1800 = vmatpush1.msra.mxu0 0.0
    %1801 = vmatprep.subr.mxu0 0.0
    %1802 = vmatpush1.msra.mxu0 0.0
    %1803 = vmatprep.subr.mxu0 0.0
    %1804 = vmatpush1.msra.mxu0 0.0
    %1805 = vmatprep.subr.mxu0 0.0
    %1806 = vmatpush1.msra.mxu0 0.0
    %1807 = vmatprep.subr.mxu0 0.0
    %1808 = vmatpush1.msra.mxu0 0.0
    %1809 = vmatprep.subr.mxu0 0.0
    %1810 = vmatpush1.msra.mxu0 0.0
    %1811 = vmatprep.subr.mxu0 0.0
    %1812 = vmatpush1.msra.mxu0 0.0
    %1813 = vmatprep.subr.mxu0 0.0
    %1814 = vmatpush1.msra.mxu0 0.0
    %1815 = vmatprep.subr.mxu0 0.0
    %1816 = vmatpush1.msra.mxu0 0.0
    %1817 = vmatprep.subr.mxu0 0.0
    %1818 = vmatpush1.msra.mxu0 0.0
    %1819 = vmatprep.subr.mxu0 0.0
    %1820 = vmatpush1.msra.mxu0 0.0
    %1821 = vmatprep.subr.mxu0 0.0
    %1822 = vmatpush1.msra.mxu0 0.0
    %1823 = vmatprep.subr.mxu0 0.0
    %1824 = vmatpush1.msra.mxu0 0.0
    %1825 = vmatprep.subr.mxu0 0.0
    %1826 = vmatpush1.msra.mxu0 0.0
    %1827 = vmatprep.subr.mxu0 0.0
    %1828 = vmatpush1.msra.mxu0 0.0
    %1829 = vmatprep.subr.mxu0 0.0
    %1830 = vmatpush1.msra.mxu0 0.0
    %1831 = vmatprep.subr.mxu0 0.0
    %1832 = vmatpush1.msra.mxu0 0.0
    %1833 = vmatprep.subr.mxu0 0.0
    %1834 = vmatpush1.msra.mxu0 0.0
    %1835 = vmatprep.subr.mxu0 0.0
    %1836 = vmatpush1.msra.mxu0 0.0
    %1837 = vmatprep.subr.mxu0 0.0
    %1838 = vmatpush1.msra.mxu0 0.0
    %1839 = vmatprep.mubr.f32.mxu0 0.0
    %1840 = vmatmul.mubr.f32.gmra.mrb[0].mxu0 %v1752
    %v1841 = vpop.f32.mrb[0].mxu0
    %v1842 = vadd.f32 0.0, %v1841
    %v1843 = vpop.f32.mrb[0].mxu0
    %1844 = vmatprep.mubr.f32.mxu0 0.0
    %1845 = vmatmul.mubr.f32.gmra.mrb[0].mxu0 %v1755
    %v1846 = vpop.f32.mrb[0].mxu0
    %v1847 = vadd.f32 0.0, %v1846
    %v1848 = vpop.f32.mrb[0].mxu0
    %1849 = vmatprep.mubr.f32.mxu0 0.0
    %1850 = vmatmul.mubr.f32.gmra.mrb[0].mxu0 %v1758
    %v1851 = vpop.f32.mrb[0].mxu0
    %v1852 = vadd.f32 0.0, %v1851
    %v1853 = vpop.f32.mrb[0].mxu0
    %1854 = vmatprep.mubr.f32.mxu0 0.0
    %1855 = vmatmul.mubr.f32.gmra.mrb[0].mxu0 %v1761
    %v1856 = vpop.f32.mrb[0].mxu0
    %v1857 = vadd.f32 0.0, %v1856
    %v1858 = vpop.f32.mrb[0].mxu0
    %1859 = vmatprep.mubr.f32.mxu0 0.0
    %1860 = vmatmul.mubr.f32.gmra.mrb[0].mxu0 %v1764
    %v1861 = vpop.f32.mrb[0].mxu0
    %v1862 = vadd.f32 0.0, %v1861
    %v1863 = vpop.f32.mrb[0].mxu0
    %1864 = vmatprep.mubr.f32.mxu0 0.0
    %1865 = vmatmul.mubr.f32.gmra.mrb[0].mxu0 %v1767
    %v1866 = vpop.f32.mrb[0].mxu0
    %v1867 = vadd.f32 0.0, %v1866
    %v1868 = vpop.f32.mrb[0].mxu0
    %1869 = vmatprep.mubr.f32.mxu0 0.0
    %1870 = vmatmul.mubr.f32.gmra.mrb[0].mxu0 %v1770
    %v1871 = vpop.f32.mrb[0].mxu0
    %v1872 = vadd.f32 0.0, %v1871
    %v1873 = vpop.f32.mrb[0].mxu0
    %1874 = vmatprep.mubr.f32.mxu0 0.0
    %1875 = vmatmul.mubr.f32.gmra.mrb[0].mxu0 %v1773
    %v1876 = vpop.f32.mrb[0].mxu0
    %v1877 = vadd.f32 0.0, %v1876
    %v1878 = vpop.f32.mrb[0].mxu0
    %1879 = vdwg.mxu0
    %v1880 = vld [vmem:[%s5] sm:$0xff]
    %s1881 = scalar_lea.vmem %s5, 8
    %v1882 = vld [vmem:[%s1881] sm:$0xff]
    %v1884 = vsel %vm1202, %v1852, 0
    %v1887 = vsel %vm1202, %v1857, 0
    %1889 = vmatprep.subr.mxu0 0.0
    %1890 = vmatpush1.msra.mxu0 %v1882
    %1891 = vmatprep.subr.mxu0 0.0
    %1892 = vmatpush1.msra.mxu0 0.0
    %1893 = vmatprep.subr.mxu0 0.0
    %1894 = vmatpush1.msra.mxu0 0.0
    %1895 = vmatprep.subr.mxu0 0.0
    %1896 = vmatpush1.msra.mxu0 0.0
    %1897 = vmatprep.subr.mxu0 0.0
    %1898 = vmatpush1.msra.mxu0 0.0
    %1899 = vmatprep.subr.mxu0 0.0
    %1900 = vmatpush1.msra.mxu0 0.0
    %1901 = vmatprep.subr.mxu0 0.0
    %1902 = vmatpush1.msra.mxu0 0.0
    %1903 = vmatprep.subr.mxu0 0.0
    %1904 = vmatpush1.msra.mxu0 0.0
    %1905 = vmatprep.subr.mxu0 0.0
    %1906 = vmatpush1.msra.mxu0 0.0
    %1907 = vmatprep.subr.mxu0 0.0
    %1908 = vmatpush1.msra.mxu0 0.0
    %1909 = vmatprep.subr.mxu0 0.0
    %1910 = vmatpush1.msra.mxu0 0.0
    %1911 = vmatprep.subr.mxu0 0.0
    %1912 = vmatpush1.msra.mxu0 0.0
    %1913 = vmatprep.subr.mxu0 0.0
    %1914 = vmatpush1.msra.mxu0 0.0
    %1915 = vmatprep.subr.mxu0 0.0
    %1916 = vmatpush1.msra.mxu0 0.0
    %1917 = vmatprep.subr.mxu0 0.0
    %1918 = vmatpush1.msra.mxu0 0.0
    %1919 = vmatprep.subr.mxu0 0.0
    %1920 = vmatpush1.msra.mxu0 0.0
    %1921 = vmatprep.subr.mxu0 0.0
    %1922 = vmatpush1.msra.mxu0 0.0
    %1923 = vmatprep.subr.mxu0 0.0
    %1924 = vmatpush1.msra.mxu0 0.0
    %1925 = vmatprep.subr.mxu0 0.0
    %1926 = vmatpush1.msra.mxu0 0.0
    %1927 = vmatprep.subr.mxu0 0.0
    %1928 = vmatpush1.msra.mxu0 0.0
    %1929 = vmatprep.subr.mxu0 0.0
    %1930 = vmatpush1.msra.mxu0 0.0
    %1931 = vmatprep.subr.mxu0 0.0
    %1932 = vmatpush1.msra.mxu0 0.0
    %1933 = vmatprep.subr.mxu0 0.0
    %1934 = vmatpush1.msra.mxu0 0.0
    %1935 = vmatprep.subr.mxu0 0.0
    %1936 = vmatpush1.msra.mxu0 0.0
    %1937 = vmatprep.subr.mxu0 0.0
    %1938 = vmatpush1.msra.mxu0 0.0
    %1939 = vmatprep.subr.mxu0 0.0
    %1940 = vmatpush1.msra.mxu0 0.0
    %1941 = vmatprep.subr.mxu0 0.0
    %1942 = vmatpush1.msra.mxu0 0.0
    %1943 = vmatprep.subr.mxu0 0.0
    %1944 = vmatpush1.msra.mxu0 0.0
    %1945 = vmatprep.subr.mxu0 0.0
    %1946 = vmatpush1.msra.mxu0 0.0
    %1947 = vmatprep.subr.mxu0 0.0
    %1948 = vmatpush1.msra.mxu0 0.0
    %1949 = vmatprep.subr.mxu0 0.0
    %1950 = vmatpush1.msra.mxu0 0.0
    %1951 = vmatprep.subr.mxu0 0.0
    %1952 = vmatpush1.msra.mxu0 0.0
    %1953 = vmatprep.mubr.f32.mxu0 0.0
    %1954 = vmatmul.mubr.f32.gmra.mrb[0].mxu0 %v1884
    %v1955 = vpop.f32.mrb[0].mxu0
    %v1956 = vadd.f32 0.0, %v1955
    %v1957 = vpop.f32.mrb[0].mxu0
    %1958 = vmatprep.mubr.f32.mxu0 0.0
    %1959 = vmatmul.mubr.f32.gmra.mrb[0].mxu0 %v1887
    %v1960 = vpop.f32.mrb[0].mxu0
    %v1961 = vadd.f32 0.0, %v1960
    %v1962 = vpop.f32.mrb[0].mxu0
    %1963 = vdwg.mxu0
    %v1965 = vsel %vm1202, %v1842, 0
    %v1968 = vsel %vm1202, %v1847, 0
    %1970 = vmatprep.subr.mxu0 0.0
    %1971 = vmatpush1.msra.mxu0 %v1880
    %1972 = vmatprep.subr.mxu0 0.0
    %1973 = vmatpush1.msra.mxu0 0.0
    %1974 = vmatprep.subr.mxu0 0.0
    %1975 = vmatpush1.msra.mxu0 0.0
    %1976 = vmatprep.subr.mxu0 0.0
    %1977 = vmatpush1.msra.mxu0 0.0
    %1978 = vmatprep.subr.mxu0 0.0
    %1979 = vmatpush1.msra.mxu0 0.0
    %1980 = vmatprep.subr.mxu0 0.0
    %1981 = vmatpush1.msra.mxu0 0.0
    %1982 = vmatprep.subr.mxu0 0.0
    %1983 = vmatpush1.msra.mxu0 0.0
    %1984 = vmatprep.subr.mxu0 0.0
    %1985 = vmatpush1.msra.mxu0 0.0
    %1986 = vmatprep.subr.mxu0 0.0
    %1987 = vmatpush1.msra.mxu0 0.0
    %1988 = vmatprep.subr.mxu0 0.0
    %1989 = vmatpush1.msra.mxu0 0.0
    %1990 = vmatprep.subr.mxu0 0.0
    %1991 = vmatpush1.msra.mxu0 0.0
    %1992 = vmatprep.subr.mxu0 0.0
    %1993 = vmatpush1.msra.mxu0 0.0
    %1994 = vmatprep.subr.mxu0 0.0
    %1995 = vmatpush1.msra.mxu0 0.0
    %1996 = vmatprep.subr.mxu0 0.0
    %1997 = vmatpush1.msra.mxu0 0.0
    %1998 = vmatprep.subr.mxu0 0.0
    %1999 = vmatpush1.msra.mxu0 0.0
    %2000 = vmatprep.subr.mxu0 0.0
    %2001 = vmatpush1.msra.mxu0 0.0
    %2002 = vmatprep.subr.mxu0 0.0
    %2003 = vmatpush1.msra.mxu0 0.0
    %2004 = vmatprep.subr.mxu0 0.0
    %2005 = vmatpush1.msra.mxu0 0.0
    %2006 = vmatprep.subr.mxu0 0.0
    %2007 = vmatpush1.msra.mxu0 0.0
    %2008 = vmatprep.subr.mxu0 0.0
    %2009 = vmatpush1.msra.mxu0 0.0
    %2010 = vmatprep.subr.mxu0 0.0
    %2011 = vmatpush1.msra.mxu0 0.0
    %2012 = vmatprep.subr.mxu0 0.0
    %2013 = vmatpush1.msra.mxu0 0.0
    %2014 = vmatprep.subr.mxu0 0.0
    %2015 = vmatpush1.msra.mxu0 0.0
    %2016 = vmatprep.subr.mxu0 0.0
    %2017 = vmatpush1.msra.mxu0 0.0
    %2018 = vmatprep.subr.mxu0 0.0
    %2019 = vmatpush1.msra.mxu0 0.0
    %2020 = vmatprep.subr.mxu0 0.0
    %2021 = vmatpush1.msra.mxu0 0.0
    %2022 = vmatprep.subr.mxu0 0.0
    %2023 = vmatpush1.msra.mxu0 0.0
    %2024 = vmatprep.subr.mxu0 0.0
    %2025 = vmatpush1.msra.mxu0 0.0
    %2026 = vmatprep.subr.mxu0 0.0
    %2027 = vmatpush1.msra.mxu0 0.0
    %2028 = vmatprep.subr.mxu0 0.0
    %2029 = vmatpush1.msra.mxu0 0.0
    %2030 = vmatprep.subr.mxu0 0.0
    %2031 = vmatpush1.msra.mxu0 0.0
    %2032 = vmatprep.subr.mxu0 0.0
    %2033 = vmatpush1.msra.mxu0 0.0
    %2034 = vmatprep.mubr.f32.mxu0 0.0
    %2035 = vmatmul.mubr.f32.gmra.mrb[0].mxu0 %v1965
    %v2036 = vpop.f32.mrb[0].mxu0
    %v2037 = vadd.f32 %v1956, %v2036
    %v2038 = vpop.f32.mrb[0].mxu0
    %2039 = vmatprep.mubr.f32.mxu0 0.0
    %2040 = vmatmul.mubr.f32.gmra.mrb[0].mxu0 %v1968
    %v2041 = vpop.f32.mrb[0].mxu0
    %v2042 = vadd.f32 %v1961, %v2041
    %v2043 = vpop.f32.mrb[0].mxu0
    %2044 = vdwg.mxu0
    %s2045 = scalar_lea.vmem %s5, 16
    %v2046 = vld [vmem:[%s2045] sm:$0xff]
    %v2048 = vsel %vm1202, %v1862, 0
    %v2051 = vsel %vm1202, %v1867, 0
    %2053 = vmatprep.subr.mxu0 0.0
    %2054 = vmatpush1.msra.mxu0 %v2046
    %2055 = vmatprep.subr.mxu0 0.0
    %2056 = vmatpush1.msra.mxu0 0.0
    %2057 = vmatprep.subr.mxu0 0.0
    %2058 = vmatpush1.msra.mxu0 0.0
    %2059 = vmatprep.subr.mxu0 0.0
    %2060 = vmatpush1.msra.mxu0 0.0
    %2061 = vmatprep.subr.mxu0 0.0
    %2062 = vmatpush1.msra.mxu0 0.0
    %2063 = vmatprep.subr.mxu0 0.0
    %2064 = vmatpush1.msra.mxu0 0.0
    %2065 = vmatprep.subr.mxu0 0.0
    %2066 = vmatpush1.msra.mxu0 0.0
    %2067 = vmatprep.subr.mxu0 0.0
    %2068 = vmatpush1.msra.mxu0 0.0
    %2069 = vmatprep.subr.mxu0 0.0
    %2070 = vmatpush1.msra.mxu0 0.0
    %2071 = vmatprep.subr.mxu0 0.0
    %2072 = vmatpush1.msra.mxu0 0.0
    %2073 = vmatprep.subr.mxu0 0.0
    %2074 = vmatpush1.msra.mxu0 0.0
    %2075 = vmatprep.subr.mxu0 0.0
    %2076 = vmatpush1.msra.mxu0 0.0
    %2077 = vmatprep.subr.mxu0 0.0
    %2078 = vmatpush1.msra.mxu0 0.0
    %2079 = vmatprep.subr.mxu0 0.0
    %2080 = vmatpush1.msra.mxu0 0.0
    %2081 = vmatprep.subr.mxu0 0.0
    %2082 = vmatpush1.msra.mxu0 0.0
    %2083 = vmatprep.subr.mxu0 0.0
    %2084 = vmatpush1.msra.mxu0 0.0
    %2085 = vmatprep.subr.mxu0 0.0
    %2086 = vmatpush1.msra.mxu0 0.0
    %2087 = vmatprep.subr.mxu0 0.0
    %2088 = vmatpush1.msra.mxu0 0.0
    %2089 = vmatprep.subr.mxu0 0.0
    %2090 = vmatpush1.msra.mxu0 0.0
    %2091 = vmatprep.subr.mxu0 0.0
    %2092 = vmatpush1.msra.mxu0 0.0
    %2093 = vmatprep.subr.mxu0 0.0
    %2094 = vmatpush1.msra.mxu0 0.0
    %2095 = vmatprep.subr.mxu0 0.0
    %2096 = vmatpush1.msra.mxu0 0.0
    %2097 = vmatprep.subr.mxu0 0.0
    %2098 = vmatpush1.msra.mxu0 0.0
    %2099 = vmatprep.subr.mxu0 0.0
    %2100 = vmatpush1.msra.mxu0 0.0
    %2101 = vmatprep.subr.mxu0 0.0
    %2102 = vmatpush1.msra.mxu0 0.0
    %2103 = vmatprep.subr.mxu0 0.0
    %2104 = vmatpush1.msra.mxu0 0.0
    %2105 = vmatprep.subr.mxu0 0.0
    %2106 = vmatpush1.msra.mxu0 0.0
    %2107 = vmatprep.subr.mxu0 0.0
    %2108 = vmatpush1.msra.mxu0 0.0
    %2109 = vmatprep.subr.mxu0 0.0
    %2110 = vmatpush1.msra.mxu0 0.0
    %2111 = vmatprep.subr.mxu0 0.0
    %2112 = vmatpush1.msra.mxu0 0.0
    %2113 = vmatprep.subr.mxu0 0.0
    %2114 = vmatpush1.msra.mxu0 0.0
    %2115 = vmatprep.subr.mxu0 0.0
    %2116 = vmatpush1.msra.mxu0 0.0
    %2117 = vmatprep.mubr.f32.mxu0 0.0
    %2118 = vmatmul.mubr.f32.gmra.mrb[0].mxu0 %v2048
    %v2119 = vpop.f32.mrb[0].mxu0
    %v2120 = vadd.f32 0.0, %v2119
    %v2121 = vpop.f32.mrb[0].mxu0
    %2122 = vmatprep.mubr.f32.mxu0 0.0
    %2123 = vmatmul.mubr.f32.gmra.mrb[0].mxu0 %v2051
    %v2124 = vpop.f32.mrb[0].mxu0
    %v2125 = vadd.f32 0.0, %v2124
    %v2126 = vpop.f32.mrb[0].mxu0
    %2127 = vdwg.mxu0
    %v2128 = vadd.f32 %v2037, %v2120
    %v2129 = vadd.f32 %v2042, %v2125
    %s2130 = scalar_lea.vmem %s5, 24
    %v2131 = vld [vmem:[%s2130] sm:$0xff]
    %v2133 = vsel %vm1202, %v1872, 0
    %v2136 = vsel %vm1202, %v1877, 0
    %2138 = vmatprep.subr.mxu0 0.0
    %2139 = vmatpush1.msra.mxu0 %v2131
    %2140 = vmatprep.subr.mxu0 0.0
    %2141 = vmatpush1.msra.mxu0 0.0
    %2142 = vmatprep.subr.mxu0 0.0
    %2143 = vmatpush1.msra.mxu0 0.0
    %2144 = vmatprep.subr.mxu0 0.0
    %2145 = vmatpush1.msra.mxu0 0.0
    %2146 = vmatprep.subr.mxu0 0.0
    %2147 = vmatpush1.msra.mxu0 0.0
    %2148 = vmatprep.subr.mxu0 0.0
    %2149 = vmatpush1.msra.mxu0 0.0
    %2150 = vmatprep.subr.mxu0 0.0
    %2151 = vmatpush1.msra.mxu0 0.0
    %2152 = vmatprep.subr.mxu0 0.0
    %2153 = vmatpush1.msra.mxu0 0.0
    %2154 = vmatprep.subr.mxu0 0.0
    %2155 = vmatpush1.msra.mxu0 0.0
    %2156 = vmatprep.subr.mxu0 0.0
    %2157 = vmatpush1.msra.mxu0 0.0
    %2158 = vmatprep.subr.mxu0 0.0
    %2159 = vmatpush1.msra.mxu0 0.0
    %2160 = vmatprep.subr.mxu0 0.0
    %2161 = vmatpush1.msra.mxu0 0.0
    %2162 = vmatprep.subr.mxu0 0.0
    %2163 = vmatpush1.msra.mxu0 0.0
    %2164 = vmatprep.subr.mxu0 0.0
    %2165 = vmatpush1.msra.mxu0 0.0
    %2166 = vmatprep.subr.mxu0 0.0
    %2167 = vmatpush1.msra.mxu0 0.0
    %2168 = vmatprep.subr.mxu0 0.0
    %2169 = vmatpush1.msra.mxu0 0.0
    %2170 = vmatprep.subr.mxu0 0.0
    %2171 = vmatpush1.msra.mxu0 0.0
    %2172 = vmatprep.subr.mxu0 0.0
    %2173 = vmatpush1.msra.mxu0 0.0
    %2174 = vmatprep.subr.mxu0 0.0
    %2175 = vmatpush1.msra.mxu0 0.0
    %2176 = vmatprep.subr.mxu0 0.0
    %2177 = vmatpush1.msra.mxu0 0.0
    %2178 = vmatprep.subr.mxu0 0.0
    %2179 = vmatpush1.msra.mxu0 0.0
    %2180 = vmatprep.subr.mxu0 0.0
    %2181 = vmatpush1.msra.mxu0 0.0
    %2182 = vmatprep.subr.mxu0 0.0
    %2183 = vmatpush1.msra.mxu0 0.0
    %2184 = vmatprep.subr.mxu0 0.0
    %2185 = vmatpush1.msra.mxu0 0.0
    %2186 = vmatprep.subr.mxu0 0.0
    %2187 = vmatpush1.msra.mxu0 0.0
    %2188 = vmatprep.subr.mxu0 0.0
    %2189 = vmatpush1.msra.mxu0 0.0
    %2190 = vmatprep.subr.mxu0 0.0
    %2191 = vmatpush1.msra.mxu0 0.0
    %2192 = vmatprep.subr.mxu0 0.0
    %2193 = vmatpush1.msra.mxu0 0.0
    %2194 = vmatprep.subr.mxu0 0.0
    %2195 = vmatpush1.msra.mxu0 0.0
    %2196 = vmatprep.subr.mxu0 0.0
    %2197 = vmatpush1.msra.mxu0 0.0
    %2198 = vmatprep.subr.mxu0 0.0
    %2199 = vmatpush1.msra.mxu0 0.0
    %2200 = vmatprep.subr.mxu0 0.0
    %2201 = vmatpush1.msra.mxu0 0.0
    %2202 = vmatprep.mubr.f32.mxu0 0.0
    %2203 = vmatmul.mubr.f32.gmra.mrb[0].mxu0 %v2133
    %v2204 = vpop.f32.mrb[0].mxu0
    %v2205 = vadd.f32 0.0, %v2204
    %v2206 = vpop.f32.mrb[0].mxu0
    %2207 = vmatprep.mubr.f32.mxu0 0.0
    %2208 = vmatmul.mubr.f32.gmra.mrb[0].mxu0 %v2136
    %v2209 = vpop.f32.mrb[0].mxu0
    %v2210 = vadd.f32 0.0, %v2209
    %v2211 = vpop.f32.mrb[0].mxu0
    %2212 = vdwg.mxu0
    %v2213 = vadd.f32 %v2128, %v2205
    %v2214 = vadd.f32 %v2129, %v2210
    %v2215 = vadd.f32 %v179, %v2213
    %v2216 = vadd.f32 %v184, %v2214
    %v2217 = vld [vmem:[%s7] sm:$0x1]
    %v2218 = vmul.f32 %v2215, %v2215
    %v2219 = vmul.f32 %v2216, %v2216
    %v2220 = vsel %vm215, %v2218, 0.0
    %2221 = vadd.xlane.f32.xlu0 %v2220
    %v2222 = vpop.xlane.xlu0 %2221
    %v2223 = vsel %vm215, %v2219, 0.0
    %2224 = vadd.xlane.f32.xlu0 %v2223
    %v2225 = vpop.xlane.xlu0 %2224
    %v2226 = vmul.f32 %v2222, %v222
    %v2227 = vmul.f32 %v2225, %v222
    %v2228 = vadd.f32 %v2226, 1e-05
    %v2229 = vadd.f32 %v2227, 1e-05
    %v2230 = vrsqrt.pop %v2228
    %v2231 = vrsqrt.pop %v2229
    %v2232 = vmul.f32 %v2215, %v2230
    %v2233 = vmul.f32 %v2216, %v2231
    %v2235 = vlaneseq
    %v2236 = vshrl.u32 %v2235, 7
    %v2237 = vsub.s32 0, %v2236
    %v2238 = vrot.slane %v2217, %v2237
    %v2240 = vmul.f32 %v2232, %v2238
    %v2241 = vmul.f32 %v2233, %v2238
    %v2242 = vld [vmem:[%s8] sm:$0xff]
    %v2243 = vld [vmem:[%s8 + $0x8] sm:$0xff]
    %v2244 = vld [vmem:[%s8 + $0x10] sm:$0xff]
    %v2245 = vld [vmem:[%s8 + $0x18] sm:$0xff]
    %v2247 = vsel %vm215, %v2240, 0
    %v2250 = vsel %vm215, %v2241, 0
    %2252 = vmatprep.subr.mxu0 0.0
    %2253 = vmatpush1.msra.mxu0 %v2242
    %2254 = vmatprep.subr.mxu0 0.0
    %2255 = vmatpush1.msra.mxu0 %v2243
    %2256 = vmatprep.subr.mxu0 0.0
    %2257 = vmatpush1.msra.mxu0 %v2244
    %2258 = vmatprep.subr.mxu0 0.0
    %2259 = vmatpush1.msra.mxu0 %v2245
    %2260 = vmatprep.subr.mxu0 0.0
    %2261 = vmatpush1.msra.mxu0 0.0
    %2262 = vmatprep.subr.mxu0 0.0
    %2263 = vmatpush1.msra.mxu0 0.0
    %2264 = vmatprep.subr.mxu0 0.0
    %2265 = vmatpush1.msra.mxu0 0.0
    %2266 = vmatprep.subr.mxu0 0.0
    %2267 = vmatpush1.msra.mxu0 0.0
    %2268 = vmatprep.subr.mxu0 0.0
    %2269 = vmatpush1.msra.mxu0 0.0
    %2270 = vmatprep.subr.mxu0 0.0
    %2271 = vmatpush1.msra.mxu0 0.0
    %2272 = vmatprep.subr.mxu0 0.0
    %2273 = vmatpush1.msra.mxu0 0.0
    %2274 = vmatprep.subr.mxu0 0.0
    %2275 = vmatpush1.msra.mxu0 0.0
    %2276 = vmatprep.subr.mxu0 0.0
    %2277 = vmatpush1.msra.mxu0 0.0
    %2278 = vmatprep.subr.mxu0 0.0
    %2279 = vmatpush1.msra.mxu0 0.0
    %2280 = vmatprep.subr.mxu0 0.0
    %2281 = vmatpush1.msra.mxu0 0.0
    %2282 = vmatprep.subr.mxu0 0.0
    %2283 = vmatpush1.msra.mxu0 0.0
    %2284 = vmatprep.subr.mxu0 0.0
    %2285 = vmatpush1.msra.mxu0 0.0
    %2286 = vmatprep.subr.mxu0 0.0
    %2287 = vmatpush1.msra.mxu0 0.0
    %2288 = vmatprep.subr.mxu0 0.0
    %2289 = vmatpush1.msra.mxu0 0.0
    %2290 = vmatprep.subr.mxu0 0.0
    %2291 = vmatpush1.msra.mxu0 0.0
    %2292 = vmatprep.subr.mxu0 0.0
    %2293 = vmatpush1.msra.mxu0 0.0
    %2294 = vmatprep.subr.mxu0 0.0
    %2295 = vmatpush1.msra.mxu0 0.0
    %2296 = vmatprep.subr.mxu0 0.0
    %2297 = vmatpush1.msra.mxu0 0.0
    %2298 = vmatprep.subr.mxu0 0.0
    %2299 = vmatpush1.msra.mxu0 0.0
    %2300 = vmatprep.subr.mxu0 0.0
    %2301 = vmatpush1.msra.mxu0 0.0
    %2302 = vmatprep.subr.mxu0 0.0
    %2303 = vmatpush1.msra.mxu0 0.0
    %2304 = vmatprep.subr.mxu0 0.0
    %2305 = vmatpush1.msra.mxu0 0.0
    %2306 = vmatprep.subr.mxu0 0.0
    %2307 = vmatpush1.msra.mxu0 0.0
    %2308 = vmatprep.subr.mxu0 0.0
    %2309 = vmatpush1.msra.mxu0 0.0
    %2310 = vmatprep.subr.mxu0 0.0
    %2311 = vmatpush1.msra.mxu0 0.0
    %2312 = vmatprep.subr.mxu0 0.0
    %2313 = vmatpush1.msra.mxu0 0.0
    %2314 = vmatprep.subr.mxu0 0.0
    %2315 = vmatpush1.msra.mxu0 0.0
    %2316 = vmatprep.mubr.f32.mxu0 0.0
    %2317 = vmatmul.mubr.f32.gmra.mrb[0].mxu0 %v2247
    %v2318 = vpop.f32.mrb[0].mxu0
    %v2319 = vadd.f32 0.0, %v2318
    %v2320 = vpop.f32.mrb[0].mxu0
    %2321 = vmatprep.mubr.f32.mxu0 0.0
    %2322 = vmatmul.mubr.f32.gmra.mrb[0].mxu0 %v2250
    %v2323 = vpop.f32.mrb[0].mxu0
    %v2324 = vadd.f32 0.0, %v2323
    %v2325 = vpop.f32.mrb[0].mxu0
    %2326 = vdwg.mxu0
    %v2327 = vld [vmem:[%s9] sm:$0xff]
    %v2328 = vld [vmem:[%s9 + $0x8] sm:$0xff]
    %v2329 = vld [vmem:[%s9 + $0x10] sm:$0xff]
    %v2330 = vld [vmem:[%s9 + $0x18] sm:$0xff]
    %2331 = vmatprep.subr.mxu0 0.0
    %2332 = vmatpush1.msra.mxu0 %v2327
    %2333 = vmatprep.subr.mxu0 0.0
    %2334 = vmatpush1.msra.mxu0 %v2328
    %2335 = vmatprep.subr.mxu0 0.0
    %2336 = vmatpush1.msra.mxu0 %v2329
    %2337 = vmatprep.subr.mxu0 0.0
    %2338 = vmatpush1.msra.mxu0 %v2330
    %2339 = vmatprep.subr.mxu0 0.0
    %2340 = vmatpush1.msra.mxu0 0.0
    %2341 = vmatprep.subr.mxu0 0.0
    %2342 = vmatpush1.msra.mxu0 0.0
    %2343 = vmatprep.subr.mxu0 0.0
    %2344 = vmatpush1.msra.mxu0 0.0
    %2345 = vmatprep.subr.mxu0 0.0
    %2346 = vmatpush1.msra.mxu0 0.0
    %2347 = vmatprep.subr.mxu0 0.0
    %2348 = vmatpush1.msra.mxu0 0.0
    %2349 = vmatprep.subr.mxu0 0.0
    %2350 = vmatpush1.msra.mxu0 0.0
    %2351 = vmatprep.subr.mxu0 0.0
    %2352 = vmatpush1.msra.mxu0 0.0
    %2353 = vmatprep.subr.mxu0 0.0
    %2354 = vmatpush1.msra.mxu0 0.0
    %2355 = vmatprep.subr.mxu0 0.0
    %2356 = vmatpush1.msra.mxu0 0.0
    %2357 = vmatprep.subr.mxu0 0.0
    %2358 = vmatpush1.msra.mxu0 0.0
    %2359 = vmatprep.subr.mxu0 0.0
    %2360 = vmatpush1.msra.mxu0 0.0
    %2361 = vmatprep.subr.mxu0 0.0
    %2362 = vmatpush1.msra.mxu0 0.0
    %2363 = vmatprep.subr.mxu0 0.0
    %2364 = vmatpush1.msra.mxu0 0.0
    %2365 = vmatprep.subr.mxu0 0.0
    %2366 = vmatpush1.msra.mxu0 0.0
    %2367 = vmatprep.subr.mxu0 0.0
    %2368 = vmatpush1.msra.mxu0 0.0
    %2369 = vmatprep.subr.mxu0 0.0
    %2370 = vmatpush1.msra.mxu0 0.0
    %2371 = vmatprep.subr.mxu0 0.0
    %2372 = vmatpush1.msra.mxu0 0.0
    %2373 = vmatprep.subr.mxu0 0.0
    %2374 = vmatpush1.msra.mxu0 0.0
    %2375 = vmatprep.subr.mxu0 0.0
    %2376 = vmatpush1.msra.mxu0 0.0
    %2377 = vmatprep.subr.mxu0 0.0
    %2378 = vmatpush1.msra.mxu0 0.0
    %2379 = vmatprep.subr.mxu0 0.0
    %2380 = vmatpush1.msra.mxu0 0.0
    %2381 = vmatprep.subr.mxu0 0.0
    %2382 = vmatpush1.msra.mxu0 0.0
    %2383 = vmatprep.subr.mxu0 0.0
    %2384 = vmatpush1.msra.mxu0 0.0
    %2385 = vmatprep.subr.mxu0 0.0
    %2386 = vmatpush1.msra.mxu0 0.0
    %2387 = vmatprep.subr.mxu0 0.0
    %2388 = vmatpush1.msra.mxu0 0.0
    %2389 = vmatprep.subr.mxu0 0.0
    %2390 = vmatpush1.msra.mxu0 0.0
    %2391 = vmatprep.subr.mxu0 0.0
    %2392 = vmatpush1.msra.mxu0 0.0
    %2393 = vmatprep.subr.mxu0 0.0
    %2394 = vmatpush1.msra.mxu0 0.0
    %2395 = vmatprep.mubr.f32.mxu0 0.0
    %2396 = vmatmul.mubr.f32.gmra.mrb[0].mxu0 %v2247
    %v2397 = vpop.f32.mrb[0].mxu0
    %v2398 = vadd.f32 0.0, %v2397
    %v2399 = vpop.f32.mrb[0].mxu0
    %2400 = vmatprep.mubr.f32.mxu0 0.0
    %2401 = vmatmul.mubr.f32.gmra.mrb[0].mxu0 %v2250
    %v2402 = vpop.f32.mrb[0].mxu0
    %v2403 = vadd.f32 0.0, %v2402
    %v2404 = vpop.f32.mrb[0].mxu0
    %2405 = vdwg.mxu0
    %v2406 = vxor.u32 %v2319, 2147483648
    %v2407 = vxor.u32 %v2324, 2147483648
    %v2408 = vmul.f32 %v2406, 1.442695
    %v2409 = vpow.pop %v2408
    %v2410 = vmul.f32 %v2407, 1.442695
    %v2411 = vpow.pop %v2410
    %v2412 = vadd.f32 %v2409, 1.0
    %v2413 = vadd.f32 %v2411, 1.0
    %v2414 = vrcp.pop %v2412
    %v2415 = vmul.f32 1.0, %v2414
    %v2416 = vrcp.pop %v2413
    %v2417 = vmul.f32 1.0, %v2416
    %v2418 = vmul.f32 %v2319, %v2415
    %v2419 = vmul.f32 %v2324, %v2417
    %v2420 = vmul.f32 %v2418, %v2398
    %v2421 = vmul.f32 %v2419, %v2403
    %v2422 = vld [vmem:[%s10] sm:$0xff]
    %v2423 = vld [vmem:[%s10 + $0x8] sm:$0xff]
    %v2424 = vld [vmem:[%s10 + $0x10] sm:$0xff]
    %v2425 = vld [vmem:[%s10 + $0x18] sm:$0xff]
    %v2426 = vld [vmem:[%s10 + $0x20] sm:$0xff]
    %v2427 = vld [vmem:[%s10 + $0x28] sm:$0xff]
    %v2428 = vld [vmem:[%s10 + $0x30] sm:$0xff]
    %v2429 = vld [vmem:[%s10 + $0x38] sm:$0xff]
    %v2431 = vsel %vm1662, %v2420, 0
    %v2434 = vsel %vm1662, %v2421, 0
    %2436 = vmatprep.subr.mxu0 0.0
    %2437 = vmatpush1.msra.mxu0 %v2422
    %2438 = vmatprep.subr.mxu0 0.0
    %2439 = vmatpush1.msra.mxu0 %v2423
    %2440 = vmatprep.subr.mxu0 0.0
    %2441 = vmatpush1.msra.mxu0 %v2424
    %2442 = vmatprep.subr.mxu0 0.0
    %2443 = vmatpush1.msra.mxu0 %v2425
    %2444 = vmatprep.subr.mxu0 0.0
    %2445 = vmatpush1.msra.mxu0 %v2426
    %2446 = vmatprep.subr.mxu0 0.0
    %2447 = vmatpush1.msra.mxu0 %v2427
    %2448 = vmatprep.subr.mxu0 0.0
    %2449 = vmatpush1.msra.mxu0 %v2428
    %2450 = vmatprep.subr.mxu0 0.0
    %2451 = vmatpush1.msra.mxu0 %v2429
    %2452 = vmatprep.subr.mxu0 0.0
    %2453 = vmatpush1.msra.mxu0 0.0
    %2454 = vmatprep.subr.mxu0 0.0
    %2455 = vmatpush1.msra.mxu0 0.0
    %2456 = vmatprep.subr.mxu0 0.0
    %2457 = vmatpush1.msra.mxu0 0.0
    %2458 = vmatprep.subr.mxu0 0.0
    %2459 = vmatpush1.msra.mxu0 0.0
    %2460 = vmatprep.subr.mxu0 0.0
    %2461 = vmatpush1.msra.mxu0 0.0
    %2462 = vmatprep.subr.mxu0 0.0
    %2463 = vmatpush1.msra.mxu0 0.0
    %2464 = vmatprep.subr.mxu0 0.0
    %2465 = vmatpush1.msra.mxu0 0.0
    %2466 = vmatprep.subr.mxu0 0.0
    %2467 = vmatpush1.msra.mxu0 0.0
    %2468 = vmatprep.subr.mxu0 0.0
    %2469 = vmatpush1.msra.mxu0 0.0
    %2470 = vmatprep.subr.mxu0 0.0
    %2471 = vmatpush1.msra.mxu0 0.0
    %2472 = vmatprep.subr.mxu0 0.0
    %2473 = vmatpush1.msra.mxu0 0.0
    %2474 = vmatprep.subr.mxu0 0.0
    %2475 = vmatpush1.msra.mxu0 0.0
    %2476 = vmatprep.subr.mxu0 0.0
    %2477 = vmatpush1.msra.mxu0 0.0
    %2478 = vmatprep.subr.mxu0 0.0
    %2479 = vmatpush1.msra.mxu0 0.0
    %2480 = vmatprep.subr.mxu0 0.0
    %2481 = vmatpush1.msra.mxu0 0.0
    %2482 = vmatprep.subr.mxu0 0.0
    %2483 = vmatpush1.msra.mxu0 0.0
    %2484 = vmatprep.subr.mxu0 0.0
    %2485 = vmatpush1.msra.mxu0 0.0
    %2486 = vmatprep.subr.mxu0 0.0
    %2487 = vmatpush1.msra.mxu0 0.0
    %2488 = vmatprep.subr.mxu0 0.0
    %2489 = vmatpush1.msra.mxu0 0.0
    %2490 = vmatprep.subr.mxu0 0.0
    %2491 = vmatpush1.msra.mxu0 0.0
    %2492 = vmatprep.subr.mxu0 0.0
    %2493 = vmatpush1.msra.mxu0 0.0
    %2494 = vmatprep.subr.mxu0 0.0
    %2495 = vmatpush1.msra.mxu0 0.0
    %2496 = vmatprep.subr.mxu0 0.0
    %2497 = vmatpush1.msra.mxu0 0.0
    %2498 = vmatprep.subr.mxu0 0.0
    %2499 = vmatpush1.msra.mxu0 0.0
    %2500 = vmatprep.mubr.f32.mxu0 0.0
    %2501 = vmatmul.mubr.f32.gmra.mrb[0].mxu0 %v2431
    %v2502 = vpop.f32.mrb[0].mxu0
    %v2503 = vadd.f32 0.0, %v2502
    %v2504 = vpop.f32.mrb[0].mxu0
    %2505 = vmatprep.mubr.f32.mxu0 0.0
    %2506 = vmatmul.mubr.f32.gmra.mrb[0].mxu0 %v2434
    %v2507 = vpop.f32.mrb[0].mxu0
    %v2508 = vadd.f32 0.0, %v2507
    %v2509 = vpop.f32.mrb[0].mxu0
    %2510 = vdwg.mxu0
    %v2511 = vadd.f32 %v2215, %v2503
    %v2512 = vadd.f32 %v2216, %v2508
    %s2513 = scalar_lea.vmem %s6, 1
    %v2514 = vld [vmem:[%s2513] sm:$0x1]
    %v2515 = vmul.f32 %v2511, %v2511
    %v2516 = vmul.f32 %v2512, %v2512
    %v2517 = vsel %vm215, %v2515, 0.0
    %2518 = vadd.xlane.f32.xlu0 %v2517
    %v2519 = vpop.xlane.xlu0 %2518
    %v2520 = vsel %vm215, %v2516, 0.0
    %2521 = vadd.xlane.f32.xlu0 %v2520
    %v2522 = vpop.xlane.xlu0 %2521
    %v2523 = vmul.f32 %v2519, %v222
    %v2524 = vmul.f32 %v2522, %v222
    %v2525 = vadd.f32 %v2523, 1e-05
    %v2526 = vadd.f32 %v2524, 1e-05
    %v2527 = vrsqrt.pop %v2525
    %v2528 = vrsqrt.pop %v2526
    %v2529 = vmul.f32 %v2511, %v2527
    %v2530 = vmul.f32 %v2512, %v2528
    %v2532 = vlaneseq
    %v2533 = vshrl.u32 %v2532, 7
    %v2534 = vsub.s32 0, %v2533
    %v2535 = vrot.slane %v2514, %v2534
    %v2537 = vmul.f32 %v2529, %v2535
    %v2538 = vmul.f32 %v2530, %v2535
    %s2539 = scalar_lea.vmem %s2, 128
    %v2540 = vld [vmem:[%s2539] sm:$0xff]
    %v2541 = vld [vmem:[%s2539 + $0x8] sm:$0xff]
    %v2542 = vld [vmem:[%s2539 + $0x10] sm:$0xff]
    %v2543 = vld [vmem:[%s2539 + $0x18] sm:$0xff]
    %v2545 = vsel %vm215, %v2537, 0
    %v2548 = vsel %vm215, %v2538, 0
    %2550 = vmatprep.subr.mxu0 0.0
    %2551 = vmatpush1.msra.mxu0 %v2540
    %2552 = vmatprep.subr.mxu0 0.0
    %2553 = vmatpush1.msra.mxu0 %v2541
    %2554 = vmatprep.subr.mxu0 0.0
    %2555 = vmatpush1.msra.mxu0 %v2542
    %2556 = vmatprep.subr.mxu0 0.0
    %2557 = vmatpush1.msra.mxu0 %v2543
    %2558 = vmatprep.subr.mxu0 0.0
    %2559 = vmatpush1.msra.mxu0 0.0
    %2560 = vmatprep.subr.mxu0 0.0
    %2561 = vmatpush1.msra.mxu0 0.0
    %2562 = vmatprep.subr.mxu0 0.0
    %2563 = vmatpush1.msra.mxu0 0.0
    %2564 = vmatprep.subr.mxu0 0.0
    %2565 = vmatpush1.msra.mxu0 0.0
    %2566 = vmatprep.subr.mxu0 0.0
    %2567 = vmatpush1.msra.mxu0 0.0
    %2568 = vmatprep.subr.mxu0 0.0
    %2569 = vmatpush1.msra.mxu0 0.0
    %2570 = vmatprep.subr.mxu0 0.0
    %2571 = vmatpush1.msra.mxu0 0.0
    %2572 = vmatprep.subr.mxu0 0.0
    %2573 = vmatpush1.msra.mxu0 0.0
    %2574 = vmatprep.subr.mxu0 0.0
    %2575 = vmatpush1.msra.mxu0 0.0
    %2576 = vmatprep.subr.mxu0 0.0
    %2577 = vmatpush1.msra.mxu0 0.0
    %2578 = vmatprep.subr.mxu0 0.0
    %2579 = vmatpush1.msra.mxu0 0.0
    %2580 = vmatprep.subr.mxu0 0.0
    %2581 = vmatpush1.msra.mxu0 0.0
    %2582 = vmatprep.subr.mxu0 0.0
    %2583 = vmatpush1.msra.mxu0 0.0
    %2584 = vmatprep.subr.mxu0 0.0
    %2585 = vmatpush1.msra.mxu0 0.0
    %2586 = vmatprep.subr.mxu0 0.0
    %2587 = vmatpush1.msra.mxu0 0.0
    %2588 = vmatprep.subr.mxu0 0.0
    %2589 = vmatpush1.msra.mxu0 0.0
    %2590 = vmatprep.subr.mxu0 0.0
    %2591 = vmatpush1.msra.mxu0 0.0
    %2592 = vmatprep.subr.mxu0 0.0
    %2593 = vmatpush1.msra.mxu0 0.0
    %2594 = vmatprep.subr.mxu0 0.0
    %2595 = vmatpush1.msra.mxu0 0.0
    %2596 = vmatprep.subr.mxu0 0.0
    %2597 = vmatpush1.msra.mxu0 0.0
    %2598 = vmatprep.subr.mxu0 0.0
    %2599 = vmatpush1.msra.mxu0 0.0
    %2600 = vmatprep.subr.mxu0 0.0
    %2601 = vmatpush1.msra.mxu0 0.0
    %2602 = vmatprep.subr.mxu0 0.0
    %2603 = vmatpush1.msra.mxu0 0.0
    %2604 = vmatprep.subr.mxu0 0.0
    %2605 = vmatpush1.msra.mxu0 0.0
    %2606 = vmatprep.subr.mxu0 0.0
    %2607 = vmatpush1.msra.mxu0 0.0
    %2608 = vmatprep.subr.mxu0 0.0
    %2609 = vmatpush1.msra.mxu0 0.0
    %2610 = vmatprep.subr.mxu0 0.0
    %2611 = vmatpush1.msra.mxu0 0.0
    %2612 = vmatprep.subr.mxu0 0.0
    %2613 = vmatpush1.msra.mxu0 0.0
    %2614 = vmatprep.mubr.f32.mxu0 0.0
    %2615 = vmatmul.mubr.f32.gmra.mrb[0].mxu0 %v2545
    %v2616 = vpop.f32.mrb[0].mxu0
    %v2617 = vadd.f32 0.0, %v2616
    %v2618 = vpop.f32.mrb[0].mxu0
    %2619 = vmatprep.mubr.f32.mxu0 0.0
    %2620 = vmatmul.mubr.f32.gmra.mrb[0].mxu0 %v2548
    %v2621 = vpop.f32.mrb[0].mxu0
    %v2622 = vadd.f32 0.0, %v2621
    %v2623 = vpop.f32.mrb[0].mxu0
    %2624 = vdwg.mxu0
    %s2625 = scalar_lea.vmem %s2, 160
    %v2626 = vld [vmem:[%s2625] sm:$0xff]
    %v2627 = vld [vmem:[%s2625 + $0x8] sm:$0xff]
    %v2628 = vld [vmem:[%s2625 + $0x10] sm:$0xff]
    %v2629 = vld [vmem:[%s2625 + $0x18] sm:$0xff]
    %2630 = vmatprep.subr.mxu0 0.0
    %2631 = vmatpush1.msra.mxu0 %v2626
    %2632 = vmatprep.subr.mxu0 0.0
    %2633 = vmatpush1.msra.mxu0 %v2627
    %2634 = vmatprep.subr.mxu0 0.0
    %2635 = vmatpush1.msra.mxu0 %v2628
    %2636 = vmatprep.subr.mxu0 0.0
    %2637 = vmatpush1.msra.mxu0 %v2629
    %2638 = vmatprep.subr.mxu0 0.0
    %2639 = vmatpush1.msra.mxu0 0.0
    %2640 = vmatprep.subr.mxu0 0.0
    %2641 = vmatpush1.msra.mxu0 0.0
    %2642 = vmatprep.subr.mxu0 0.0
    %2643 = vmatpush1.msra.mxu0 0.0
    %2644 = vmatprep.subr.mxu0 0.0
    %2645 = vmatpush1.msra.mxu0 0.0
    %2646 = vmatprep.subr.mxu0 0.0
    %2647 = vmatpush1.msra.mxu0 0.0
    %2648 = vmatprep.subr.mxu0 0.0
    %2649 = vmatpush1.msra.mxu0 0.0
    %2650 = vmatprep.subr.mxu0 0.0
    %2651 = vmatpush1.msra.mxu0 0.0
    %2652 = vmatprep.subr.mxu0 0.0
    %2653 = vmatpush1.msra.mxu0 0.0
    %2654 = vmatprep.subr.mxu0 0.0
    %2655 = vmatpush1.msra.mxu0 0.0
    %2656 = vmatprep.subr.mxu0 0.0
    %2657 = vmatpush1.msra.mxu0 0.0
    %2658 = vmatprep.subr.mxu0 0.0
    %2659 = vmatpush1.msra.mxu0 0.0
    %2660 = vmatprep.subr.mxu0 0.0
    %2661 = vmatpush1.msra.mxu0 0.0
    %2662 = vmatprep.subr.mxu0 0.0
    %2663 = vmatpush1.msra.mxu0 0.0
    %2664 = vmatprep.subr.mxu0 0.0
    %2665 = vmatpush1.msra.mxu0 0.0
    %2666 = vmatprep.subr.mxu0 0.0
    %2667 = vmatpush1.msra.mxu0 0.0
    %2668 = vmatprep.subr.mxu0 0.0
    %2669 = vmatpush1.msra.mxu0 0.0
    %2670 = vmatprep.subr.mxu0 0.0
    %2671 = vmatpush1.msra.mxu0 0.0
    %2672 = vmatprep.subr.mxu0 0.0
    %2673 = vmatpush1.msra.mxu0 0.0
    %2674 = vmatprep.subr.mxu0 0.0
    %2675 = vmatpush1.msra.mxu0 0.0
    %2676 = vmatprep.subr.mxu0 0.0
    %2677 = vmatpush1.msra.mxu0 0.0
    %2678 = vmatprep.subr.mxu0 0.0
    %2679 = vmatpush1.msra.mxu0 0.0
    %2680 = vmatprep.subr.mxu0 0.0
    %2681 = vmatpush1.msra.mxu0 0.0
    %2682 = vmatprep.subr.mxu0 0.0
    %2683 = vmatpush1.msra.mxu0 0.0
    %2684 = vmatprep.subr.mxu0 0.0
    %2685 = vmatpush1.msra.mxu0 0.0
    %2686 = vmatprep.subr.mxu0 0.0
    %2687 = vmatpush1.msra.mxu0 0.0
    %2688 = vmatprep.subr.mxu0 0.0
    %2689 = vmatpush1.msra.mxu0 0.0
    %2690 = vmatprep.subr.mxu0 0.0
    %2691 = vmatpush1.msra.mxu0 0.0
    %2692 = vmatprep.subr.mxu0 0.0
    %2693 = vmatpush1.msra.mxu0 0.0
    %2694 = vmatprep.mubr.f32.mxu0 0.0
    %2695 = vmatmul.mubr.f32.gmra.mrb[0].mxu0 %v2545
    %v2696 = vpop.f32.mrb[0].mxu0
    %v2697 = vadd.f32 0.0, %v2696
    %v2698 = vpop.f32.mrb[0].mxu0
    %2699 = vmatprep.mubr.f32.mxu0 0.0
    %2700 = vmatmul.mubr.f32.gmra.mrb[0].mxu0 %v2548
    %v2701 = vpop.f32.mrb[0].mxu0
    %v2702 = vadd.f32 0.0, %v2701
    %v2703 = vpop.f32.mrb[0].mxu0
    %2704 = vdwg.mxu0
    %s2705 = scalar_lea.vmem %s2, 192
    %v2706 = vld [vmem:[%s2705] sm:$0xff]
    %v2707 = vld [vmem:[%s2705 + $0x8] sm:$0xff]
    %v2708 = vld [vmem:[%s2705 + $0x10] sm:$0xff]
    %v2709 = vld [vmem:[%s2705 + $0x18] sm:$0xff]
    %2710 = vmatprep.subr.mxu0 0.0
    %2711 = vmatpush1.msra.mxu0 %v2706
    %2712 = vmatprep.subr.mxu0 0.0
    %2713 = vmatpush1.msra.mxu0 %v2707
    %2714 = vmatprep.subr.mxu0 0.0
    %2715 = vmatpush1.msra.mxu0 %v2708
    %2716 = vmatprep.subr.mxu0 0.0
    %2717 = vmatpush1.msra.mxu0 %v2709
    %2718 = vmatprep.subr.mxu0 0.0
    %2719 = vmatpush1.msra.mxu0 0.0
    %2720 = vmatprep.subr.mxu0 0.0
    %2721 = vmatpush1.msra.mxu0 0.0
    %2722 = vmatprep.subr.mxu0 0.0
    %2723 = vmatpush1.msra.mxu0 0.0
    %2724 = vmatprep.subr.mxu0 0.0
    %2725 = vmatpush1.msra.mxu0 0.0
    %2726 = vmatprep.subr.mxu0 0.0
    %2727 = vmatpush1.msra.mxu0 0.0
    %2728 = vmatprep.subr.mxu0 0.0
    %2729 = vmatpush1.msra.mxu0 0.0
    %2730 = vmatprep.subr.mxu0 0.0
    %2731 = vmatpush1.msra.mxu0 0.0
    %2732 = vmatprep.subr.mxu0 0.0
    %2733 = vmatpush1.msra.mxu0 0.0
    %2734 = vmatprep.subr.mxu0 0.0
    %2735 = vmatpush1.msra.mxu0 0.0
    %2736 = vmatprep.subr.mxu0 0.0
    %2737 = vmatpush1.msra.mxu0 0.0
    %2738 = vmatprep.subr.mxu0 0.0
    %2739 = vmatpush1.msra.mxu0 0.0
    %2740 = vmatprep.subr.mxu0 0.0
    %2741 = vmatpush1.msra.mxu0 0.0
    %2742 = vmatprep.subr.mxu0 0.0
    %2743 = vmatpush1.msra.mxu0 0.0
    %2744 = vmatprep.subr.mxu0 0.0
    %2745 = vmatpush1.msra.mxu0 0.0
    %2746 = vmatprep.subr.mxu0 0.0
    %2747 = vmatpush1.msra.mxu0 0.0
    %2748 = vmatprep.subr.mxu0 0.0
    %2749 = vmatpush1.msra.mxu0 0.0
    %2750 = vmatprep.subr.mxu0 0.0
    %2751 = vmatpush1.msra.mxu0 0.0
    %2752 = vmatprep.subr.mxu0 0.0
    %2753 = vmatpush1.msra.mxu0 0.0
    %2754 = vmatprep.subr.mxu0 0.0
    %2755 = vmatpush1.msra.mxu0 0.0
    %2756 = vmatprep.subr.mxu0 0.0
    %2757 = vmatpush1.msra.mxu0 0.0
    %2758 = vmatprep.subr.mxu0 0.0
    %2759 = vmatpush1.msra.mxu0 0.0
    %2760 = vmatprep.subr.mxu0 0.0
    %2761 = vmatpush1.msra.mxu0 0.0
    %2762 = vmatprep.subr.mxu0 0.0
    %2763 = vmatpush1.msra.mxu0 0.0
    %2764 = vmatprep.subr.mxu0 0.0
    %2765 = vmatpush1.msra.mxu0 0.0
    %2766 = vmatprep.subr.mxu0 0.0
    %2767 = vmatpush1.msra.mxu0 0.0
    %2768 = vmatprep.subr.mxu0 0.0
    %2769 = vmatpush1.msra.mxu0 0.0
    %2770 = vmatprep.subr.mxu0 0.0
    %2771 = vmatpush1.msra.mxu0 0.0
    %2772 = vmatprep.subr.mxu0 0.0
    %2773 = vmatpush1.msra.mxu0 0.0
    %2774 = vmatprep.mubr.f32.mxu0 0.0
    %2775 = vmatmul.mubr.f32.gmra.mrb[0].mxu0 %v2545
    %v2776 = vpop.f32.mrb[0].mxu0
    %v2777 = vadd.f32 0.0, %v2776
    %v2778 = vpop.f32.mrb[0].mxu0
    %2779 = vmatprep.mubr.f32.mxu0 0.0
    %2780 = vmatmul.mubr.f32.gmra.mrb[0].mxu0 %v2548
    %v2781 = vpop.f32.mrb[0].mxu0
    %v2782 = vadd.f32 0.0, %v2781
    %v2783 = vpop.f32.mrb[0].mxu0
    %2784 = vdwg.mxu0
    %s2785 = scalar_lea.vmem %s2, 224
    %v2786 = vld [vmem:[%s2785] sm:$0xff]
    %v2787 = vld [vmem:[%s2785 + $0x8] sm:$0xff]
    %v2788 = vld [vmem:[%s2785 + $0x10] sm:$0xff]
    %v2789 = vld [vmem:[%s2785 + $0x18] sm:$0xff]
    %2790 = vmatprep.subr.mxu0 0.0
    %2791 = vmatpush1.msra.mxu0 %v2786
    %2792 = vmatprep.subr.mxu0 0.0
    %2793 = vmatpush1.msra.mxu0 %v2787
    %2794 = vmatprep.subr.mxu0 0.0
    %2795 = vmatpush1.msra.mxu0 %v2788
    %2796 = vmatprep.subr.mxu0 0.0
    %2797 = vmatpush1.msra.mxu0 %v2789
    %2798 = vmatprep.subr.mxu0 0.0
    %2799 = vmatpush1.msra.mxu0 0.0
    %2800 = vmatprep.subr.mxu0 0.0
    %2801 = vmatpush1.msra.mxu0 0.0
    %2802 = vmatprep.subr.mxu0 0.0
    %2803 = vmatpush1.msra.mxu0 0.0
    %2804 = vmatprep.subr.mxu0 0.0
    %2805 = vmatpush1.msra.mxu0 0.0
    %2806 = vmatprep.subr.mxu0 0.0
    %2807 = vmatpush1.msra.mxu0 0.0
    %2808 = vmatprep.subr.mxu0 0.0
    %2809 = vmatpush1.msra.mxu0 0.0
    %2810 = vmatprep.subr.mxu0 0.0
    %2811 = vmatpush1.msra.mxu0 0.0
    %2812 = vmatprep.subr.mxu0 0.0
    %2813 = vmatpush1.msra.mxu0 0.0
    %2814 = vmatprep.subr.mxu0 0.0
    %2815 = vmatpush1.msra.mxu0 0.0
    %2816 = vmatprep.subr.mxu0 0.0
    %2817 = vmatpush1.msra.mxu0 0.0
    %2818 = vmatprep.subr.mxu0 0.0
    %2819 = vmatpush1.msra.mxu0 0.0
    %2820 = vmatprep.subr.mxu0 0.0
    %2821 = vmatpush1.msra.mxu0 0.0
    %2822 = vmatprep.subr.mxu0 0.0
    %2823 = vmatpush1.msra.mxu0 0.0
    %2824 = vmatprep.subr.mxu0 0.0
    %2825 = vmatpush1.msra.mxu0 0.0
    %2826 = vmatprep.subr.mxu0 0.0
    %2827 = vmatpush1.msra.mxu0 0.0
    %2828 = vmatprep.subr.mxu0 0.0
    %2829 = vmatpush1.msra.mxu0 0.0
    %2830 = vmatprep.subr.mxu0 0.0
    %2831 = vmatpush1.msra.mxu0 0.0
    %2832 = vmatprep.subr.mxu0 0.0
    %2833 = vmatpush1.msra.mxu0 0.0
    %2834 = vmatprep.subr.mxu0 0.0
    %2835 = vmatpush1.msra.mxu0 0.0
    %2836 = vmatprep.subr.mxu0 0.0
    %2837 = vmatpush1.msra.mxu0 0.0
    %2838 = vmatprep.subr.mxu0 0.0
    %2839 = vmatpush1.msra.mxu0 0.0
    %2840 = vmatprep.subr.mxu0 0.0
    %2841 = vmatpush1.msra.mxu0 0.0
    %2842 = vmatprep.subr.mxu0 0.0
    %2843 = vmatpush1.msra.mxu0 0.0
    %2844 = vmatprep.subr.mxu0 0.0
    %2845 = vmatpush1.msra.mxu0 0.0
    %2846 = vmatprep.subr.mxu0 0.0
    %2847 = vmatpush1.msra.mxu0 0.0
    %2848 = vmatprep.subr.mxu0 0.0
    %2849 = vmatpush1.msra.mxu0 0.0
    %2850 = vmatprep.subr.mxu0 0.0
    %2851 = vmatpush1.msra.mxu0 0.0
    %2852 = vmatprep.subr.mxu0 0.0
    %2853 = vmatpush1.msra.mxu0 0.0
    %2854 = vmatprep.mubr.f32.mxu0 0.0
    %2855 = vmatmul.mubr.f32.gmra.mrb[0].mxu0 %v2545
    %v2856 = vpop.f32.mrb[0].mxu0
    %v2857 = vadd.f32 0.0, %v2856
    %v2858 = vpop.f32.mrb[0].mxu0
    %2859 = vmatprep.mubr.f32.mxu0 0.0
    %2860 = vmatmul.mubr.f32.gmra.mrb[0].mxu0 %v2548
    %v2861 = vpop.f32.mrb[0].mxu0
    %v2862 = vadd.f32 0.0, %v2861
    %v2863 = vpop.f32.mrb[0].mxu0
    %2864 = vdwg.mxu0
    %s2865 = scalar_lea.vmem %s3, 128
    %v2866 = vld [vmem:[%s2865] sm:$0xff]
    %v2867 = vld [vmem:[%s2865 + $0x8] sm:$0xff]
    %v2868 = vld [vmem:[%s2865 + $0x10] sm:$0xff]
    %v2869 = vld [vmem:[%s2865 + $0x18] sm:$0xff]
    %2870 = vmatprep.subr.mxu0 0.0
    %2871 = vmatpush1.msra.mxu0 %v2866
    %2872 = vmatprep.subr.mxu0 0.0
    %2873 = vmatpush1.msra.mxu0 %v2867
    %2874 = vmatprep.subr.mxu0 0.0
    %2875 = vmatpush1.msra.mxu0 %v2868
    %2876 = vmatprep.subr.mxu0 0.0
    %2877 = vmatpush1.msra.mxu0 %v2869
    %2878 = vmatprep.subr.mxu0 0.0
    %2879 = vmatpush1.msra.mxu0 0.0
    %2880 = vmatprep.subr.mxu0 0.0
    %2881 = vmatpush1.msra.mxu0 0.0
    %2882 = vmatprep.subr.mxu0 0.0
    %2883 = vmatpush1.msra.mxu0 0.0
    %2884 = vmatprep.subr.mxu0 0.0
    %2885 = vmatpush1.msra.mxu0 0.0
    %2886 = vmatprep.subr.mxu0 0.0
    %2887 = vmatpush1.msra.mxu0 0.0
    %2888 = vmatprep.subr.mxu0 0.0
    %2889 = vmatpush1.msra.mxu0 0.0
    %2890 = vmatprep.subr.mxu0 0.0
    %2891 = vmatpush1.msra.mxu0 0.0
    %2892 = vmatprep.subr.mxu0 0.0
    %2893 = vmatpush1.msra.mxu0 0.0
    %2894 = vmatprep.subr.mxu0 0.0
    %2895 = vmatpush1.msra.mxu0 0.0
    %2896 = vmatprep.subr.mxu0 0.0
    %2897 = vmatpush1.msra.mxu0 0.0
    %2898 = vmatprep.subr.mxu0 0.0
    %2899 = vmatpush1.msra.mxu0 0.0
    %2900 = vmatprep.subr.mxu0 0.0
    %2901 = vmatpush1.msra.mxu0 0.0
    %2902 = vmatprep.subr.mxu0 0.0
    %2903 = vmatpush1.msra.mxu0 0.0
    %2904 = vmatprep.subr.mxu0 0.0
    %2905 = vmatpush1.msra.mxu0 0.0
    %2906 = vmatprep.subr.mxu0 0.0
    %2907 = vmatpush1.msra.mxu0 0.0
    %2908 = vmatprep.subr.mxu0 0.0
    %2909 = vmatpush1.msra.mxu0 0.0
    %2910 = vmatprep.subr.mxu0 0.0
    %2911 = vmatpush1.msra.mxu0 0.0
    %2912 = vmatprep.subr.mxu0 0.0
    %2913 = vmatpush1.msra.mxu0 0.0
    %2914 = vmatprep.subr.mxu0 0.0
    %2915 = vmatpush1.msra.mxu0 0.0
    %2916 = vmatprep.subr.mxu0 0.0
    %2917 = vmatpush1.msra.mxu0 0.0
    %2918 = vmatprep.subr.mxu0 0.0
    %2919 = vmatpush1.msra.mxu0 0.0
    %2920 = vmatprep.subr.mxu0 0.0
    %2921 = vmatpush1.msra.mxu0 0.0
    %2922 = vmatprep.subr.mxu0 0.0
    %2923 = vmatpush1.msra.mxu0 0.0
    %2924 = vmatprep.subr.mxu0 0.0
    %2925 = vmatpush1.msra.mxu0 0.0
    %2926 = vmatprep.subr.mxu0 0.0
    %2927 = vmatpush1.msra.mxu0 0.0
    %2928 = vmatprep.subr.mxu0 0.0
    %2929 = vmatpush1.msra.mxu0 0.0
    %2930 = vmatprep.subr.mxu0 0.0
    %2931 = vmatpush1.msra.mxu0 0.0
    %2932 = vmatprep.subr.mxu0 0.0
    %2933 = vmatpush1.msra.mxu0 0.0
    %2934 = vmatprep.mubr.f32.mxu0 0.0
    %2935 = vmatmul.mubr.f32.gmra.mrb[0].mxu0 %v2545
    %v2936 = vpop.f32.mrb[0].mxu0
    %v2937 = vadd.f32 0.0, %v2936
    %v2938 = vpop.f32.mrb[0].mxu0
    %2939 = vmatprep.mubr.f32.mxu0 0.0
    %2940 = vmatmul.mubr.f32.gmra.mrb[0].mxu0 %v2548
    %v2941 = vpop.f32.mrb[0].mxu0
    %v2942 = vadd.f32 0.0, %v2941
    %v2943 = vpop.f32.mrb[0].mxu0
    %2944 = vdwg.mxu0
    %s2945 = scalar_lea.vmem %s3, 160
    %v2946 = vld [vmem:[%s2945] sm:$0xff]
    %v2947 = vld [vmem:[%s2945 + $0x8] sm:$0xff]
    %v2948 = vld [vmem:[%s2945 + $0x10] sm:$0xff]
    %v2949 = vld [vmem:[%s2945 + $0x18] sm:$0xff]
    %2950 = vmatprep.subr.mxu0 0.0
    %2951 = vmatpush1.msra.mxu0 %v2946
    %2952 = vmatprep.subr.mxu0 0.0
    %2953 = vmatpush1.msra.mxu0 %v2947
    %2954 = vmatprep.subr.mxu0 0.0
    %2955 = vmatpush1.msra.mxu0 %v2948
    %2956 = vmatprep.subr.mxu0 0.0
    %2957 = vmatpush1.msra.mxu0 %v2949
    %2958 = vmatprep.subr.mxu0 0.0
    %2959 = vmatpush1.msra.mxu0 0.0
    %2960 = vmatprep.subr.mxu0 0.0
    %2961 = vmatpush1.msra.mxu0 0.0
    %2962 = vmatprep.subr.mxu0 0.0
    %2963 = vmatpush1.msra.mxu0 0.0
    %2964 = vmatprep.subr.mxu0 0.0
    %2965 = vmatpush1.msra.mxu0 0.0
    %2966 = vmatprep.subr.mxu0 0.0
    %2967 = vmatpush1.msra.mxu0 0.0
    %2968 = vmatprep.subr.mxu0 0.0
    %2969 = vmatpush1.msra.mxu0 0.0
    %2970 = vmatprep.subr.mxu0 0.0
    %2971 = vmatpush1.msra.mxu0 0.0
    %2972 = vmatprep.subr.mxu0 0.0
    %2973 = vmatpush1.msra.mxu0 0.0
    %2974 = vmatprep.subr.mxu0 0.0
    %2975 = vmatpush1.msra.mxu0 0.0
    %2976 = vmatprep.subr.mxu0 0.0
    %2977 = vmatpush1.msra.mxu0 0.0
    %2978 = vmatprep.subr.mxu0 0.0
    %2979 = vmatpush1.msra.mxu0 0.0
    %2980 = vmatprep.subr.mxu0 0.0
    %2981 = vmatpush1.msra.mxu0 0.0
    %2982 = vmatprep.subr.mxu0 0.0
    %2983 = vmatpush1.msra.mxu0 0.0
    %2984 = vmatprep.subr.mxu0 0.0
    %2985 = vmatpush1.msra.mxu0 0.0
    %2986 = vmatprep.subr.mxu0 0.0
    %2987 = vmatpush1.msra.mxu0 0.0
    %2988 = vmatprep.subr.mxu0 0.0
    %2989 = vmatpush1.msra.mxu0 0.0
    %2990 = vmatprep.subr.mxu0 0.0
    %2991 = vmatpush1.msra.mxu0 0.0
    %2992 = vmatprep.subr.mxu0 0.0
    %2993 = vmatpush1.msra.mxu0 0.0
    %2994 = vmatprep.subr.mxu0 0.0
    %2995 = vmatpush1.msra.mxu0 0.0
    %2996 = vmatprep.subr.mxu0 0.0
    %2997 = vmatpush1.msra.mxu0 0.0
    %2998 = vmatprep.subr.mxu0 0.0
    %2999 = vmatpush1.msra.mxu0 0.0
    %3000 = vmatprep.subr.mxu0 0.0
    %3001 = vmatpush1.msra.mxu0 0.0
    %3002 = vmatprep.subr.mxu0 0.0
    %3003 = vmatpush1.msra.mxu0 0.0
    %3004 = vmatprep.subr.mxu0 0.0
    %3005 = vmatpush1.msra.mxu0 0.0
    %3006 = vmatprep.subr.mxu0 0.0
    %3007 = vmatpush1.msra.mxu0 0.0
    %3008 = vmatprep.subr.mxu0 0.0
    %3009 = vmatpush1.msra.mxu0 0.0
    %3010 = vmatprep.subr.mxu0 0.0
    %3011 = vmatpush1.msra.mxu0 0.0
    %3012 = vmatprep.subr.mxu0 0.0
    %3013 = vmatpush1.msra.mxu0 0.0
    %3014 = vmatprep.mubr.f32.mxu0 0.0
    %3015 = vmatmul.mubr.f32.gmra.mrb[0].mxu0 %v2545
    %v3016 = vpop.f32.mrb[0].mxu0
    %v3017 = vadd.f32 0.0, %v3016
    %v3018 = vpop.f32.mrb[0].mxu0
    %3019 = vmatprep.mubr.f32.mxu0 0.0
    %3020 = vmatmul.mubr.f32.gmra.mrb[0].mxu0 %v2548
    %v3021 = vpop.f32.mrb[0].mxu0
    %v3022 = vadd.f32 0.0, %v3021
    %v3023 = vpop.f32.mrb[0].mxu0
    %3024 = vdwg.mxu0
    %s3025 = scalar_lea.vmem %s3, 192
    %v3026 = vld [vmem:[%s3025] sm:$0xff]
    %v3027 = vld [vmem:[%s3025 + $0x8] sm:$0xff]
    %v3028 = vld [vmem:[%s3025 + $0x10] sm:$0xff]
    %v3029 = vld [vmem:[%s3025 + $0x18] sm:$0xff]
    %3030 = vmatprep.subr.mxu0 0.0
    %3031 = vmatpush1.msra.mxu0 %v3026
    %3032 = vmatprep.subr.mxu0 0.0
    %3033 = vmatpush1.msra.mxu0 %v3027
    %3034 = vmatprep.subr.mxu0 0.0
    %3035 = vmatpush1.msra.mxu0 %v3028
    %3036 = vmatprep.subr.mxu0 0.0
    %3037 = vmatpush1.msra.mxu0 %v3029
    %3038 = vmatprep.subr.mxu0 0.0
    %3039 = vmatpush1.msra.mxu0 0.0
    %3040 = vmatprep.subr.mxu0 0.0
    %3041 = vmatpush1.msra.mxu0 0.0
    %3042 = vmatprep.subr.mxu0 0.0
    %3043 = vmatpush1.msra.mxu0 0.0
    %3044 = vmatprep.subr.mxu0 0.0
    %3045 = vmatpush1.msra.mxu0 0.0
    %3046 = vmatprep.subr.mxu0 0.0
    %3047 = vmatpush1.msra.mxu0 0.0
    %3048 = vmatprep.subr.mxu0 0.0
    %3049 = vmatpush1.msra.mxu0 0.0
    %3050 = vmatprep.subr.mxu0 0.0
    %3051 = vmatpush1.msra.mxu0 0.0
    %3052 = vmatprep.subr.mxu0 0.0
    %3053 = vmatpush1.msra.mxu0 0.0
    %3054 = vmatprep.subr.mxu0 0.0
    %3055 = vmatpush1.msra.mxu0 0.0
    %3056 = vmatprep.subr.mxu0 0.0
    %3057 = vmatpush1.msra.mxu0 0.0
    %3058 = vmatprep.subr.mxu0 0.0
    %3059 = vmatpush1.msra.mxu0 0.0
    %3060 = vmatprep.subr.mxu0 0.0
    %3061 = vmatpush1.msra.mxu0 0.0
    %3062 = vmatprep.subr.mxu0 0.0
    %3063 = vmatpush1.msra.mxu0 0.0
    %3064 = vmatprep.subr.mxu0 0.0
    %3065 = vmatpush1.msra.mxu0 0.0
    %3066 = vmatprep.subr.mxu0 0.0
    %3067 = vmatpush1.msra.mxu0 0.0
    %3068 = vmatprep.subr.mxu0 0.0
    %3069 = vmatpush1.msra.mxu0 0.0
    %3070 = vmatprep.subr.mxu0 0.0
    %3071 = vmatpush1.msra.mxu0 0.0
    %3072 = vmatprep.subr.mxu0 0.0
    %3073 = vmatpush1.msra.mxu0 0.0
    %3074 = vmatprep.subr.mxu0 0.0
    %3075 = vmatpush1.msra.mxu0 0.0
    %3076 = vmatprep.subr.mxu0 0.0
    %3077 = vmatpush1.msra.mxu0 0.0
    %3078 = vmatprep.subr.mxu0 0.0
    %3079 = vmatpush1.msra.mxu0 0.0
    %3080 = vmatprep.subr.mxu0 0.0
    %3081 = vmatpush1.msra.mxu0 0.0
    %3082 = vmatprep.subr.mxu0 0.0
    %3083 = vmatpush1.msra.mxu0 0.0
    %3084 = vmatprep.subr.mxu0 0.0
    %3085 = vmatpush1.msra.mxu0 0.0
    %3086 = vmatprep.subr.mxu0 0.0
    %3087 = vmatpush1.msra.mxu0 0.0
    %3088 = vmatprep.subr.mxu0 0.0
    %3089 = vmatpush1.msra.mxu0 0.0
    %3090 = vmatprep.subr.mxu0 0.0
    %3091 = vmatpush1.msra.mxu0 0.0
    %3092 = vmatprep.subr.mxu0 0.0
    %3093 = vmatpush1.msra.mxu0 0.0
    %3094 = vmatprep.mubr.f32.mxu0 0.0
    %3095 = vmatmul.mubr.f32.gmra.mrb[0].mxu0 %v2545
    %v3096 = vpop.f32.mrb[0].mxu0
    %v3097 = vadd.f32 0.0, %v3096
    %v3098 = vpop.f32.mrb[0].mxu0
    %3099 = vmatprep.mubr.f32.mxu0 0.0
    %3100 = vmatmul.mubr.f32.gmra.mrb[0].mxu0 %v2548
    %v3101 = vpop.f32.mrb[0].mxu0
    %v3102 = vadd.f32 0.0, %v3101
    %v3103 = vpop.f32.mrb[0].mxu0
    %3104 = vdwg.mxu0
    %s3105 = scalar_lea.vmem %s3, 224
    %v3106 = vld [vmem:[%s3105] sm:$0xff]
    %v3107 = vld [vmem:[%s3105 + $0x8] sm:$0xff]
    %v3108 = vld [vmem:[%s3105 + $0x10] sm:$0xff]
    %v3109 = vld [vmem:[%s3105 + $0x18] sm:$0xff]
    %3110 = vmatprep.subr.mxu0 0.0
    %3111 = vmatpush1.msra.mxu0 %v3106
    %3112 = vmatprep.subr.mxu0 0.0
    %3113 = vmatpush1.msra.mxu0 %v3107
    %3114 = vmatprep.subr.mxu0 0.0
    %3115 = vmatpush1.msra.mxu0 %v3108
    %3116 = vmatprep.subr.mxu0 0.0
    %3117 = vmatpush1.msra.mxu0 %v3109
    %3118 = vmatprep.subr.mxu0 0.0
    %3119 = vmatpush1.msra.mxu0 0.0
    %3120 = vmatprep.subr.mxu0 0.0
    %3121 = vmatpush1.msra.mxu0 0.0
    %3122 = vmatprep.subr.mxu0 0.0
    %3123 = vmatpush1.msra.mxu0 0.0
    %3124 = vmatprep.subr.mxu0 0.0
    %3125 = vmatpush1.msra.mxu0 0.0
    %3126 = vmatprep.subr.mxu0 0.0
    %3127 = vmatpush1.msra.mxu0 0.0
    %3128 = vmatprep.subr.mxu0 0.0
    %3129 = vmatpush1.msra.mxu0 0.0
    %3130 = vmatprep.subr.mxu0 0.0
    %3131 = vmatpush1.msra.mxu0 0.0
    %3132 = vmatprep.subr.mxu0 0.0
    %3133 = vmatpush1.msra.mxu0 0.0
    %3134 = vmatprep.subr.mxu0 0.0
    %3135 = vmatpush1.msra.mxu0 0.0
    %3136 = vmatprep.subr.mxu0 0.0
    %3137 = vmatpush1.msra.mxu0 0.0
    %3138 = vmatprep.subr.mxu0 0.0
    %3139 = vmatpush1.msra.mxu0 0.0
    %3140 = vmatprep.subr.mxu0 0.0
    %3141 = vmatpush1.msra.mxu0 0.0
    %3142 = vmatprep.subr.mxu0 0.0
    %3143 = vmatpush1.msra.mxu0 0.0
    %3144 = vmatprep.subr.mxu0 0.0
    %3145 = vmatpush1.msra.mxu0 0.0
    %3146 = vmatprep.subr.mxu0 0.0
    %3147 = vmatpush1.msra.mxu0 0.0
    %3148 = vmatprep.subr.mxu0 0.0
    %3149 = vmatpush1.msra.mxu0 0.0
    %3150 = vmatprep.subr.mxu0 0.0
    %3151 = vmatpush1.msra.mxu0 0.0
    %3152 = vmatprep.subr.mxu0 0.0
    %3153 = vmatpush1.msra.mxu0 0.0
    %3154 = vmatprep.subr.mxu0 0.0
    %3155 = vmatpush1.msra.mxu0 0.0
    %3156 = vmatprep.subr.mxu0 0.0
    %3157 = vmatpush1.msra.mxu0 0.0
    %3158 = vmatprep.subr.mxu0 0.0
    %3159 = vmatpush1.msra.mxu0 0.0
    %3160 = vmatprep.subr.mxu0 0.0
    %3161 = vmatpush1.msra.mxu0 0.0
    %3162 = vmatprep.subr.mxu0 0.0
    %3163 = vmatpush1.msra.mxu0 0.0
    %3164 = vmatprep.subr.mxu0 0.0
    %3165 = vmatpush1.msra.mxu0 0.0
    %3166 = vmatprep.subr.mxu0 0.0
    %3167 = vmatpush1.msra.mxu0 0.0
    %3168 = vmatprep.subr.mxu0 0.0
    %3169 = vmatpush1.msra.mxu0 0.0
    %3170 = vmatprep.subr.mxu0 0.0
    %3171 = vmatpush1.msra.mxu0 0.0
    %3172 = vmatprep.subr.mxu0 0.0
    %3173 = vmatpush1.msra.mxu0 0.0
    %3174 = vmatprep.mubr.f32.mxu0 0.0
    %3175 = vmatmul.mubr.f32.gmra.mrb[0].mxu0 %v2545
    %v3176 = vpop.f32.mrb[0].mxu0
    %v3177 = vadd.f32 0.0, %v3176
    %v3178 = vpop.f32.mrb[0].mxu0
    %3179 = vmatprep.mubr.f32.mxu0 0.0
    %3180 = vmatmul.mubr.f32.gmra.mrb[0].mxu0 %v2548
    %v3181 = vpop.f32.mrb[0].mxu0
    %v3182 = vadd.f32 0.0, %v3181
    %v3183 = vpop.f32.mrb[0].mxu0
    %3184 = vdwg.mxu0
    %s3185 = scalar_lea.vmem %s4, 128
    %v3186 = vld [vmem:[%s3185] sm:$0xff]
    %v3187 = vld [vmem:[%s3185 + $0x8] sm:$0xff]
    %v3188 = vld [vmem:[%s3185 + $0x10] sm:$0xff]
    %v3189 = vld [vmem:[%s3185 + $0x18] sm:$0xff]
    %3190 = vmatprep.subr.mxu0 0.0
    %3191 = vmatpush1.msra.mxu0 %v3186
    %3192 = vmatprep.subr.mxu0 0.0
    %3193 = vmatpush1.msra.mxu0 %v3187
    %3194 = vmatprep.subr.mxu0 0.0
    %3195 = vmatpush1.msra.mxu0 %v3188
    %3196 = vmatprep.subr.mxu0 0.0
    %3197 = vmatpush1.msra.mxu0 %v3189
    %3198 = vmatprep.subr.mxu0 0.0
    %3199 = vmatpush1.msra.mxu0 0.0
    %3200 = vmatprep.subr.mxu0 0.0
    %3201 = vmatpush1.msra.mxu0 0.0
    %3202 = vmatprep.subr.mxu0 0.0
    %3203 = vmatpush1.msra.mxu0 0.0
    %3204 = vmatprep.subr.mxu0 0.0
    %3205 = vmatpush1.msra.mxu0 0.0
    %3206 = vmatprep.subr.mxu0 0.0
    %3207 = vmatpush1.msra.mxu0 0.0
    %3208 = vmatprep.subr.mxu0 0.0
    %3209 = vmatpush1.msra.mxu0 0.0
    %3210 = vmatprep.subr.mxu0 0.0
    %3211 = vmatpush1.msra.mxu0 0.0
    %3212 = vmatprep.subr.mxu0 0.0
    %3213 = vmatpush1.msra.mxu0 0.0
    %3214 = vmatprep.subr.mxu0 0.0
    %3215 = vmatpush1.msra.mxu0 0.0
    %3216 = vmatprep.subr.mxu0 0.0
    %3217 = vmatpush1.msra.mxu0 0.0
    %3218 = vmatprep.subr.mxu0 0.0
    %3219 = vmatpush1.msra.mxu0 0.0
    %3220 = vmatprep.subr.mxu0 0.0
    %3221 = vmatpush1.msra.mxu0 0.0
    %3222 = vmatprep.subr.mxu0 0.0
    %3223 = vmatpush1.msra.mxu0 0.0
    %3224 = vmatprep.subr.mxu0 0.0
    %3225 = vmatpush1.msra.mxu0 0.0
    %3226 = vmatprep.subr.mxu0 0.0
    %3227 = vmatpush1.msra.mxu0 0.0
    %3228 = vmatprep.subr.mxu0 0.0
    %3229 = vmatpush1.msra.mxu0 0.0
    %3230 = vmatprep.subr.mxu0 0.0
    %3231 = vmatpush1.msra.mxu0 0.0
    %3232 = vmatprep.subr.mxu0 0.0
    %3233 = vmatpush1.msra.mxu0 0.0
    %3234 = vmatprep.subr.mxu0 0.0
    %3235 = vmatpush1.msra.mxu0 0.0
    %3236 = vmatprep.subr.mxu0 0.0
    %3237 = vmatpush1.msra.mxu0 0.0
    %3238 = vmatprep.subr.mxu0 0.0
    %3239 = vmatpush1.msra.mxu0 0.0
    %3240 = vmatprep.subr.mxu0 0.0
    %3241 = vmatpush1.msra.mxu0 0.0
    %3242 = vmatprep.subr.mxu0 0.0
    %3243 = vmatpush1.msra.mxu0 0.0
    %3244 = vmatprep.subr.mxu0 0.0
    %3245 = vmatpush1.msra.mxu0 0.0
    %3246 = vmatprep.subr.mxu0 0.0
    %3247 = vmatpush1.msra.mxu0 0.0
    %3248 = vmatprep.subr.mxu0 0.0
    %3249 = vmatpush1.msra.mxu0 0.0
    %3250 = vmatprep.subr.mxu0 0.0
    %3251 = vmatpush1.msra.mxu0 0.0
    %3252 = vmatprep.subr.mxu0 0.0
    %3253 = vmatpush1.msra.mxu0 0.0
    %3254 = vmatprep.mubr.f32.mxu0 0.0
    %3255 = vmatmul.mubr.f32.gmra.mrb[0].mxu0 %v2545
    %v3256 = vpop.f32.mrb[0].mxu0
    %v3257 = vadd.f32 0.0, %v3256
    %v3258 = vpop.f32.mrb[0].mxu0
    %3259 = vmatprep.mubr.f32.mxu0 0.0
    %3260 = vmatmul.mubr.f32.gmra.mrb[0].mxu0 %v2548
    %v3261 = vpop.f32.mrb[0].mxu0
    %v3262 = vadd.f32 0.0, %v3261
    %v3263 = vpop.f32.mrb[0].mxu0
    %3264 = vdwg.mxu0
    %s3265 = scalar_lea.vmem %s4, 160
    %v3266 = vld [vmem:[%s3265] sm:$0xff]
    %v3267 = vld [vmem:[%s3265 + $0x8] sm:$0xff]
    %v3268 = vld [vmem:[%s3265 + $0x10] sm:$0xff]
    %v3269 = vld [vmem:[%s3265 + $0x18] sm:$0xff]
    %3270 = vmatprep.subr.mxu0 0.0
    %3271 = vmatpush1.msra.mxu0 %v3266
    %3272 = vmatprep.subr.mxu0 0.0
    %3273 = vmatpush1.msra.mxu0 %v3267
    %3274 = vmatprep.subr.mxu0 0.0
    %3275 = vmatpush1.msra.mxu0 %v3268
    %3276 = vmatprep.subr.mxu0 0.0
    %3277 = vmatpush1.msra.mxu0 %v3269
    %3278 = vmatprep.subr.mxu0 0.0
    %3279 = vmatpush1.msra.mxu0 0.0
    %3280 = vmatprep.subr.mxu0 0.0
    %3281 = vmatpush1.msra.mxu0 0.0
    %3282 = vmatprep.subr.mxu0 0.0
    %3283 = vmatpush1.msra.mxu0 0.0
    %3284 = vmatprep.subr.mxu0 0.0
    %3285 = vmatpush1.msra.mxu0 0.0
    %3286 = vmatprep.subr.mxu0 0.0
    %3287 = vmatpush1.msra.mxu0 0.0
    %3288 = vmatprep.subr.mxu0 0.0
    %3289 = vmatpush1.msra.mxu0 0.0
    %3290 = vmatprep.subr.mxu0 0.0
    %3291 = vmatpush1.msra.mxu0 0.0
    %3292 = vmatprep.subr.mxu0 0.0
    %3293 = vmatpush1.msra.mxu0 0.0
    %3294 = vmatprep.subr.mxu0 0.0
    %3295 = vmatpush1.msra.mxu0 0.0
    %3296 = vmatprep.subr.mxu0 0.0
    %3297 = vmatpush1.msra.mxu0 0.0
    %3298 = vmatprep.subr.mxu0 0.0
    %3299 = vmatpush1.msra.mxu0 0.0
    %3300 = vmatprep.subr.mxu0 0.0
    %3301 = vmatpush1.msra.mxu0 0.0
    %3302 = vmatprep.subr.mxu0 0.0
    %3303 = vmatpush1.msra.mxu0 0.0
    %3304 = vmatprep.subr.mxu0 0.0
    %3305 = vmatpush1.msra.mxu0 0.0
    %3306 = vmatprep.subr.mxu0 0.0
    %3307 = vmatpush1.msra.mxu0 0.0
    %3308 = vmatprep.subr.mxu0 0.0
    %3309 = vmatpush1.msra.mxu0 0.0
    %3310 = vmatprep.subr.mxu0 0.0
    %3311 = vmatpush1.msra.mxu0 0.0
    %3312 = vmatprep.subr.mxu0 0.0
    %3313 = vmatpush1.msra.mxu0 0.0
    %3314 = vmatprep.subr.mxu0 0.0
    %3315 = vmatpush1.msra.mxu0 0.0
    %3316 = vmatprep.subr.mxu0 0.0
    %3317 = vmatpush1.msra.mxu0 0.0
    %3318 = vmatprep.subr.mxu0 0.0
    %3319 = vmatpush1.msra.mxu0 0.0
    %3320 = vmatprep.subr.mxu0 0.0
    %3321 = vmatpush1.msra.mxu0 0.0
    %3322 = vmatprep.subr.mxu0 0.0
    %3323 = vmatpush1.msra.mxu0 0.0
    %3324 = vmatprep.subr.mxu0 0.0
    %3325 = vmatpush1.msra.mxu0 0.0
    %3326 = vmatprep.subr.mxu0 0.0
    %3327 = vmatpush1.msra.mxu0 0.0
    %3328 = vmatprep.subr.mxu0 0.0
    %3329 = vmatpush1.msra.mxu0 0.0
    %3330 = vmatprep.subr.mxu0 0.0
    %3331 = vmatpush1.msra.mxu0 0.0
    %3332 = vmatprep.subr.mxu0 0.0
    %3333 = vmatpush1.msra.mxu0 0.0
    %3334 = vmatprep.mubr.f32.mxu0 0.0
    %3335 = vmatmul.mubr.f32.gmra.mrb[0].mxu0 %v2545
    %v3336 = vpop.f32.mrb[0].mxu0
    %v3337 = vadd.f32 0.0, %v3336
    %v3338 = vpop.f32.mrb[0].mxu0
    %3339 = vmatprep.mubr.f32.mxu0 0.0
    %3340 = vmatmul.mubr.f32.gmra.mrb[0].mxu0 %v2548
    %v3341 = vpop.f32.mrb[0].mxu0
    %v3342 = vadd.f32 0.0, %v3341
    %v3343 = vpop.f32.mrb[0].mxu0
    %3344 = vdwg.mxu0
    %s3345 = scalar_lea.vmem %s4, 192
    %v3346 = vld [vmem:[%s3345] sm:$0xff]
    %v3347 = vld [vmem:[%s3345 + $0x8] sm:$0xff]
    %v3348 = vld [vmem:[%s3345 + $0x10] sm:$0xff]
    %v3349 = vld [vmem:[%s3345 + $0x18] sm:$0xff]
    %3350 = vmatprep.subr.mxu0 0.0
    %3351 = vmatpush1.msra.mxu0 %v3346
    %3352 = vmatprep.subr.mxu0 0.0
    %3353 = vmatpush1.msra.mxu0 %v3347
    %3354 = vmatprep.subr.mxu0 0.0
    %3355 = vmatpush1.msra.mxu0 %v3348
    %3356 = vmatprep.subr.mxu0 0.0
    %3357 = vmatpush1.msra.mxu0 %v3349
    %3358 = vmatprep.subr.mxu0 0.0
    %3359 = vmatpush1.msra.mxu0 0.0
    %3360 = vmatprep.subr.mxu0 0.0
    %3361 = vmatpush1.msra.mxu0 0.0
    %3362 = vmatprep.subr.mxu0 0.0
    %3363 = vmatpush1.msra.mxu0 0.0
    %3364 = vmatprep.subr.mxu0 0.0
    %3365 = vmatpush1.msra.mxu0 0.0
    %3366 = vmatprep.subr.mxu0 0.0
    %3367 = vmatpush1.msra.mxu0 0.0
    %3368 = vmatprep.subr.mxu0 0.0
    %3369 = vmatpush1.msra.mxu0 0.0
    %3370 = vmatprep.subr.mxu0 0.0
    %3371 = vmatpush1.msra.mxu0 0.0
    %3372 = vmatprep.subr.mxu0 0.0
    %3373 = vmatpush1.msra.mxu0 0.0
    %3374 = vmatprep.subr.mxu0 0.0
    %3375 = vmatpush1.msra.mxu0 0.0
    %3376 = vmatprep.subr.mxu0 0.0
    %3377 = vmatpush1.msra.mxu0 0.0
    %3378 = vmatprep.subr.mxu0 0.0
    %3379 = vmatpush1.msra.mxu0 0.0
    %3380 = vmatprep.subr.mxu0 0.0
    %3381 = vmatpush1.msra.mxu0 0.0
    %3382 = vmatprep.subr.mxu0 0.0
    %3383 = vmatpush1.msra.mxu0 0.0
    %3384 = vmatprep.subr.mxu0 0.0
    %3385 = vmatpush1.msra.mxu0 0.0
    %3386 = vmatprep.subr.mxu0 0.0
    %3387 = vmatpush1.msra.mxu0 0.0
    %3388 = vmatprep.subr.mxu0 0.0
    %3389 = vmatpush1.msra.mxu0 0.0
    %3390 = vmatprep.subr.mxu0 0.0
    %3391 = vmatpush1.msra.mxu0 0.0
    %3392 = vmatprep.subr.mxu0 0.0
    %3393 = vmatpush1.msra.mxu0 0.0
    %3394 = vmatprep.subr.mxu0 0.0
    %3395 = vmatpush1.msra.mxu0 0.0
    %3396 = vmatprep.subr.mxu0 0.0
    %3397 = vmatpush1.msra.mxu0 0.0
    %3398 = vmatprep.subr.mxu0 0.0
    %3399 = vmatpush1.msra.mxu0 0.0
    %3400 = vmatprep.subr.mxu0 0.0
    %3401 = vmatpush1.msra.mxu0 0.0
    %3402 = vmatprep.subr.mxu0 0.0
    %3403 = vmatpush1.msra.mxu0 0.0
    %3404 = vmatprep.subr.mxu0 0.0
    %3405 = vmatpush1.msra.mxu0 0.0
    %3406 = vmatprep.subr.mxu0 0.0
    %3407 = vmatpush1.msra.mxu0 0.0
    %3408 = vmatprep.subr.mxu0 0.0
    %3409 = vmatpush1.msra.mxu0 0.0
    %3410 = vmatprep.subr.mxu0 0.0
    %3411 = vmatpush1.msra.mxu0 0.0
    %3412 = vmatprep.subr.mxu0 0.0
    %3413 = vmatpush1.msra.mxu0 0.0
    %3414 = vmatprep.mubr.f32.mxu0 0.0
    %3415 = vmatmul.mubr.f32.gmra.mrb[0].mxu0 %v2545
    %v3416 = vpop.f32.mrb[0].mxu0
    %v3417 = vadd.f32 0.0, %v3416
    %v3418 = vpop.f32.mrb[0].mxu0
    %3419 = vmatprep.mubr.f32.mxu0 0.0
    %3420 = vmatmul.mubr.f32.gmra.mrb[0].mxu0 %v2548
    %v3421 = vpop.f32.mrb[0].mxu0
    %v3422 = vadd.f32 0.0, %v3421
    %v3423 = vpop.f32.mrb[0].mxu0
    %3424 = vdwg.mxu0
    %s3425 = scalar_lea.vmem %s4, 224
    %v3426 = vld [vmem:[%s3425] sm:$0xff]
    %v3427 = vld [vmem:[%s3425 + $0x8] sm:$0xff]
    %v3428 = vld [vmem:[%s3425 + $0x10] sm:$0xff]
    %v3429 = vld [vmem:[%s3425 + $0x18] sm:$0xff]
    %3430 = vmatprep.subr.mxu0 0.0
    %3431 = vmatpush1.msra.mxu0 %v3426
    %3432 = vmatprep.subr.mxu0 0.0
    %3433 = vmatpush1.msra.mxu0 %v3427
    %3434 = vmatprep.subr.mxu0 0.0
    %3435 = vmatpush1.msra.mxu0 %v3428
    %3436 = vmatprep.subr.mxu0 0.0
    %3437 = vmatpush1.msra.mxu0 %v3429
    %3438 = vmatprep.subr.mxu0 0.0
    %3439 = vmatpush1.msra.mxu0 0.0
    %3440 = vmatprep.subr.mxu0 0.0
    %3441 = vmatpush1.msra.mxu0 0.0
    %3442 = vmatprep.subr.mxu0 0.0
    %3443 = vmatpush1.msra.mxu0 0.0
    %3444 = vmatprep.subr.mxu0 0.0
    %3445 = vmatpush1.msra.mxu0 0.0
    %3446 = vmatprep.subr.mxu0 0.0
    %3447 = vmatpush1.msra.mxu0 0.0
    %3448 = vmatprep.subr.mxu0 0.0
    %3449 = vmatpush1.msra.mxu0 0.0
    %3450 = vmatprep.subr.mxu0 0.0
    %3451 = vmatpush1.msra.mxu0 0.0
    %3452 = vmatprep.subr.mxu0 0.0
    %3453 = vmatpush1.msra.mxu0 0.0
    %3454 = vmatprep.subr.mxu0 0.0
    %3455 = vmatpush1.msra.mxu0 0.0
    %3456 = vmatprep.subr.mxu0 0.0
    %3457 = vmatpush1.msra.mxu0 0.0
    %3458 = vmatprep.subr.mxu0 0.0
    %3459 = vmatpush1.msra.mxu0 0.0
    %3460 = vmatprep.subr.mxu0 0.0
    %3461 = vmatpush1.msra.mxu0 0.0
    %3462 = vmatprep.subr.mxu0 0.0
    %3463 = vmatpush1.msra.mxu0 0.0
    %3464 = vmatprep.subr.mxu0 0.0
    %3465 = vmatpush1.msra.mxu0 0.0
    %3466 = vmatprep.subr.mxu0 0.0
    %3467 = vmatpush1.msra.mxu0 0.0
    %3468 = vmatprep.subr.mxu0 0.0
    %3469 = vmatpush1.msra.mxu0 0.0
    %3470 = vmatprep.subr.mxu0 0.0
    %3471 = vmatpush1.msra.mxu0 0.0
    %3472 = vmatprep.subr.mxu0 0.0
    %3473 = vmatpush1.msra.mxu0 0.0
    %3474 = vmatprep.subr.mxu0 0.0
    %3475 = vmatpush1.msra.mxu0 0.0
    %3476 = vmatprep.subr.mxu0 0.0
    %3477 = vmatpush1.msra.mxu0 0.0
    %3478 = vmatprep.subr.mxu0 0.0
    %3479 = vmatpush1.msra.mxu0 0.0
    %3480 = vmatprep.subr.mxu0 0.0
    %3481 = vmatpush1.msra.mxu0 0.0
    %3482 = vmatprep.subr.mxu0 0.0
    %3483 = vmatpush1.msra.mxu0 0.0
    %3484 = vmatprep.subr.mxu0 0.0
    %3485 = vmatpush1.msra.mxu0 0.0
    %3486 = vmatprep.subr.mxu0 0.0
    %3487 = vmatpush1.msra.mxu0 0.0
    %3488 = vmatprep.subr.mxu0 0.0
    %3489 = vmatpush1.msra.mxu0 0.0
    %3490 = vmatprep.subr.mxu0 0.0
    %3491 = vmatpush1.msra.mxu0 0.0
    %3492 = vmatprep.subr.mxu0 0.0
    %3493 = vmatpush1.msra.mxu0 0.0
    %3494 = vmatprep.mubr.f32.mxu0 0.0
    %3495 = vmatmul.mubr.f32.gmra.mrb[0].mxu0 %v2545
    %v3496 = vpop.f32.mrb[0].mxu0
    %v3497 = vadd.f32 0.0, %v3496
    %v3498 = vpop.f32.mrb[0].mxu0
    %3499 = vmatprep.mubr.f32.mxu0 0.0
    %3500 = vmatmul.mubr.f32.gmra.mrb[0].mxu0 %v2548
    %v3501 = vpop.f32.mrb[0].mxu0
    %v3502 = vadd.f32 0.0, %v3501
    %v3503 = vpop.f32.mrb[0].mxu0
    %3504 = vdwg.mxu0
    %v3506 = vsel %vm1202, %v2617, 0
    %v3509 = vsel %vm1202, %v2622, 0
    %v3512 = vsel %vm1202, %v2697, 0
    %v3515 = vsel %vm1202, %v2702, 0
    %v3518 = vsel %vm1202, %v2777, 0
    %v3521 = vsel %vm1202, %v2782, 0
    %v3524 = vsel %vm1202, %v2857, 0
    %v3527 = vsel %vm1202, %v2862, 0
    %3529 = vmatprep.subr.mxu0 0.0
    %3530 = vmatpush1.msra.mxu0 %v211
    %3531 = vmatprep.subr.mxu0 0.0
    %3532 = vmatpush1.msra.mxu0 0.0
    %3533 = vmatprep.subr.mxu0 0.0
    %3534 = vmatpush1.msra.mxu0 0.0
    %3535 = vmatprep.subr.mxu0 0.0
    %3536 = vmatpush1.msra.mxu0 0.0
    %3537 = vmatprep.subr.mxu0 0.0
    %3538 = vmatpush1.msra.mxu0 0.0
    %3539 = vmatprep.subr.mxu0 0.0
    %3540 = vmatpush1.msra.mxu0 0.0
    %3541 = vmatprep.subr.mxu0 0.0
    %3542 = vmatpush1.msra.mxu0 0.0
    %3543 = vmatprep.subr.mxu0 0.0
    %3544 = vmatpush1.msra.mxu0 0.0
    %3545 = vmatprep.subr.mxu0 0.0
    %3546 = vmatpush1.msra.mxu0 0.0
    %3547 = vmatprep.subr.mxu0 0.0
    %3548 = vmatpush1.msra.mxu0 0.0
    %3549 = vmatprep.subr.mxu0 0.0
    %3550 = vmatpush1.msra.mxu0 0.0
    %3551 = vmatprep.subr.mxu0 0.0
    %3552 = vmatpush1.msra.mxu0 0.0
    %3553 = vmatprep.subr.mxu0 0.0
    %3554 = vmatpush1.msra.mxu0 0.0
    %3555 = vmatprep.subr.mxu0 0.0
    %3556 = vmatpush1.msra.mxu0 0.0
    %3557 = vmatprep.subr.mxu0 0.0
    %3558 = vmatpush1.msra.mxu0 0.0
    %3559 = vmatprep.subr.mxu0 0.0
    %3560 = vmatpush1.msra.mxu0 0.0
    %3561 = vmatprep.subr.mxu0 0.0
    %3562 = vmatpush1.msra.mxu0 0.0
    %3563 = vmatprep.subr.mxu0 0.0
    %3564 = vmatpush1.msra.mxu0 0.0
    %3565 = vmatprep.subr.mxu0 0.0
    %3566 = vmatpush1.msra.mxu0 0.0
    %3567 = vmatprep.subr.mxu0 0.0
    %3568 = vmatpush1.msra.mxu0 0.0
    %3569 = vmatprep.subr.mxu0 0.0
    %3570 = vmatpush1.msra.mxu0 0.0
    %3571 = vmatprep.subr.mxu0 0.0
    %3572 = vmatpush1.msra.mxu0 0.0
    %3573 = vmatprep.subr.mxu0 0.0
    %3574 = vmatpush1.msra.mxu0 0.0
    %3575 = vmatprep.subr.mxu0 0.0
    %3576 = vmatpush1.msra.mxu0 0.0
    %3577 = vmatprep.subr.mxu0 0.0
    %3578 = vmatpush1.msra.mxu0 0.0
    %3579 = vmatprep.subr.mxu0 0.0
    %3580 = vmatpush1.msra.mxu0 0.0
    %3581 = vmatprep.subr.mxu0 0.0
    %3582 = vmatpush1.msra.mxu0 0.0
    %3583 = vmatprep.subr.mxu0 0.0
    %3584 = vmatpush1.msra.mxu0 0.0
    %3585 = vmatprep.subr.mxu0 0.0
    %3586 = vmatpush1.msra.mxu0 0.0
    %3587 = vmatprep.subr.mxu0 0.0
    %3588 = vmatpush1.msra.mxu0 0.0
    %3589 = vmatprep.subr.mxu0 0.0
    %3590 = vmatpush1.msra.mxu0 0.0
    %3591 = vmatprep.subr.mxu0 0.0
    %3592 = vmatpush1.msra.mxu0 0.0
    %3593 = vmatprep.mubr.f32.mxu0 0.0
    %3594 = vmatmul.mubr.f32.gmra.mrb[0].mxu0 %v3506
    %v3595 = vpop.f32.mrb[0].mxu0
    %v3596 = vadd.f32 0.0, %v3595
    %v3597 = vpop.f32.mrb[0].mxu0
    %3598 = vmatprep.mubr.f32.mxu0 0.0
    %3599 = vmatmul.mubr.f32.gmra.mrb[0].mxu0 %v3509
    %v3600 = vpop.f32.mrb[0].mxu0
    %v3601 = vadd.f32 0.0, %v3600
    %v3602 = vpop.f32.mrb[0].mxu0
    %3603 = vmatprep.mubr.f32.mxu0 0.0
    %3604 = vmatmul.mubr.f32.gmra.mrb[0].mxu0 %v3512
    %v3605 = vpop.f32.mrb[0].mxu0
    %v3606 = vadd.f32 0.0, %v3605
    %v3607 = vpop.f32.mrb[0].mxu0
    %3608 = vmatprep.mubr.f32.mxu0 0.0
    %3609 = vmatmul.mubr.f32.gmra.mrb[0].mxu0 %v3515
    %v3610 = vpop.f32.mrb[0].mxu0
    %v3611 = vadd.f32 0.0, %v3610
    %v3612 = vpop.f32.mrb[0].mxu0
    %3613 = vmatprep.mubr.f32.mxu0 0.0
    %3614 = vmatmul.mubr.f32.gmra.mrb[0].mxu0 %v3518
    %v3615 = vpop.f32.mrb[0].mxu0
    %v3616 = vadd.f32 0.0, %v3615
    %v3617 = vpop.f32.mrb[0].mxu0
    %3618 = vmatprep.mubr.f32.mxu0 0.0
    %3619 = vmatmul.mubr.f32.gmra.mrb[0].mxu0 %v3521
    %v3620 = vpop.f32.mrb[0].mxu0
    %v3621 = vadd.f32 0.0, %v3620
    %v3622 = vpop.f32.mrb[0].mxu0
    %3623 = vmatprep.mubr.f32.mxu0 0.0
    %3624 = vmatmul.mubr.f32.gmra.mrb[0].mxu0 %v3524
    %v3625 = vpop.f32.mrb[0].mxu0
    %v3626 = vadd.f32 0.0, %v3625
    %v3627 = vpop.f32.mrb[0].mxu0
    %3628 = vmatprep.mubr.f32.mxu0 0.0
    %3629 = vmatmul.mubr.f32.gmra.mrb[0].mxu0 %v3527
    %v3630 = vpop.f32.mrb[0].mxu0
    %v3631 = vadd.f32 0.0, %v3630
    %v3632 = vpop.f32.mrb[0].mxu0
    %3633 = vdwg.mxu0
    %v3635 = vsel %vm1202, %v2937, 0
    %v3638 = vsel %vm1202, %v2942, 0
    %v3641 = vsel %vm1202, %v3017, 0
    %v3644 = vsel %vm1202, %v3022, 0
    %v3647 = vsel %vm1202, %v3097, 0
    %v3650 = vsel %vm1202, %v3102, 0
    %v3653 = vsel %vm1202, %v3177, 0
    %v3656 = vsel %vm1202, %v3182, 0
    %3658 = vmatprep.subr.mxu0 0.0
    %3659 = vmatpush1.msra.mxu0 %v211
    %3660 = vmatprep.subr.mxu0 0.0
    %3661 = vmatpush1.msra.mxu0 0.0
    %3662 = vmatprep.subr.mxu0 0.0
    %3663 = vmatpush1.msra.mxu0 0.0
    %3664 = vmatprep.subr.mxu0 0.0
    %3665 = vmatpush1.msra.mxu0 0.0
    %3666 = vmatprep.subr.mxu0 0.0
    %3667 = vmatpush1.msra.mxu0 0.0
    %3668 = vmatprep.subr.mxu0 0.0
    %3669 = vmatpush1.msra.mxu0 0.0
    %3670 = vmatprep.subr.mxu0 0.0
    %3671 = vmatpush1.msra.mxu0 0.0
    %3672 = vmatprep.subr.mxu0 0.0
    %3673 = vmatpush1.msra.mxu0 0.0
    %3674 = vmatprep.subr.mxu0 0.0
    %3675 = vmatpush1.msra.mxu0 0.0
    %3676 = vmatprep.subr.mxu0 0.0
    %3677 = vmatpush1.msra.mxu0 0.0
    %3678 = vmatprep.subr.mxu0 0.0
    %3679 = vmatpush1.msra.mxu0 0.0
    %3680 = vmatprep.subr.mxu0 0.0
    %3681 = vmatpush1.msra.mxu0 0.0
    %3682 = vmatprep.subr.mxu0 0.0
    %3683 = vmatpush1.msra.mxu0 0.0
    %3684 = vmatprep.subr.mxu0 0.0
    %3685 = vmatpush1.msra.mxu0 0.0
    %3686 = vmatprep.subr.mxu0 0.0
    %3687 = vmatpush1.msra.mxu0 0.0
    %3688 = vmatprep.subr.mxu0 0.0
    %3689 = vmatpush1.msra.mxu0 0.0
    %3690 = vmatprep.subr.mxu0 0.0
    %3691 = vmatpush1.msra.mxu0 0.0
    %3692 = vmatprep.subr.mxu0 0.0
    %3693 = vmatpush1.msra.mxu0 0.0
    %3694 = vmatprep.subr.mxu0 0.0
    %3695 = vmatpush1.msra.mxu0 0.0
    %3696 = vmatprep.subr.mxu0 0.0
    %3697 = vmatpush1.msra.mxu0 0.0
    %3698 = vmatprep.subr.mxu0 0.0
    %3699 = vmatpush1.msra.mxu0 0.0
    %3700 = vmatprep.subr.mxu0 0.0
    %3701 = vmatpush1.msra.mxu0 0.0
    %3702 = vmatprep.subr.mxu0 0.0
    %3703 = vmatpush1.msra.mxu0 0.0
    %3704 = vmatprep.subr.mxu0 0.0
    %3705 = vmatpush1.msra.mxu0 0.0
    %3706 = vmatprep.subr.mxu0 0.0
    %3707 = vmatpush1.msra.mxu0 0.0
    %3708 = vmatprep.subr.mxu0 0.0
    %3709 = vmatpush1.msra.mxu0 0.0
    %3710 = vmatprep.subr.mxu0 0.0
    %3711 = vmatpush1.msra.mxu0 0.0
    %3712 = vmatprep.subr.mxu0 0.0
    %3713 = vmatpush1.msra.mxu0 0.0
    %3714 = vmatprep.subr.mxu0 0.0
    %3715 = vmatpush1.msra.mxu0 0.0
    %3716 = vmatprep.subr.mxu0 0.0
    %3717 = vmatpush1.msra.mxu0 0.0
    %3718 = vmatprep.subr.mxu0 0.0
    %3719 = vmatpush1.msra.mxu0 0.0
    %3720 = vmatprep.subr.mxu0 0.0
    %3721 = vmatpush1.msra.mxu0 0.0
    %3722 = vmatprep.mubr.f32.mxu0 0.0
    %3723 = vmatmul.mubr.f32.gmra.mrb[0].mxu0 %v3635
    %v3724 = vpop.f32.mrb[0].mxu0
    %v3725 = vadd.f32 0.0, %v3724
    %v3726 = vpop.f32.mrb[0].mxu0
    %3727 = vmatprep.mubr.f32.mxu0 0.0
    %3728 = vmatmul.mubr.f32.gmra.mrb[0].mxu0 %v3638
    %v3729 = vpop.f32.mrb[0].mxu0
    %v3730 = vadd.f32 0.0, %v3729
    %v3731 = vpop.f32.mrb[0].mxu0
    %3732 = vmatprep.mubr.f32.mxu0 0.0
    %3733 = vmatmul.mubr.f32.gmra.mrb[0].mxu0 %v3641
    %v3734 = vpop.f32.mrb[0].mxu0
    %v3735 = vadd.f32 0.0, %v3734
    %v3736 = vpop.f32.mrb[0].mxu0
    %3737 = vmatprep.mubr.f32.mxu0 0.0
    %3738 = vmatmul.mubr.f32.gmra.mrb[0].mxu0 %v3644
    %v3739 = vpop.f32.mrb[0].mxu0
    %v3740 = vadd.f32 0.0, %v3739
    %v3741 = vpop.f32.mrb[0].mxu0
    %3742 = vmatprep.mubr.f32.mxu0 0.0
    %3743 = vmatmul.mubr.f32.gmra.mrb[0].mxu0 %v3647
    %v3744 = vpop.f32.mrb[0].mxu0
    %v3745 = vadd.f32 0.0, %v3744
    %v3746 = vpop.f32.mrb[0].mxu0
    %3747 = vmatprep.mubr.f32.mxu0 0.0
    %3748 = vmatmul.mubr.f32.gmra.mrb[0].mxu0 %v3650
    %v3749 = vpop.f32.mrb[0].mxu0
    %v3750 = vadd.f32 0.0, %v3749
    %v3751 = vpop.f32.mrb[0].mxu0
    %3752 = vmatprep.mubr.f32.mxu0 0.0
    %3753 = vmatmul.mubr.f32.gmra.mrb[0].mxu0 %v3653
    %v3754 = vpop.f32.mrb[0].mxu0
    %v3755 = vadd.f32 0.0, %v3754
    %v3756 = vpop.f32.mrb[0].mxu0
    %3757 = vmatprep.mubr.f32.mxu0 0.0
    %3758 = vmatmul.mubr.f32.gmra.mrb[0].mxu0 %v3656
    %v3759 = vpop.f32.mrb[0].mxu0
    %v3760 = vadd.f32 0.0, %v3759
    %v3761 = vpop.f32.mrb[0].mxu0
    %3762 = vdwg.mxu0
    %v3763 = vmul.f32 %v2617, %v187
    %v3764 = vmul.f32 %v2622, %v188
    %v3765 = vmul.f32 %v2697, %v189
    %v3766 = vmul.f32 %v2702, %v190
    %v3767 = vmul.f32 %v2777, %v191
    %v3768 = vmul.f32 %v2782, %v192
    %v3769 = vmul.f32 %v2857, %v193
    %v3770 = vmul.f32 %v2862, %v194
    %v3771 = vmul.f32 %v3596, %v195
    %v3772 = vmul.f32 %v3601, %v196
    %v3773 = vmul.f32 %v3606, %v197
    %v3774 = vmul.f32 %v3611, %v198
    %v3775 = vmul.f32 %v3616, %v199
    %v3776 = vmul.f32 %v3621, %v200
    %v3777 = vmul.f32 %v3626, %v201
    %v3778 = vmul.f32 %v3631, %v202
    %v3779 = vadd.f32 %v3763, %v3771
    %v3780 = vadd.f32 %v3764, %v3772
    %v3781 = vadd.f32 %v3765, %v3773
    %v3782 = vadd.f32 %v3766, %v3774
    %v3783 = vadd.f32 %v3767, %v3775
    %v3784 = vadd.f32 %v3768, %v3776
    %v3785 = vadd.f32 %v3769, %v3777
    %v3786 = vadd.f32 %v3770, %v3778
    %v3787 = vmul.f32 %v2937, %v187
    %v3788 = vmul.f32 %v2942, %v188
    %v3789 = vmul.f32 %v3017, %v189
    %v3790 = vmul.f32 %v3022, %v190
    %v3791 = vmul.f32 %v3097, %v191
    %v3792 = vmul.f32 %v3102, %v192
    %v3793 = vmul.f32 %v3177, %v193
    %v3794 = vmul.f32 %v3182, %v194
    %v3795 = vmul.f32 %v3725, %v195
    %v3796 = vmul.f32 %v3730, %v196
    %v3797 = vmul.f32 %v3735, %v197
    %v3798 = vmul.f32 %v3740, %v198
    %v3799 = vmul.f32 %v3745, %v199
    %v3800 = vmul.f32 %v3750, %v200
    %v3801 = vmul.f32 %v3755, %v201
    %v3802 = vmul.f32 %v3760, %v202
    %v3803 = vadd.f32 %v3787, %v3795
    %v3804 = vadd.f32 %v3788, %v3796
    %v3805 = vadd.f32 %v3789, %v3797
    %v3806 = vadd.f32 %v3790, %v3798
    %v3807 = vadd.f32 %v3791, %v3799
    %v3808 = vadd.f32 %v3792, %v3800
    %v3809 = vadd.f32 %v3793, %v3801
    %v3810 = vadd.f32 %v3794, %v3802
    %v3812 = vsel %vm1202, %v3779, 0
    %v3815 = vsel %vm1202, %v3780, 0
    %v3818 = vsel %vm1202, %v3781, 0
    %v3821 = vsel %vm1202, %v3782, 0
    %v3824 = vsel %vm1202, %v3783, 0
    %v3827 = vsel %vm1202, %v3784, 0
    %v3830 = vsel %vm1202, %v3785, 0
    %v3833 = vsel %vm1202, %v3786, 0
    %v3836 = vsel %vm1202, %v3803, 0
    %v3839 = vsel %vm1202, %v3804, 0
    %v3842 = vsel %vm1202, %v3805, 0
    %v3845 = vsel %vm1202, %v3806, 0
    %v3848 = vsel %vm1202, %v3807, 0
    %v3851 = vsel %vm1202, %v3808, 0
    %v3854 = vsel %vm1202, %v3809, 0
    %v3857 = vsel %vm1202, %v3810, 0
    %3859 = vmatprep.subr.mxu0 0.0
    %3860 = vmatpush1.xpose.msra.mxu0 %v3836
    %3861 = vmatprep.subr.mxu0 0.0
    %3862 = vmatpush1.xpose.msra.mxu0 %v3839
    %3863 = vmatprep.subr.mxu0 0.0
    %3864 = vmatpush1.xpose.msra.mxu0 %v3842
    %3865 = vmatprep.subr.mxu0 0.0
    %3866 = vmatpush1.xpose.msra.mxu0 %v3845
    %3867 = vmatprep.subr.mxu0 0.0
    %3868 = vmatpush1.xpose.msra.mxu0 %v3848
    %3869 = vmatprep.subr.mxu0 0.0
    %3870 = vmatpush1.xpose.msra.mxu0 %v3851
    %3871 = vmatprep.subr.mxu0 0.0
    %3872 = vmatpush1.xpose.msra.mxu0 %v3854
    %3873 = vmatprep.subr.mxu0 0.0
    %3874 = vmatpush1.xpose.msra.mxu0 %v3857
    %3875 = vmatprep.subr.mxu0 0.0
    %3876 = vmatpush1.xpose.msra.mxu0 0.0
    %3877 = vmatprep.subr.mxu0 0.0
    %3878 = vmatpush1.xpose.msra.mxu0 0.0
    %3879 = vmatprep.subr.mxu0 0.0
    %3880 = vmatpush1.xpose.msra.mxu0 0.0
    %3881 = vmatprep.subr.mxu0 0.0
    %3882 = vmatpush1.xpose.msra.mxu0 0.0
    %3883 = vmatprep.subr.mxu0 0.0
    %3884 = vmatpush1.xpose.msra.mxu0 0.0
    %3885 = vmatprep.subr.mxu0 0.0
    %3886 = vmatpush1.xpose.msra.mxu0 0.0
    %3887 = vmatprep.subr.mxu0 0.0
    %3888 = vmatpush1.xpose.msra.mxu0 0.0
    %3889 = vmatprep.subr.mxu0 0.0
    %3890 = vmatpush1.xpose.msra.mxu0 0.0
    %3891 = vmatprep.subr.mxu0 0.0
    %3892 = vmatpush1.xpose.msra.mxu0 0.0
    %3893 = vmatprep.subr.mxu0 0.0
    %3894 = vmatpush1.xpose.msra.mxu0 0.0
    %3895 = vmatprep.subr.mxu0 0.0
    %3896 = vmatpush1.xpose.msra.mxu0 0.0
    %3897 = vmatprep.subr.mxu0 0.0
    %3898 = vmatpush1.xpose.msra.mxu0 0.0
    %3899 = vmatprep.subr.mxu0 0.0
    %3900 = vmatpush1.xpose.msra.mxu0 0.0
    %3901 = vmatprep.subr.mxu0 0.0
    %3902 = vmatpush1.xpose.msra.mxu0 0.0
    %3903 = vmatprep.subr.mxu0 0.0
    %3904 = vmatpush1.xpose.msra.mxu0 0.0
    %3905 = vmatprep.subr.mxu0 0.0
    %3906 = vmatpush1.xpose.msra.mxu0 0.0
    %3907 = vmatprep.subr.mxu0 0.0
    %3908 = vmatpush1.xpose.msra.mxu0 0.0
    %3909 = vmatprep.subr.mxu0 0.0
    %3910 = vmatpush1.xpose.msra.mxu0 0.0
    %3911 = vmatprep.subr.mxu0 0.0
    %3912 = vmatpush1.xpose.msra.mxu0 0.0
    %3913 = vmatprep.subr.mxu0 0.0
    %3914 = vmatpush1.xpose.msra.mxu0 0.0
    %3915 = vmatprep.subr.mxu0 0.0
    %3916 = vmatpush1.xpose.msra.mxu0 0.0
    %3917 = vmatprep.subr.mxu0 0.0
    %3918 = vmatpush1.xpose.msra.mxu0 0.0
    %3919 = vmatprep.subr.mxu0 0.0
    %3920 = vmatpush1.xpose.msra.mxu0 0.0
    %3921 = vmatprep.subr.mxu0 0.0
    %3922 = vmatpush1.xpose.msra.mxu0 0.0
    %3923 = vmatprep.mubr.f32.mxu0 0.0
    %3924 = vmatmul.mubr.f32.gmra.mrb[0].mxu0 %v3812
    %v3925 = vpop.f32.mrb[0].mxu0
    %v3926 = vadd.f32 %v203, %v3925
    %v3927 = vpop.f32.mrb[0].mxu0
    %3928 = vmatprep.mubr.f32.mxu0 0.0
    %3929 = vmatmul.mubr.f32.gmra.mrb[0].mxu0 %v3815
    %v3930 = vpop.f32.mrb[0].mxu0
    %v3931 = vadd.f32 %v204, %v3930
    %v3932 = vpop.f32.mrb[0].mxu0
    %3933 = vmatprep.mubr.f32.mxu0 0.0
    %3934 = vmatmul.mubr.f32.gmra.mrb[0].mxu0 %v3818
    %v3935 = vpop.f32.mrb[0].mxu0
    %v3936 = vadd.f32 %v205, %v3935
    %v3937 = vpop.f32.mrb[0].mxu0
    %3938 = vmatprep.mubr.f32.mxu0 0.0
    %3939 = vmatmul.mubr.f32.gmra.mrb[0].mxu0 %v3821
    %v3940 = vpop.f32.mrb[0].mxu0
    %v3941 = vadd.f32 %v206, %v3940
    %v3942 = vpop.f32.mrb[0].mxu0
    %3943 = vmatprep.mubr.f32.mxu0 0.0
    %3944 = vmatmul.mubr.f32.gmra.mrb[0].mxu0 %v3824
    %v3945 = vpop.f32.mrb[0].mxu0
    %v3946 = vadd.f32 %v207, %v3945
    %v3947 = vpop.f32.mrb[0].mxu0
    %3948 = vmatprep.mubr.f32.mxu0 0.0
    %3949 = vmatmul.mubr.f32.gmra.mrb[0].mxu0 %v3827
    %v3950 = vpop.f32.mrb[0].mxu0
    %v3951 = vadd.f32 %v208, %v3950
    %v3952 = vpop.f32.mrb[0].mxu0
    %3953 = vmatprep.mubr.f32.mxu0 0.0
    %3954 = vmatmul.mubr.f32.gmra.mrb[0].mxu0 %v3830
    %v3955 = vpop.f32.mrb[0].mxu0
    %v3956 = vadd.f32 %v209, %v3955
    %v3957 = vpop.f32.mrb[0].mxu0
    %3958 = vmatprep.mubr.f32.mxu0 0.0
    %3959 = vmatmul.mubr.f32.gmra.mrb[0].mxu0 %v3833
    %v3960 = vpop.f32.mrb[0].mxu0
    %v3961 = vadd.f32 %v210, %v3960
    %v3962 = vpop.f32.mrb[0].mxu0
    %3963 = vdwg.mxu0
    %v3964 = vsel %vm1662, %v3926, -inf
    %3965 = vmax.xlane.f32.xlu0 %v3964
    %v3966 = vpop.xlane.xlu0 %3965
    %v3967 = vsel %vm1662, %v3931, -inf
    %3968 = vmax.xlane.f32.xlu0 %v3967
    %v3969 = vpop.xlane.xlu0 %3968
    %v3970 = vsel %vm1662, %v3936, -inf
    %3971 = vmax.xlane.f32.xlu0 %v3970
    %v3972 = vpop.xlane.xlu0 %3971
    %v3973 = vsel %vm1662, %v3941, -inf
    %3974 = vmax.xlane.f32.xlu0 %v3973
    %v3975 = vpop.xlane.xlu0 %3974
    %v3976 = vsel %vm1662, %v3946, -inf
    %3977 = vmax.xlane.f32.xlu0 %v3976
    %v3978 = vpop.xlane.xlu0 %3977
    %v3979 = vsel %vm1662, %v3951, -inf
    %3980 = vmax.xlane.f32.xlu0 %v3979
    %v3981 = vpop.xlane.xlu0 %3980
    %v3982 = vsel %vm1662, %v3956, -inf
    %3983 = vmax.xlane.f32.xlu0 %v3982
    %v3984 = vpop.xlane.xlu0 %3983
    %v3985 = vsel %vm1662, %v3961, -inf
    %3986 = vmax.xlane.f32.xlu0 %v3985
    %v3987 = vpop.xlane.xlu0 %3986
    %v3988 = vsub.f32 %v3926, %v3966
    %v3989 = vsub.f32 %v3931, %v3969
    %v3990 = vsub.f32 %v3936, %v3972
    %v3991 = vsub.f32 %v3941, %v3975
    %v3992 = vsub.f32 %v3946, %v3978
    %v3993 = vsub.f32 %v3951, %v3981
    %v3994 = vsub.f32 %v3956, %v3984
    %v3995 = vsub.f32 %v3961, %v3987
    %v3996 = vmul.f32 %v3988, 1.442695
    %v3997 = vpow.pop %v3996
    %v3998 = vmul.f32 %v3989, 1.442695
    %v3999 = vpow.pop %v3998
    %v4000 = vmul.f32 %v3990, 1.442695
    %v4001 = vpow.pop %v4000
    %v4002 = vmul.f32 %v3991, 1.442695
    %v4003 = vpow.pop %v4002
    %v4004 = vmul.f32 %v3992, 1.442695
    %v4005 = vpow.pop %v4004
    %v4006 = vmul.f32 %v3993, 1.442695
    %v4007 = vpow.pop %v4006
    %v4008 = vmul.f32 %v3994, 1.442695
    %v4009 = vpow.pop %v4008
    %v4010 = vmul.f32 %v3995, 1.442695
    %v4011 = vpow.pop %v4010
    %v4012 = vsel %vm1662, %v3997, 0.0
    %4013 = vadd.xlane.f32.xlu0 %v4012
    %v4014 = vpop.xlane.xlu0 %4013
    %v4015 = vsel %vm1662, %v3999, 0.0
    %4016 = vadd.xlane.f32.xlu0 %v4015
    %v4017 = vpop.xlane.xlu0 %4016
    %v4018 = vsel %vm1662, %v4001, 0.0
    %4019 = vadd.xlane.f32.xlu0 %v4018
    %v4020 = vpop.xlane.xlu0 %4019
    %v4021 = vsel %vm1662, %v4003, 0.0
    %4022 = vadd.xlane.f32.xlu0 %v4021
    %v4023 = vpop.xlane.xlu0 %4022
    %v4024 = vsel %vm1662, %v4005, 0.0
    %4025 = vadd.xlane.f32.xlu0 %v4024
    %v4026 = vpop.xlane.xlu0 %4025
    %v4027 = vsel %vm1662, %v4007, 0.0
    %4028 = vadd.xlane.f32.xlu0 %v4027
    %v4029 = vpop.xlane.xlu0 %4028
    %v4030 = vsel %vm1662, %v4009, 0.0
    %4031 = vadd.xlane.f32.xlu0 %v4030
    %v4032 = vpop.xlane.xlu0 %4031
    %v4033 = vsel %vm1662, %v4011, 0.0
    %4034 = vadd.xlane.f32.xlu0 %v4033
    %v4035 = vpop.xlane.xlu0 %4034
    %v4036 = vrcp.pop %v4014
    %v4037 = vmul.f32 %v3997, %v4036
    %v4038 = vrcp.pop %v4017
    %v4039 = vmul.f32 %v3999, %v4038
    %v4040 = vrcp.pop %v4020
    %v4041 = vmul.f32 %v4001, %v4040
    %v4042 = vrcp.pop %v4023
    %v4043 = vmul.f32 %v4003, %v4042
    %v4044 = vrcp.pop %v4026
    %v4045 = vmul.f32 %v4005, %v4044
    %v4046 = vrcp.pop %v4029
    %v4047 = vmul.f32 %v4007, %v4046
    %v4048 = vrcp.pop %v4032
    %v4049 = vmul.f32 %v4009, %v4048
    %v4050 = vrcp.pop %v4035
    %v4051 = vmul.f32 %v4011, %v4050
    %v4053 = vsel %vm1662, %v4037, 0
    %v4056 = vsel %vm1662, %v4039, 0
    %v4059 = vsel %vm1662, %v4041, 0
    %v4062 = vsel %vm1662, %v4043, 0
    %v4065 = vsel %vm1662, %v4045, 0
    %v4068 = vsel %vm1662, %v4047, 0
    %v4071 = vsel %vm1662, %v4049, 0
    %v4074 = vsel %vm1662, %v4051, 0
    %4076 = vmatprep.subr.mxu0 0.0
    %4077 = vmatpush1.msra.mxu0 %v3257
    %4078 = vmatprep.subr.mxu0 0.0
    %4079 = vmatpush1.msra.mxu0 %v3262
    %4080 = vmatprep.subr.mxu0 0.0
    %4081 = vmatpush1.msra.mxu0 %v3337
    %4082 = vmatprep.subr.mxu0 0.0
    %4083 = vmatpush1.msra.mxu0 %v3342
    %4084 = vmatprep.subr.mxu0 0.0
    %4085 = vmatpush1.msra.mxu0 %v3417
    %4086 = vmatprep.subr.mxu0 0.0
    %4087 = vmatpush1.msra.mxu0 %v3422
    %4088 = vmatprep.subr.mxu0 0.0
    %4089 = vmatpush1.msra.mxu0 %v3497
    %4090 = vmatprep.subr.mxu0 0.0
    %4091 = vmatpush1.msra.mxu0 %v3502
    %4092 = vmatprep.subr.mxu0 0.0
    %4093 = vmatpush1.msra.mxu0 0.0
    %4094 = vmatprep.subr.mxu0 0.0
    %4095 = vmatpush1.msra.mxu0 0.0
    %4096 = vmatprep.subr.mxu0 0.0
    %4097 = vmatpush1.msra.mxu0 0.0
    %4098 = vmatprep.subr.mxu0 0.0
    %4099 = vmatpush1.msra.mxu0 0.0
    %4100 = vmatprep.subr.mxu0 0.0
    %4101 = vmatpush1.msra.mxu0 0.0
    %4102 = vmatprep.subr.mxu0 0.0
    %4103 = vmatpush1.msra.mxu0 0.0
    %4104 = vmatprep.subr.mxu0 0.0
    %4105 = vmatpush1.msra.mxu0 0.0
    %4106 = vmatprep.subr.mxu0 0.0
    %4107 = vmatpush1.msra.mxu0 0.0
    %4108 = vmatprep.subr.mxu0 0.0
    %4109 = vmatpush1.msra.mxu0 0.0
    %4110 = vmatprep.subr.mxu0 0.0
    %4111 = vmatpush1.msra.mxu0 0.0
    %4112 = vmatprep.subr.mxu0 0.0
    %4113 = vmatpush1.msra.mxu0 0.0
    %4114 = vmatprep.subr.mxu0 0.0
    %4115 = vmatpush1.msra.mxu0 0.0
    %4116 = vmatprep.subr.mxu0 0.0
    %4117 = vmatpush1.msra.mxu0 0.0
    %4118 = vmatprep.subr.mxu0 0.0
    %4119 = vmatpush1.msra.mxu0 0.0
    %4120 = vmatprep.subr.mxu0 0.0
    %4121 = vmatpush1.msra.mxu0 0.0
    %4122 = vmatprep.subr.mxu0 0.0
    %4123 = vmatpush1.msra.mxu0 0.0
    %4124 = vmatprep.subr.mxu0 0.0
    %4125 = vmatpush1.msra.mxu0 0.0
    %4126 = vmatprep.subr.mxu0 0.0
    %4127 = vmatpush1.msra.mxu0 0.0
    %4128 = vmatprep.subr.mxu0 0.0
    %4129 = vmatpush1.msra.mxu0 0.0
    %4130 = vmatprep.subr.mxu0 0.0
    %4131 = vmatpush1.msra.mxu0 0.0
    %4132 = vmatprep.subr.mxu0 0.0
    %4133 = vmatpush1.msra.mxu0 0.0
    %4134 = vmatprep.subr.mxu0 0.0
    %4135 = vmatpush1.msra.mxu0 0.0
    %4136 = vmatprep.subr.mxu0 0.0
    %4137 = vmatpush1.msra.mxu0 0.0
    %4138 = vmatprep.subr.mxu0 0.0
    %4139 = vmatpush1.msra.mxu0 0.0
    %4140 = vmatprep.mubr.f32.mxu0 0.0
    %4141 = vmatmul.mubr.f32.gmra.mrb[0].mxu0 %v4053
    %v4142 = vpop.f32.mrb[0].mxu0
    %v4143 = vadd.f32 0.0, %v4142
    %v4144 = vpop.f32.mrb[0].mxu0
    %4145 = vmatprep.mubr.f32.mxu0 0.0
    %4146 = vmatmul.mubr.f32.gmra.mrb[0].mxu0 %v4056
    %v4147 = vpop.f32.mrb[0].mxu0
    %v4148 = vadd.f32 0.0, %v4147
    %v4149 = vpop.f32.mrb[0].mxu0
    %4150 = vmatprep.mubr.f32.mxu0 0.0
    %4151 = vmatmul.mubr.f32.gmra.mrb[0].mxu0 %v4059
    %v4152 = vpop.f32.mrb[0].mxu0
    %v4153 = vadd.f32 0.0, %v4152
    %v4154 = vpop.f32.mrb[0].mxu0
    %4155 = vmatprep.mubr.f32.mxu0 0.0
    %4156 = vmatmul.mubr.f32.gmra.mrb[0].mxu0 %v4062
    %v4157 = vpop.f32.mrb[0].mxu0
    %v4158 = vadd.f32 0.0, %v4157
    %v4159 = vpop.f32.mrb[0].mxu0
    %4160 = vmatprep.mubr.f32.mxu0 0.0
    %4161 = vmatmul.mubr.f32.gmra.mrb[0].mxu0 %v4065
    %v4162 = vpop.f32.mrb[0].mxu0
    %v4163 = vadd.f32 0.0, %v4162
    %v4164 = vpop.f32.mrb[0].mxu0
    %4165 = vmatprep.mubr.f32.mxu0 0.0
    %4166 = vmatmul.mubr.f32.gmra.mrb[0].mxu0 %v4068
    %v4167 = vpop.f32.mrb[0].mxu0
    %v4168 = vadd.f32 0.0, %v4167
    %v4169 = vpop.f32.mrb[0].mxu0
    %4170 = vmatprep.mubr.f32.mxu0 0.0
    %4171 = vmatmul.mubr.f32.gmra.mrb[0].mxu0 %v4071
    %v4172 = vpop.f32.mrb[0].mxu0
    %v4173 = vadd.f32 0.0, %v4172
    %v4174 = vpop.f32.mrb[0].mxu0
    %4175 = vmatprep.mubr.f32.mxu0 0.0
    %4176 = vmatmul.mubr.f32.gmra.mrb[0].mxu0 %v4074
    %v4177 = vpop.f32.mrb[0].mxu0
    %v4178 = vadd.f32 0.0, %v4177
    %v4179 = vpop.f32.mrb[0].mxu0
    %4180 = vdwg.mxu0
    %s4181 = scalar_lea.vmem %s5, 32
    %v4182 = vld [vmem:[%s4181] sm:$0xff]
    %s4183 = scalar_lea.vmem %s5, 40
    %v4184 = vld [vmem:[%s4183] sm:$0xff]
    %v4186 = vsel %vm1202, %v4153, 0
    %v4189 = vsel %vm1202, %v4158, 0
    %4191 = vmatprep.subr.mxu0 0.0
    %4192 = vmatpush1.msra.mxu0 %v4184
    %4193 = vmatprep.subr.mxu0 0.0
    %4194 = vmatpush1.msra.mxu0 0.0
    %4195 = vmatprep.subr.mxu0 0.0
    %4196 = vmatpush1.msra.mxu0 0.0
    %4197 = vmatprep.subr.mxu0 0.0
    %4198 = vmatpush1.msra.mxu0 0.0
    %4199 = vmatprep.subr.mxu0 0.0
    %4200 = vmatpush1.msra.mxu0 0.0
    %4201 = vmatprep.subr.mxu0 0.0
    %4202 = vmatpush1.msra.mxu0 0.0
    %4203 = vmatprep.subr.mxu0 0.0
    %4204 = vmatpush1.msra.mxu0 0.0
    %4205 = vmatprep.subr.mxu0 0.0
    %4206 = vmatpush1.msra.mxu0 0.0
    %4207 = vmatprep.subr.mxu0 0.0
    %4208 = vmatpush1.msra.mxu0 0.0
    %4209 = vmatprep.subr.mxu0 0.0
    %4210 = vmatpush1.msra.mxu0 0.0
    %4211 = vmatprep.subr.mxu0 0.0
    %4212 = vmatpush1.msra.mxu0 0.0
    %4213 = vmatprep.subr.mxu0 0.0
    %4214 = vmatpush1.msra.mxu0 0.0
    %4215 = vmatprep.subr.mxu0 0.0
    %4216 = vmatpush1.msra.mxu0 0.0
    %4217 = vmatprep.subr.mxu0 0.0
    %4218 = vmatpush1.msra.mxu0 0.0
    %4219 = vmatprep.subr.mxu0 0.0
    %4220 = vmatpush1.msra.mxu0 0.0
    %4221 = vmatprep.subr.mxu0 0.0
    %4222 = vmatpush1.msra.mxu0 0.0
    %4223 = vmatprep.subr.mxu0 0.0
    %4224 = vmatpush1.msra.mxu0 0.0
    %4225 = vmatprep.subr.mxu0 0.0
    %4226 = vmatpush1.msra.mxu0 0.0
    %4227 = vmatprep.subr.mxu0 0.0
    %4228 = vmatpush1.msra.mxu0 0.0
    %4229 = vmatprep.subr.mxu0 0.0
    %4230 = vmatpush1.msra.mxu0 0.0
    %4231 = vmatprep.subr.mxu0 0.0
    %4232 = vmatpush1.msra.mxu0 0.0
    %4233 = vmatprep.subr.mxu0 0.0
    %4234 = vmatpush1.msra.mxu0 0.0
    %4235 = vmatprep.subr.mxu0 0.0
    %4236 = vmatpush1.msra.mxu0 0.0
    %4237 = vmatprep.subr.mxu0 0.0
    %4238 = vmatpush1.msra.mxu0 0.0
    %4239 = vmatprep.subr.mxu0 0.0
    %4240 = vmatpush1.msra.mxu0 0.0
    %4241 = vmatprep.subr.mxu0 0.0
    %4242 = vmatpush1.msra.mxu0 0.0
    %4243 = vmatprep.subr.mxu0 0.0
    %4244 = vmatpush1.msra.mxu0 0.0
    %4245 = vmatprep.subr.mxu0 0.0
    %4246 = vmatpush1.msra.mxu0 0.0
    %4247 = vmatprep.subr.mxu0 0.0
    %4248 = vmatpush1.msra.mxu0 0.0
    %4249 = vmatprep.subr.mxu0 0.0
    %4250 = vmatpush1.msra.mxu0 0.0
    %4251 = vmatprep.subr.mxu0 0.0
    %4252 = vmatpush1.msra.mxu0 0.0
    %4253 = vmatprep.subr.mxu0 0.0
    %4254 = vmatpush1.msra.mxu0 0.0
    %4255 = vmatprep.mubr.f32.mxu0 0.0
    %4256 = vmatmul.mubr.f32.gmra.mrb[0].mxu0 %v4186
    %v4257 = vpop.f32.mrb[0].mxu0
    %v4258 = vadd.f32 0.0, %v4257
    %v4259 = vpop.f32.mrb[0].mxu0
    %4260 = vmatprep.mubr.f32.mxu0 0.0
    %4261 = vmatmul.mubr.f32.gmra.mrb[0].mxu0 %v4189
    %v4262 = vpop.f32.mrb[0].mxu0
    %v4263 = vadd.f32 0.0, %v4262
    %v4264 = vpop.f32.mrb[0].mxu0
    %4265 = vdwg.mxu0
    %v4267 = vsel %vm1202, %v4143, 0
    %v4270 = vsel %vm1202, %v4148, 0
    %4272 = vmatprep.subr.mxu0 0.0
    %4273 = vmatpush1.msra.mxu0 %v4182
    %4274 = vmatprep.subr.mxu0 0.0
    %4275 = vmatpush1.msra.mxu0 0.0
    %4276 = vmatprep.subr.mxu0 0.0
    %4277 = vmatpush1.msra.mxu0 0.0
    %4278 = vmatprep.subr.mxu0 0.0
    %4279 = vmatpush1.msra.mxu0 0.0
    %4280 = vmatprep.subr.mxu0 0.0
    %4281 = vmatpush1.msra.mxu0 0.0
    %4282 = vmatprep.subr.mxu0 0.0
    %4283 = vmatpush1.msra.mxu0 0.0
    %4284 = vmatprep.subr.mxu0 0.0
    %4285 = vmatpush1.msra.mxu0 0.0
    %4286 = vmatprep.subr.mxu0 0.0
    %4287 = vmatpush1.msra.mxu0 0.0
    %4288 = vmatprep.subr.mxu0 0.0
    %4289 = vmatpush1.msra.mxu0 0.0
    %4290 = vmatprep.subr.mxu0 0.0
    %4291 = vmatpush1.msra.mxu0 0.0
    %4292 = vmatprep.subr.mxu0 0.0
    %4293 = vmatpush1.msra.mxu0 0.0
    %4294 = vmatprep.subr.mxu0 0.0
    %4295 = vmatpush1.msra.mxu0 0.0
    %4296 = vmatprep.subr.mxu0 0.0
    %4297 = vmatpush1.msra.mxu0 0.0
    %4298 = vmatprep.subr.mxu0 0.0
    %4299 = vmatpush1.msra.mxu0 0.0
    %4300 = vmatprep.subr.mxu0 0.0
    %4301 = vmatpush1.msra.mxu0 0.0
    %4302 = vmatprep.subr.mxu0 0.0
    %4303 = vmatpush1.msra.mxu0 0.0
    %4304 = vmatprep.subr.mxu0 0.0
    %4305 = vmatpush1.msra.mxu0 0.0
    %4306 = vmatprep.subr.mxu0 0.0
    %4307 = vmatpush1.msra.mxu0 0.0
    %4308 = vmatprep.subr.mxu0 0.0
    %4309 = vmatpush1.msra.mxu0 0.0
    %4310 = vmatprep.subr.mxu0 0.0
    %4311 = vmatpush1.msra.mxu0 0.0
    %4312 = vmatprep.subr.mxu0 0.0
    %4313 = vmatpush1.msra.mxu0 0.0
    %4314 = vmatprep.subr.mxu0 0.0
    %4315 = vmatpush1.msra.mxu0 0.0
    %4316 = vmatprep.subr.mxu0 0.0
    %4317 = vmatpush1.msra.mxu0 0.0
    %4318 = vmatprep.subr.mxu0 0.0
    %4319 = vmatpush1.msra.mxu0 0.0
    %4320 = vmatprep.subr.mxu0 0.0
    %4321 = vmatpush1.msra.mxu0 0.0
    %4322 = vmatprep.subr.mxu0 0.0
    %4323 = vmatpush1.msra.mxu0 0.0
    %4324 = vmatprep.subr.mxu0 0.0
    %4325 = vmatpush1.msra.mxu0 0.0
    %4326 = vmatprep.subr.mxu0 0.0
    %4327 = vmatpush1.msra.mxu0 0.0
    %4328 = vmatprep.subr.mxu0 0.0
    %4329 = vmatpush1.msra.mxu0 0.0
    %4330 = vmatprep.subr.mxu0 0.0
    %4331 = vmatpush1.msra.mxu0 0.0
    %4332 = vmatprep.subr.mxu0 0.0
    %4333 = vmatpush1.msra.mxu0 0.0
    %4334 = vmatprep.subr.mxu0 0.0
    %4335 = vmatpush1.msra.mxu0 0.0
    %4336 = vmatprep.mubr.f32.mxu0 0.0
    %4337 = vmatmul.mubr.f32.gmra.mrb[0].mxu0 %v4267
    %v4338 = vpop.f32.mrb[0].mxu0
    %v4339 = vadd.f32 %v4258, %v4338
    %v4340 = vpop.f32.mrb[0].mxu0
    %4341 = vmatprep.mubr.f32.mxu0 0.0
    %4342 = vmatmul.mubr.f32.gmra.mrb[0].mxu0 %v4270
    %v4343 = vpop.f32.mrb[0].mxu0
    %v4344 = vadd.f32 %v4263, %v4343
    %v4345 = vpop.f32.mrb[0].mxu0
    %4346 = vdwg.mxu0
    %s4347 = scalar_lea.vmem %s5, 48
    %v4348 = vld [vmem:[%s4347] sm:$0xff]
    %v4350 = vsel %vm1202, %v4163, 0
    %v4353 = vsel %vm1202, %v4168, 0
    %4355 = vmatprep.subr.mxu0 0.0
    %4356 = vmatpush1.msra.mxu0 %v4348
    %4357 = vmatprep.subr.mxu0 0.0
    %4358 = vmatpush1.msra.mxu0 0.0
    %4359 = vmatprep.subr.mxu0 0.0
    %4360 = vmatpush1.msra.mxu0 0.0
    %4361 = vmatprep.subr.mxu0 0.0
    %4362 = vmatpush1.msra.mxu0 0.0
    %4363 = vmatprep.subr.mxu0 0.0
    %4364 = vmatpush1.msra.mxu0 0.0
    %4365 = vmatprep.subr.mxu0 0.0
    %4366 = vmatpush1.msra.mxu0 0.0
    %4367 = vmatprep.subr.mxu0 0.0
    %4368 = vmatpush1.msra.mxu0 0.0
    %4369 = vmatprep.subr.mxu0 0.0
    %4370 = vmatpush1.msra.mxu0 0.0
    %4371 = vmatprep.subr.mxu0 0.0
    %4372 = vmatpush1.msra.mxu0 0.0
    %4373 = vmatprep.subr.mxu0 0.0
    %4374 = vmatpush1.msra.mxu0 0.0
    %4375 = vmatprep.subr.mxu0 0.0
    %4376 = vmatpush1.msra.mxu0 0.0
    %4377 = vmatprep.subr.mxu0 0.0
    %4378 = vmatpush1.msra.mxu0 0.0
    %4379 = vmatprep.subr.mxu0 0.0
    %4380 = vmatpush1.msra.mxu0 0.0
    %4381 = vmatprep.subr.mxu0 0.0
    %4382 = vmatpush1.msra.mxu0 0.0
    %4383 = vmatprep.subr.mxu0 0.0
    %4384 = vmatpush1.msra.mxu0 0.0
    %4385 = vmatprep.subr.mxu0 0.0
    %4386 = vmatpush1.msra.mxu0 0.0
    %4387 = vmatprep.subr.mxu0 0.0
    %4388 = vmatpush1.msra.mxu0 0.0
    %4389 = vmatprep.subr.mxu0 0.0
    %4390 = vmatpush1.msra.mxu0 0.0
    %4391 = vmatprep.subr.mxu0 0.0
    %4392 = vmatpush1.msra.mxu0 0.0
    %4393 = vmatprep.subr.mxu0 0.0
    %4394 = vmatpush1.msra.mxu0 0.0
    %4395 = vmatprep.subr.mxu0 0.0
    %4396 = vmatpush1.msra.mxu0 0.0
    %4397 = vmatprep.subr.mxu0 0.0
    %4398 = vmatpush1.msra.mxu0 0.0
    %4399 = vmatprep.subr.mxu0 0.0
    %4400 = vmatpush1.msra.mxu0 0.0
    %4401 = vmatprep.subr.mxu0 0.0
    %4402 = vmatpush1.msra.mxu0 0.0
    %4403 = vmatprep.subr.mxu0 0.0
    %4404 = vmatpush1.msra.mxu0 0.0
    %4405 = vmatprep.subr.mxu0 0.0
    %4406 = vmatpush1.msra.mxu0 0.0
    %4407 = vmatprep.subr.mxu0 0.0
    %4408 = vmatpush1.msra.mxu0 0.0
    %4409 = vmatprep.subr.mxu0 0.0
    %4410 = vmatpush1.msra.mxu0 0.0
    %4411 = vmatprep.subr.mxu0 0.0
    %4412 = vmatpush1.msra.mxu0 0.0
    %4413 = vmatprep.subr.mxu0 0.0
    %4414 = vmatpush1.msra.mxu0 0.0
    %4415 = vmatprep.subr.mxu0 0.0
    %4416 = vmatpush1.msra.mxu0 0.0
    %4417 = vmatprep.subr.mxu0 0.0
    %4418 = vmatpush1.msra.mxu0 0.0
    %4419 = vmatprep.mubr.f32.mxu0 0.0
    %4420 = vmatmul.mubr.f32.gmra.mrb[0].mxu0 %v4350
    %v4421 = vpop.f32.mrb[0].mxu0
    %v4422 = vadd.f32 0.0, %v4421
    %v4423 = vpop.f32.mrb[0].mxu0
    %4424 = vmatprep.mubr.f32.mxu0 0.0
    %4425 = vmatmul.mubr.f32.gmra.mrb[0].mxu0 %v4353
    %v4426 = vpop.f32.mrb[0].mxu0
    %v4427 = vadd.f32 0.0, %v4426
    %v4428 = vpop.f32.mrb[0].mxu0
    %4429 = vdwg.mxu0
    %v4430 = vadd.f32 %v4339, %v4422
    %v4431 = vadd.f32 %v4344, %v4427
    %s4432 = scalar_lea.vmem %s5, 56
    %v4433 = vld [vmem:[%s4432] sm:$0xff]
    %v4435 = vsel %vm1202, %v4173, 0
    %v4438 = vsel %vm1202, %v4178, 0
    %4440 = vmatprep.subr.mxu0 0.0
    %4441 = vmatpush1.msra.mxu0 %v4433
    %4442 = vmatprep.subr.mxu0 0.0
    %4443 = vmatpush1.msra.mxu0 0.0
    %4444 = vmatprep.subr.mxu0 0.0
    %4445 = vmatpush1.msra.mxu0 0.0
    %4446 = vmatprep.subr.mxu0 0.0
    %4447 = vmatpush1.msra.mxu0 0.0
    %4448 = vmatprep.subr.mxu0 0.0
    %4449 = vmatpush1.msra.mxu0 0.0
    %4450 = vmatprep.subr.mxu0 0.0
    %4451 = vmatpush1.msra.mxu0 0.0
    %4452 = vmatprep.subr.mxu0 0.0
    %4453 = vmatpush1.msra.mxu0 0.0
    %4454 = vmatprep.subr.mxu0 0.0
    %4455 = vmatpush1.msra.mxu0 0.0
    %4456 = vmatprep.subr.mxu0 0.0
    %4457 = vmatpush1.msra.mxu0 0.0
    %4458 = vmatprep.subr.mxu0 0.0
    %4459 = vmatpush1.msra.mxu0 0.0
    %4460 = vmatprep.subr.mxu0 0.0
    %4461 = vmatpush1.msra.mxu0 0.0
    %4462 = vmatprep.subr.mxu0 0.0
    %4463 = vmatpush1.msra.mxu0 0.0
    %4464 = vmatprep.subr.mxu0 0.0
    %4465 = vmatpush1.msra.mxu0 0.0
    %4466 = vmatprep.subr.mxu0 0.0
    %4467 = vmatpush1.msra.mxu0 0.0
    %4468 = vmatprep.subr.mxu0 0.0
    %4469 = vmatpush1.msra.mxu0 0.0
    %4470 = vmatprep.subr.mxu0 0.0
    %4471 = vmatpush1.msra.mxu0 0.0
    %4472 = vmatprep.subr.mxu0 0.0
    %4473 = vmatpush1.msra.mxu0 0.0
    %4474 = vmatprep.subr.mxu0 0.0
    %4475 = vmatpush1.msra.mxu0 0.0
    %4476 = vmatprep.subr.mxu0 0.0
    %4477 = vmatpush1.msra.mxu0 0.0
    %4478 = vmatprep.subr.mxu0 0.0
    %4479 = vmatpush1.msra.mxu0 0.0
    %4480 = vmatprep.subr.mxu0 0.0
    %4481 = vmatpush1.msra.mxu0 0.0
    %4482 = vmatprep.subr.mxu0 0.0
    %4483 = vmatpush1.msra.mxu0 0.0
    %4484 = vmatprep.subr.mxu0 0.0
    %4485 = vmatpush1.msra.mxu0 0.0
    %4486 = vmatprep.subr.mxu0 0.0
    %4487 = vmatpush1.msra.mxu0 0.0
    %4488 = vmatprep.subr.mxu0 0.0
    %4489 = vmatpush1.msra.mxu0 0.0
    %4490 = vmatprep.subr.mxu0 0.0
    %4491 = vmatpush1.msra.mxu0 0.0
    %4492 = vmatprep.subr.mxu0 0.0
    %4493 = vmatpush1.msra.mxu0 0.0
    %4494 = vmatprep.subr.mxu0 0.0
    %4495 = vmatpush1.msra.mxu0 0.0
    %4496 = vmatprep.subr.mxu0 0.0
    %4497 = vmatpush1.msra.mxu0 0.0
    %4498 = vmatprep.subr.mxu0 0.0
    %4499 = vmatpush1.msra.mxu0 0.0
    %4500 = vmatprep.subr.mxu0 0.0
    %4501 = vmatpush1.msra.mxu0 0.0
    %4502 = vmatprep.subr.mxu0 0.0
    %4503 = vmatpush1.msra.mxu0 0.0
    %4504 = vmatprep.mubr.f32.mxu0 0.0
    %4505 = vmatmul.mubr.f32.gmra.mrb[0].mxu0 %v4435
    %v4506 = vpop.f32.mrb[0].mxu0
    %v4507 = vadd.f32 0.0, %v4506
    %v4508 = vpop.f32.mrb[0].mxu0
    %4509 = vmatprep.mubr.f32.mxu0 0.0
    %4510 = vmatmul.mubr.f32.gmra.mrb[0].mxu0 %v4438
    %v4511 = vpop.f32.mrb[0].mxu0
    %v4512 = vadd.f32 0.0, %v4511
    %v4513 = vpop.f32.mrb[0].mxu0
    %4514 = vdwg.mxu0
    %v4515 = vadd.f32 %v4430, %v4507
    %v4516 = vadd.f32 %v4431, %v4512
    %v4517 = vadd.f32 %v2511, %v4515
    %v4518 = vadd.f32 %v2512, %v4516
    %s4519 = scalar_lea.vmem %s7, 1
    %v4520 = vld [vmem:[%s4519] sm:$0x1]
    %v4521 = vmul.f32 %v4517, %v4517
    %v4522 = vmul.f32 %v4518, %v4518
    %v4523 = vsel %vm215, %v4521, 0.0
    %4524 = vadd.xlane.f32.xlu0 %v4523
    %v4525 = vpop.xlane.xlu0 %4524
    %v4526 = vsel %vm215, %v4522, 0.0
    %4527 = vadd.xlane.f32.xlu0 %v4526
    %v4528 = vpop.xlane.xlu0 %4527
    %v4529 = vmul.f32 %v4525, %v222
    %v4530 = vmul.f32 %v4528, %v222
    %v4531 = vadd.f32 %v4529, 1e-05
    %v4532 = vadd.f32 %v4530, 1e-05
    %v4533 = vrsqrt.pop %v4531
    %v4534 = vrsqrt.pop %v4532
    %v4535 = vmul.f32 %v4517, %v4533
    %v4536 = vmul.f32 %v4518, %v4534
    %v4538 = vlaneseq
    %v4539 = vshrl.u32 %v4538, 7
    %v4540 = vsub.s32 0, %v4539
    %v4541 = vrot.slane %v4520, %v4540
    %v4543 = vmul.f32 %v4535, %v4541
    %v4544 = vmul.f32 %v4536, %v4541
    %s4545 = scalar_lea.vmem %s8, 32
    %v4546 = vld [vmem:[%s4545] sm:$0xff]
    %v4547 = vld [vmem:[%s4545 + $0x8] sm:$0xff]
    %v4548 = vld [vmem:[%s4545 + $0x10] sm:$0xff]
    %v4549 = vld [vmem:[%s4545 + $0x18] sm:$0xff]
    %v4551 = vsel %vm215, %v4543, 0
    %v4554 = vsel %vm215, %v4544, 0
    %4556 = vmatprep.subr.mxu0 0.0
    %4557 = vmatpush1.msra.mxu0 %v4546
    %4558 = vmatprep.subr.mxu0 0.0
    %4559 = vmatpush1.msra.mxu0 %v4547
    %4560 = vmatprep.subr.mxu0 0.0
    %4561 = vmatpush1.msra.mxu0 %v4548
    %4562 = vmatprep.subr.mxu0 0.0
    %4563 = vmatpush1.msra.mxu0 %v4549
    %4564 = vmatprep.subr.mxu0 0.0
    %4565 = vmatpush1.msra.mxu0 0.0
    %4566 = vmatprep.subr.mxu0 0.0
    %4567 = vmatpush1.msra.mxu0 0.0
    %4568 = vmatprep.subr.mxu0 0.0
    %4569 = vmatpush1.msra.mxu0 0.0
    %4570 = vmatprep.subr.mxu0 0.0
    %4571 = vmatpush1.msra.mxu0 0.0
    %4572 = vmatprep.subr.mxu0 0.0
    %4573 = vmatpush1.msra.mxu0 0.0
    %4574 = vmatprep.subr.mxu0 0.0
    %4575 = vmatpush1.msra.mxu0 0.0
    %4576 = vmatprep.subr.mxu0 0.0
    %4577 = vmatpush1.msra.mxu0 0.0
    %4578 = vmatprep.subr.mxu0 0.0
    %4579 = vmatpush1.msra.mxu0 0.0
    %4580 = vmatprep.subr.mxu0 0.0
    %4581 = vmatpush1.msra.mxu0 0.0
    %4582 = vmatprep.subr.mxu0 0.0
    %4583 = vmatpush1.msra.mxu0 0.0
    %4584 = vmatprep.subr.mxu0 0.0
    %4585 = vmatpush1.msra.mxu0 0.0
    %4586 = vmatprep.subr.mxu0 0.0
    %4587 = vmatpush1.msra.mxu0 0.0
    %4588 = vmatprep.subr.mxu0 0.0
    %4589 = vmatpush1.msra.mxu0 0.0
    %4590 = vmatprep.subr.mxu0 0.0
    %4591 = vmatpush1.msra.mxu0 0.0
    %4592 = vmatprep.subr.mxu0 0.0
    %4593 = vmatpush1.msra.mxu0 0.0
    %4594 = vmatprep.subr.mxu0 0.0
    %4595 = vmatpush1.msra.mxu0 0.0
    %4596 = vmatprep.subr.mxu0 0.0
    %4597 = vmatpush1.msra.mxu0 0.0
    %4598 = vmatprep.subr.mxu0 0.0
    %4599 = vmatpush1.msra.mxu0 0.0
    %4600 = vmatprep.subr.mxu0 0.0
    %4601 = vmatpush1.msra.mxu0 0.0
    %4602 = vmatprep.subr.mxu0 0.0
    %4603 = vmatpush1.msra.mxu0 0.0
    %4604 = vmatprep.subr.mxu0 0.0
    %4605 = vmatpush1.msra.mxu0 0.0
    %4606 = vmatprep.subr.mxu0 0.0
    %4607 = vmatpush1.msra.mxu0 0.0
    %4608 = vmatprep.subr.mxu0 0.0
    %4609 = vmatpush1.msra.mxu0 0.0
    %4610 = vmatprep.subr.mxu0 0.0
    %4611 = vmatpush1.msra.mxu0 0.0
    %4612 = vmatprep.subr.mxu0 0.0
    %4613 = vmatpush1.msra.mxu0 0.0
    %4614 = vmatprep.subr.mxu0 0.0
    %4615 = vmatpush1.msra.mxu0 0.0
    %4616 = vmatprep.subr.mxu0 0.0
    %4617 = vmatpush1.msra.mxu0 0.0
    %4618 = vmatprep.subr.mxu0 0.0
    %4619 = vmatpush1.msra.mxu0 0.0
    %4620 = vmatprep.mubr.f32.mxu0 0.0
    %4621 = vmatmul.mubr.f32.gmra.mrb[0].mxu0 %v4551
    %v4622 = vpop.f32.mrb[0].mxu0
    %v4623 = vadd.f32 0.0, %v4622
    %v4624 = vpop.f32.mrb[0].mxu0
    %4625 = vmatprep.mubr.f32.mxu0 0.0
    %4626 = vmatmul.mubr.f32.gmra.mrb[0].mxu0 %v4554
    %v4627 = vpop.f32.mrb[0].mxu0
    %v4628 = vadd.f32 0.0, %v4627
    %v4629 = vpop.f32.mrb[0].mxu0
    %4630 = vdwg.mxu0
    %s4631 = scalar_lea.vmem %s9, 32
    %v4632 = vld [vmem:[%s4631] sm:$0xff]
    %v4633 = vld [vmem:[%s4631 + $0x8] sm:$0xff]
    %v4634 = vld [vmem:[%s4631 + $0x10] sm:$0xff]
    %v4635 = vld [vmem:[%s4631 + $0x18] sm:$0xff]
    %4636 = vmatprep.subr.mxu0 0.0
    %4637 = vmatpush1.msra.mxu0 %v4632
    %4638 = vmatprep.subr.mxu0 0.0
    %4639 = vmatpush1.msra.mxu0 %v4633
    %4640 = vmatprep.subr.mxu0 0.0
    %4641 = vmatpush1.msra.mxu0 %v4634
    %4642 = vmatprep.subr.mxu0 0.0
    %4643 = vmatpush1.msra.mxu0 %v4635
    %4644 = vmatprep.subr.mxu0 0.0
    %4645 = vmatpush1.msra.mxu0 0.0
    %4646 = vmatprep.subr.mxu0 0.0
    %4647 = vmatpush1.msra.mxu0 0.0
    %4648 = vmatprep.subr.mxu0 0.0
    %4649 = vmatpush1.msra.mxu0 0.0
    %4650 = vmatprep.subr.mxu0 0.0
    %4651 = vmatpush1.msra.mxu0 0.0
    %4652 = vmatprep.subr.mxu0 0.0
    %4653 = vmatpush1.msra.mxu0 0.0
    %4654 = vmatprep.subr.mxu0 0.0
    %4655 = vmatpush1.msra.mxu0 0.0
    %4656 = vmatprep.subr.mxu0 0.0
    %4657 = vmatpush1.msra.mxu0 0.0
    %4658 = vmatprep.subr.mxu0 0.0
    %4659 = vmatpush1.msra.mxu0 0.0
    %4660 = vmatprep.subr.mxu0 0.0
    %4661 = vmatpush1.msra.mxu0 0.0
    %4662 = vmatprep.subr.mxu0 0.0
    %4663 = vmatpush1.msra.mxu0 0.0
    %4664 = vmatprep.subr.mxu0 0.0
    %4665 = vmatpush1.msra.mxu0 0.0
    %4666 = vmatprep.subr.mxu0 0.0
    %4667 = vmatpush1.msra.mxu0 0.0
    %4668 = vmatprep.subr.mxu0 0.0
    %4669 = vmatpush1.msra.mxu0 0.0
    %4670 = vmatprep.subr.mxu0 0.0
    %4671 = vmatpush1.msra.mxu0 0.0
    %4672 = vmatprep.subr.mxu0 0.0
    %4673 = vmatpush1.msra.mxu0 0.0
    %4674 = vmatprep.subr.mxu0 0.0
    %4675 = vmatpush1.msra.mxu0 0.0
    %4676 = vmatprep.subr.mxu0 0.0
    %4677 = vmatpush1.msra.mxu0 0.0
    %4678 = vmatprep.subr.mxu0 0.0
    %4679 = vmatpush1.msra.mxu0 0.0
    %4680 = vmatprep.subr.mxu0 0.0
    %4681 = vmatpush1.msra.mxu0 0.0
    %4682 = vmatprep.subr.mxu0 0.0
    %4683 = vmatpush1.msra.mxu0 0.0
    %4684 = vmatprep.subr.mxu0 0.0
    %4685 = vmatpush1.msra.mxu0 0.0
    %4686 = vmatprep.subr.mxu0 0.0
    %4687 = vmatpush1.msra.mxu0 0.0
    %4688 = vmatprep.subr.mxu0 0.0
    %4689 = vmatpush1.msra.mxu0 0.0
    %4690 = vmatprep.subr.mxu0 0.0
    %4691 = vmatpush1.msra.mxu0 0.0
    %4692 = vmatprep.subr.mxu0 0.0
    %4693 = vmatpush1.msra.mxu0 0.0
    %4694 = vmatprep.subr.mxu0 0.0
    %4695 = vmatpush1.msra.mxu0 0.0
    %4696 = vmatprep.subr.mxu0 0.0
    %4697 = vmatpush1.msra.mxu0 0.0
    %4698 = vmatprep.subr.mxu0 0.0
    %4699 = vmatpush1.msra.mxu0 0.0
    %4700 = vmatprep.mubr.f32.mxu0 0.0
    %4701 = vmatmul.mubr.f32.gmra.mrb[0].mxu0 %v4551
    %v4702 = vpop.f32.mrb[0].mxu0
    %v4703 = vadd.f32 0.0, %v4702
    %v4704 = vpop.f32.mrb[0].mxu0
    %4705 = vmatprep.mubr.f32.mxu0 0.0
    %4706 = vmatmul.mubr.f32.gmra.mrb[0].mxu0 %v4554
    %v4707 = vpop.f32.mrb[0].mxu0
    %v4708 = vadd.f32 0.0, %v4707
    %v4709 = vpop.f32.mrb[0].mxu0
    %4710 = vdwg.mxu0
    %v4711 = vxor.u32 %v4623, 2147483648
    %v4712 = vxor.u32 %v4628, 2147483648
    %v4713 = vmul.f32 %v4711, 1.442695
    %v4714 = vpow.pop %v4713
    %v4715 = vmul.f32 %v4712, 1.442695
    %v4716 = vpow.pop %v4715
    %v4717 = vadd.f32 %v4714, 1.0
    %v4718 = vadd.f32 %v4716, 1.0
    %v4719 = vrcp.pop %v4717
    %v4720 = vmul.f32 1.0, %v4719
    %v4721 = vrcp.pop %v4718
    %v4722 = vmul.f32 1.0, %v4721
    %v4723 = vmul.f32 %v4623, %v4720
    %v4724 = vmul.f32 %v4628, %v4722
    %v4725 = vmul.f32 %v4723, %v4703
    %v4726 = vmul.f32 %v4724, %v4708
    %s4727 = scalar_lea.vmem %s10, 64
    %v4728 = vld [vmem:[%s4727] sm:$0xff]
    %v4729 = vld [vmem:[%s4727 + $0x8] sm:$0xff]
    %v4730 = vld [vmem:[%s4727 + $0x10] sm:$0xff]
    %v4731 = vld [vmem:[%s4727 + $0x18] sm:$0xff]
    %v4732 = vld [vmem:[%s4727 + $0x20] sm:$0xff]
    %v4733 = vld [vmem:[%s4727 + $0x28] sm:$0xff]
    %v4734 = vld [vmem:[%s4727 + $0x30] sm:$0xff]
    %v4735 = vld [vmem:[%s4727 + $0x38] sm:$0xff]
    %v4737 = vsel %vm1662, %v4725, 0
    %v4740 = vsel %vm1662, %v4726, 0
    %4742 = vmatprep.subr.mxu0 0.0
    %4743 = vmatpush1.msra.mxu0 %v4728
    %4744 = vmatprep.subr.mxu0 0.0
    %4745 = vmatpush1.msra.mxu0 %v4729
    %4746 = vmatprep.subr.mxu0 0.0
    %4747 = vmatpush1.msra.mxu0 %v4730
    %4748 = vmatprep.subr.mxu0 0.0
    %4749 = vmatpush1.msra.mxu0 %v4731
    %4750 = vmatprep.subr.mxu0 0.0
    %4751 = vmatpush1.msra.mxu0 %v4732
    %4752 = vmatprep.subr.mxu0 0.0
    %4753 = vmatpush1.msra.mxu0 %v4733
    %4754 = vmatprep.subr.mxu0 0.0
    %4755 = vmatpush1.msra.mxu0 %v4734
    %4756 = vmatprep.subr.mxu0 0.0
    %4757 = vmatpush1.msra.mxu0 %v4735
    %4758 = vmatprep.subr.mxu0 0.0
    %4759 = vmatpush1.msra.mxu0 0.0
    %4760 = vmatprep.subr.mxu0 0.0
    %4761 = vmatpush1.msra.mxu0 0.0
    %4762 = vmatprep.subr.mxu0 0.0
    %4763 = vmatpush1.msra.mxu0 0.0
    %4764 = vmatprep.subr.mxu0 0.0
    %4765 = vmatpush1.msra.mxu0 0.0
    %4766 = vmatprep.subr.mxu0 0.0
    %4767 = vmatpush1.msra.mxu0 0.0
    %4768 = vmatprep.subr.mxu0 0.0
    %4769 = vmatpush1.msra.mxu0 0.0
    %4770 = vmatprep.subr.mxu0 0.0
    %4771 = vmatpush1.msra.mxu0 0.0
    %4772 = vmatprep.subr.mxu0 0.0
    %4773 = vmatpush1.msra.mxu0 0.0
    %4774 = vmatprep.subr.mxu0 0.0
    %4775 = vmatpush1.msra.mxu0 0.0
    %4776 = vmatprep.subr.mxu0 0.0
    %4777 = vmatpush1.msra.mxu0 0.0
    %4778 = vmatprep.subr.mxu0 0.0
    %4779 = vmatpush1.msra.mxu0 0.0
    %4780 = vmatprep.subr.mxu0 0.0
    %4781 = vmatpush1.msra.mxu0 0.0
    %4782 = vmatprep.subr.mxu0 0.0
    %4783 = vmatpush1.msra.mxu0 0.0
    %4784 = vmatprep.subr.mxu0 0.0
    %4785 = vmatpush1.msra.mxu0 0.0
    %4786 = vmatprep.subr.mxu0 0.0
    %4787 = vmatpush1.msra.mxu0 0.0
    %4788 = vmatprep.subr.mxu0 0.0
    %4789 = vmatpush1.msra.mxu0 0.0
    %4790 = vmatprep.subr.mxu0 0.0
    %4791 = vmatpush1.msra.mxu0 0.0
    %4792 = vmatprep.subr.mxu0 0.0
    %4793 = vmatpush1.msra.mxu0 0.0
    %4794 = vmatprep.subr.mxu0 0.0
    %4795 = vmatpush1.msra.mxu0 0.0
    %4796 = vmatprep.subr.mxu0 0.0
    %4797 = vmatpush1.msra.mxu0 0.0
    %4798 = vmatprep.subr.mxu0 0.0
    %4799 = vmatpush1.msra.mxu0 0.0
    %4800 = vmatprep.subr.mxu0 0.0
    %4801 = vmatpush1.msra.mxu0 0.0
    %4802 = vmatprep.subr.mxu0 0.0
    %4803 = vmatpush1.msra.mxu0 0.0
    %4804 = vmatprep.subr.mxu0 0.0
    %4805 = vmatpush1.msra.mxu0 0.0
    %4806 = vmatprep.mubr.f32.mxu0 0.0
    %4807 = vmatmul.mubr.f32.gmra.mrb[0].mxu0 %v4737
    %v4808 = vpop.f32.mrb[0].mxu0
    %v4809 = vadd.f32 0.0, %v4808
    %v4810 = vpop.f32.mrb[0].mxu0
    %4811 = vmatprep.mubr.f32.mxu0 0.0
    %4812 = vmatmul.mubr.f32.gmra.mrb[0].mxu0 %v4740
    %v4813 = vpop.f32.mrb[0].mxu0
    %v4814 = vadd.f32 0.0, %v4813
    %v4815 = vpop.f32.mrb[0].mxu0
    %4816 = vdwg.mxu0
    %v4817 = vadd.f32 %v4517, %v4809
    %v4818 = vadd.f32 %v4518, %v4814
    %v4819 = vld [vmem:[%s11] sm:$0x1]
    %v4820 = vmul.f32 %v4817, %v4817
    %v4821 = vmul.f32 %v4818, %v4818
    %v4822 = vsel %vm215, %v4820, 0.0
    %4823 = vadd.xlane.f32.xlu0 %v4822
    %v4824 = vpop.xlane.xlu0 %4823
    %v4825 = vsel %vm215, %v4821, 0.0
    %4826 = vadd.xlane.f32.xlu0 %v4825
    %v4827 = vpop.xlane.xlu0 %4826
    %v4828 = vmul.f32 %v4824, %v222
    %v4829 = vmul.f32 %v4827, %v222
    %v4830 = vadd.f32 %v4828, 1e-05
    %v4831 = vadd.f32 %v4829, 1e-05
    %v4832 = vrsqrt.pop %v4830
    %v4833 = vrsqrt.pop %v4831
    %v4834 = vmul.f32 %v4817, %v4832
    %v4835 = vmul.f32 %v4818, %v4833
    %v4837 = vlaneseq
    %v4838 = vshrl.u32 %v4837, 7
    %v4839 = vsub.s32 0, %v4838
    %v4840 = vrot.slane %v4819, %v4839
    %v4842 = vmul.f32 %v4834, %v4840
    %v4843 = vmul.f32 %v4835, %v4840
    %v4844 = vld [vmem:[%s12] sm:$0xff]
    %v4845 = vld [vmem:[%s12 + $0x8] sm:$0xff]
    %v4846 = vld [vmem:[%s12 + $0x10] sm:$0xff]
    %v4847 = vld [vmem:[%s12 + $0x18] sm:$0xff]
    %v4848 = vld [vmem:[%s12 + $0x20] sm:$0xff]
    %v4849 = vld [vmem:[%s12 + $0x28] sm:$0xff]
    %v4850 = vld [vmem:[%s12 + $0x30] sm:$0xff]
    %v4851 = vld [vmem:[%s12 + $0x38] sm:$0xff]
    %v4853 = vsel %vm215, %v4842, 0
    %v4856 = vsel %vm215, %v4843, 0
    %4858 = vmatprep.subr.mxu0 %v4845
    %4859 = vmatpush1.msra.mxu0 %v4844
    %4860 = vmatprep.subr.mxu0 %v4847
    %4861 = vmatpush1.msra.mxu0 %v4846
    %4862 = vmatprep.subr.mxu0 %v4849
    %4863 = vmatpush1.msra.mxu0 %v4848
    %4864 = vmatprep.subr.mxu0 %v4851
    %4865 = vmatpush1.msra.mxu0 %v4850
    %4866 = vmatprep.subr.mxu0 0.0
    %4867 = vmatpush1.msra.mxu0 0.0
    %4868 = vmatprep.subr.mxu0 0.0
    %4869 = vmatpush1.msra.mxu0 0.0
    %4870 = vmatprep.subr.mxu0 0.0
    %4871 = vmatpush1.msra.mxu0 0.0
    %4872 = vmatprep.subr.mxu0 0.0
    %4873 = vmatpush1.msra.mxu0 0.0
    %4874 = vmatprep.subr.mxu0 0.0
    %4875 = vmatpush1.msra.mxu0 0.0
    %4876 = vmatprep.subr.mxu0 0.0
    %4877 = vmatpush1.msra.mxu0 0.0
    %4878 = vmatprep.subr.mxu0 0.0
    %4879 = vmatpush1.msra.mxu0 0.0
    %4880 = vmatprep.subr.mxu0 0.0
    %4881 = vmatpush1.msra.mxu0 0.0
    %4882 = vmatprep.subr.mxu0 0.0
    %4883 = vmatpush1.msra.mxu0 0.0
    %4884 = vmatprep.subr.mxu0 0.0
    %4885 = vmatpush1.msra.mxu0 0.0
    %4886 = vmatprep.subr.mxu0 0.0
    %4887 = vmatpush1.msra.mxu0 0.0
    %4888 = vmatprep.subr.mxu0 0.0
    %4889 = vmatpush1.msra.mxu0 0.0
    %4890 = vmatprep.subr.mxu0 0.0
    %4891 = vmatpush1.msra.mxu0 0.0
    %4892 = vmatprep.subr.mxu0 0.0
    %4893 = vmatpush1.msra.mxu0 0.0
    %4894 = vmatprep.subr.mxu0 0.0
    %4895 = vmatpush1.msra.mxu0 0.0
    %4896 = vmatprep.subr.mxu0 0.0
    %4897 = vmatpush1.msra.mxu0 0.0
    %4898 = vmatprep.subr.mxu0 0.0
    %4899 = vmatpush1.msra.mxu0 0.0
    %4900 = vmatprep.subr.mxu0 0.0
    %4901 = vmatpush1.msra.mxu0 0.0
    %4902 = vmatprep.subr.mxu0 0.0
    %4903 = vmatpush1.msra.mxu0 0.0
    %4904 = vmatprep.subr.mxu0 0.0
    %4905 = vmatpush1.msra.mxu0 0.0
    %4906 = vmatprep.subr.mxu0 0.0
    %4907 = vmatpush1.msra.mxu0 0.0
    %4908 = vmatprep.subr.mxu0 0.0
    %4909 = vmatpush1.msra.mxu0 0.0
    %4910 = vmatprep.subr.mxu0 0.0
    %4911 = vmatpush1.msra.mxu0 0.0
    %4912 = vmatprep.subr.mxu0 0.0
    %4913 = vmatpush1.msra.mxu0 0.0
    %4914 = vmatprep.subr.mxu0 0.0
    %4915 = vmatpush1.msra.mxu0 0.0
    %4916 = vmatprep.subr.mxu0 0.0
    %4917 = vmatpush1.msra.mxu0 0.0
    %4918 = vmatprep.subr.mxu0 0.0
    %4919 = vmatpush1.msra.mxu0 0.0
    %4920 = vmatprep.subr.mxu0 0.0
    %4921 = vmatpush1.msra.mxu0 0.0
    %4922 = vmatprep.mubr.f32.mxu0 0.0
    %4923 = vmatmul.mubr.f32.gmra.mrb[0].mxu0 %v4853
    %v4924 = vpop.f32.mrb[0].mxu0
    %v4925 = vadd.f32 0.0, %v4924
    %v4926 = vpop.f32.mrb[0].mxu0
    %v4927 = vadd.f32 0.0, %v4926
    %4928 = vmatprep.mubr.f32.mxu0 0.0
    %4929 = vmatmul.mubr.f32.gmra.mrb[0].mxu0 %v4856
    %v4930 = vpop.f32.mrb[0].mxu0
    %v4931 = vadd.f32 0.0, %v4930
    %v4932 = vpop.f32.mrb[0].mxu0
    %v4933 = vadd.f32 0.0, %v4932
    %4934 = vdwg.mxu0
    %4935 = vst [vmem:[#allocation2] sm:$0xff] %v4925
    %4936 = vst [vmem:[#allocation2 + $0x8] sm:$0xff] %v4927
    %4937 = vst [vmem:[#allocation2 + $0x10] sm:$0xff] %v4931
    %4938 = vst [vmem:[#allocation2 + $0x18] sm:$0xff] %v4933
    // Predicated region
    $region70: #{tpu_custom_call.1} parent=1 // pred_check
      _
    $region71: #{tpu_custom_call.1} parent=1 // pred_check_branch
      %4940 = sbr.rel (0) target = $region73
    $region72: #{tpu_custom_call.1} parent=1 // pred_region
      %s4942 = ssub.s32 512, 512
      %4943 = vsyncadd [#allocation3], %s4942
      %s4944 = sshll.u32 [#allocation2], 4
      %s4945 = int_to_ptr.vmem [resolvable:$true] %s4944
      %4950 = dma.vmem_to_hbm [thread:$0]  %s4945, 512, %s17, [#allocation3], 256, 256, 16
    $region73: #{tpu_custom_call.1} parent=1 // pred_fallthru
      _
    // Predicated region
    $region74: #{tpu_custom_call.1} parent=1 // pred_check
      _
    $region75: #{tpu_custom_call.1} parent=1 // pred_check_branch
      %4952 = sbr.rel (0) target = $region77
    $region76: #{tpu_custom_call.1} parent=1 // pred_region
      %4953 = dma.done [#allocation3], 512
    $region77: #{tpu_custom_call.1} parent=1 // pred_fallthru
      _
    %4954 = vsyncpa [#allocation3], 1

</llo_original>
